<compile_context>
chip_gen: v7x
topology: tpu7x:2x2x1
jax: 0.10.0
libtpu: 0.0.40
codegen_flags: <defaults>
</compile_context>

<pallas_src>
import jax
import jax.numpy as jnp
from jax.experimental import pallas as pl
from jax.experimental.pallas import tpu as pltpu


# ----------------------------------------------------------------------------
# small helpers
# ----------------------------------------------------------------------------
def _round_up(x, m):
    return (x + m - 1) // m * m


def _pad_to(x, shape):
    return jnp.pad(x, [(0, s - d) for d, s in zip(x.shape, shape)])


# ----------------------------------------------------------------------------
# Pallas kernels
# ----------------------------------------------------------------------------
def conv_pool_kernel(p00_ref, p01_ref, p10_ref, p11_ref, w_ref, b_ref, o_ref):
    """Fused conv (as im2col matmul) + bias + ReLU + 2x2 max-pool.

    The four inputs are the im2col patch matrices of the four pool-window
    corners; max over them == 2x2 max-pool of the conv output.
    """
    w = w_ref[...]
    y00 = jnp.dot(p00_ref[...], w, preferred_element_type=jnp.float32)
    y01 = jnp.dot(p01_ref[...], w, preferred_element_type=jnp.float32)
    y10 = jnp.dot(p10_ref[...], w, preferred_element_type=jnp.float32)
    y11 = jnp.dot(p11_ref[...], w, preferred_element_type=jnp.float32)
    y = jnp.maximum(jnp.maximum(y00, y01), jnp.maximum(y10, y11))
    y = y + b_ref[...]              # bias is per-output-channel: commutes with max
    o_ref[...] = jnp.maximum(y, 0.0)


def fc_kernel(x_ref, w1_ref, b1_ref, w2_ref, b2_ref, w3_ref, b3_ref, o_ref):
    """Fused fc1+ReLU -> fc2+ReLU -> fc3, all weights resident in VMEM."""
    h = jnp.dot(x_ref[...], w1_ref[...], preferred_element_type=jnp.float32)
    h = jnp.maximum(h + b1_ref[...], 0.0)
    h = jnp.dot(h, w2_ref[...], preferred_element_type=jnp.float32)
    h = jnp.maximum(h + b2_ref[...], 0.0)
    h = jnp.dot(h, w3_ref[...], preferred_element_type=jnp.float32)
    o_ref[...] = (h + b3_ref[...]).astype(o_ref.dtype)


# ----------------------------------------------------------------------------
# host-side glue: pool-corner im2col (pure data movement)
# ----------------------------------------------------------------------------
def pool_corner_patches(x_nhwc, kh, kw):
    """Four patch matrices (one per 2x2 pool-window corner), each of shape
    (N*OHp*OWp, kh*kw*C), rows ordered (n, pooled_h, pooled_w)."""
    N, H, W, C = x_nhwc.shape
    OH, OW = H - kh + 1, W - kw + 1
    OHp, OWp = OH // 2, OW // 2
    mats = []
    for a in (0, 1):
        for b in (0, 1):
            taps = []
            for ii in range(kh):
                for jj in range(kw):
                    sl = x_nhwc[:, a + ii: a + ii + 2 * OHp: 2,
                                   b + jj: b + jj + 2 * OWp: 2, :]
                    taps.append(sl)                     # (N, OHp, OWp, C)
            p = jnp.stack(taps, axis=3)                 # (N, OHp, OWp, kh*kw, C)
            mats.append(p.reshape(N * OHp * OWp, kh * kw * C))
    return mats, (N, OHp, OWp)


# ----------------------------------------------------------------------------
# pallas_call wrappers
# ----------------------------------------------------------------------------
def conv_relu_pool(x_nhwc, wmat, bmat, kh, kw):
    """x: (N,H,W,C) -> (N, OHp, OWp, 128)  (conv + bias + relu + 2x2 maxpool)."""
    N, H, W, C = x_nhwc.shape
    OHp, OWp = (H - kh + 1) // 2, (W - kw + 1) // 2
    Kp, Cp = wmat.shape
    assert Kp == _round_up(kh * kw * C, 128)

    mats, _ = pool_corner_patches(x_nhwc, kh, kw)
    M = N * OHp * OWp
    # tile rows; 512 rows x Kp<=256 fp32 double-buffered stays far under v7x's
    # 32 MiB scoped VMEM
    tm = min(512, _round_up(M, 8))
    Mp = _round_up(M, tm)
    mats = [_pad_to(m, (Mp, Kp)) for m in mats]

    out = pl.pallas_call(
        conv_pool_kernel,
        out_shape=jax.ShapeDtypeStruct((Mp, Cp), jnp.float32),
        grid=(Mp // tm,),
        in_specs=[pl.BlockSpec((tm, Kp), lambda i: (i, 0))] * 4
                 + [pl.BlockSpec((Kp, Cp), lambda i: (0, 0)),
                    pl.BlockSpec((1, Cp), lambda i: (0, 0))],
        out_specs=pl.BlockSpec((tm, Cp), lambda i: (i, 0)),
        compiler_params=pltpu.CompilerParams(
            dimension_semantics=("parallel",)),
    )(*mats, wmat, bmat)
    return out[:M].reshape(N, OHp, OWp, Cp)


def fc_forward(x_flat, pp):
    """x_flat: (N, 16*128) -> logits (N, 5); fc1/fc2/fc3 fused."""
    N, Kin = x_flat.shape
    tm = min(256, _round_up(N, 8))
    Np = _round_up(N, tm)
    xp = _pad_to(x_flat, (Np, Kin))

    out = pl.pallas_call(
        fc_kernel,
        out_shape=jax.ShapeDtypeStruct((Np, 128), jnp.float32),
        grid=(Np // tm,),
        in_specs=[pl.BlockSpec((tm, Kin), lambda i: (i, 0)),
                  pl.BlockSpec(pp["fc_w1"].shape, lambda i: (0, 0)),
                  pl.BlockSpec((1, 128), lambda i: (0, 0)),
                  pl.BlockSpec((128, 128), lambda i: (0, 0)),
                  pl.BlockSpec((1, 128), lambda i: (0, 0)),
                  pl.BlockSpec((128, 128), lambda i: (0, 0)),
                  pl.BlockSpec((1, 128), lambda i: (0, 0))],
        out_specs=pl.BlockSpec((tm, 128), lambda i: (i, 0)),
        compiler_params=pltpu.CompilerParams(
            dimension_semantics=("parallel",)),
    )(xp, pp["fc_w1"], pp["fc_b1"], pp["fc_w2"], pp["fc_b2"],
      pp["fc_w3"], pp["fc_b3"])
    return out[:N, :5]


# ----------------------------------------------------------------------------
# one-time parameter preparation (padding / permutation; done once, not per fwd)
# ----------------------------------------------------------------------------
def prepare_params(p):
    def conv_mat(w):                       # (Cout,Cin,kh,kw) -> (Kp, 128)
        Cout, Cin, kh, kw = w.shape
        m = jnp.transpose(w, (2, 3, 1, 0)).reshape(kh * kw * Cin, Cout)
        return _pad_to(m, (_round_up(kh * kw * Cin, 128), _round_up(Cout, 128)))

    def bias_row(b):
        return _pad_to(b.reshape(1, -1), (1, _round_up(b.shape[0], 128)))

    # fc1 weight: fold torch's NCHW flatten (c*16 + h*4 + w) and the 128-lane
    # channel padding into a (16*128, 128) matrix so the activation flatten is a
    # free contiguous reshape of the (N, 4, 4, 128) conv2 output.
    w1t = p["wfc1"].T                      # (256, 120), row index = c*16 + s
    w1p = jnp.transpose(w1t.reshape(16, 16, 120), (1, 0, 2))   # [s, c, j]
    w1_big = jnp.zeros((16, 128, 128), jnp.float32)
    w1_big = w1_big.at[:, :16, :120].set(w1p).reshape(16 * 128, 128)

    return {
        "c1_w": conv_mat(p["w1"]), "c1_b": bias_row(p["b1"]),
        "c2_w": conv_mat(p["w2"]), "c2_b": bias_row(p["b2"]),
        "fc_w1": w1_big,                        "fc_b1": bias_row(p["bfc1"]),
        "fc_w2": _pad_to(p["wfc2"].T, (128, 128)), "fc_b2": bias_row(p["bfc2"]),
        "fc_w3": _pad_to(p["wfc3"].T, (128, 128)), "fc_b3": bias_row(p["bfc3"]),
    }


# ----------------------------------------------------------------------------
# Net forward (Pallas)
# ----------------------------------------------------------------------------
def net_forward(x_nchw, pp):
    x = jnp.transpose(x_nchw, (0, 2, 3, 1))                    # NCHW -> NHWC
    h = conv_relu_pool(x, pp["c1_w"], pp["c1_b"], 5, 5)        # (N,12,12,128), 6 valid lanes
    h = conv_relu_pool(h[..., :6], pp["c2_w"], pp["c2_b"], 5, 5)  # (N,4,4,128), 16 valid
    flat = h.reshape(h.shape[0], 16 * 128)                     # free reshape, no transpose
    return fc_forward(flat, pp)                                # (N, 5)


# ----------------------------------------------------------------------------
# Pure-JAX reference (fp32, highest precision) for a numerical sanity check
# ----------------------------------------------------------------------------
def net_forward_ref(x_nchw, params):
    hp = jax.lax.Precision.HIGHEST

    def conv(x, w, b):
        y = jax.lax.conv_general_dilated(
            x, w, window_strides=(1, 1), padding="VALID",
            dimension_numbers=("NCHW", "OIHW", "NCHW"), precision=hp)
        return y + b.reshape(1, -1, 1, 1)

    def pool(x):
        return jax.lax.reduce_window(
            x, -jnp.inf, jax.lax.max, (1, 1, 2, 2), (1, 1, 2, 2), "VALID")

    h = pool(jax.nn.relu(conv(x_nchw, params["w1"], params["b1"])))
    h = pool(jax.nn.relu(conv(h, params["w2"], params["b2"])))
    h = h.reshape(-1, 16 * 4 * 4)
    h = jax.nn.relu(jnp.dot(h, params["wfc1"].T, precision=hp) + params["bfc1"])
    h = jax.nn.relu(jnp.dot(h, params["wfc2"].T, precision=hp) + params["bfc2"])
    return jnp.dot(h, params["wfc3"].T, precision=hp) + params["bfc3"]


# ----------------------------------------------------------------------------
# Deterministic parameter init (shapes from Net.__init__)
# ----------------------------------------------------------------------------
def init_params():
    keys = jax.random.split(jax.random.PRNGKey(42), 10)
    s = 0.1
    return {
        "w1":   jax.random.normal(keys[0], (6, 3, 5, 5), jnp.float32) * s,
        "b1":   jax.random.normal(keys[1], (6,), jnp.float32) * s,
        "w2":   jax.random.normal(keys[2], (16, 6, 5, 5), jnp.float32) * s,
        "b2":   jax.random.normal(keys[3], (16,), jnp.float32) * s,
        "wfc1": jax.random.normal(keys[4], (120, 256), jnp.float32) * s,
        "bfc1": jax.random.normal(keys[5], (120,), jnp.float32) * s,
        "wfc2": jax.random.normal(keys[6], (84, 120), jnp.float32) * s,
        "bfc2": jax.random.normal(keys[7], (84,), jnp.float32) * s,
        "wfc3": jax.random.normal(keys[8], (5, 84), jnp.float32) * s,
        "bfc3": jax.random.normal(keys[9], (5,), jnp.float32) * s,
    }


if __name__ == "__main__":
    params = init_params()
    prepped = prepare_params(params)          # pad / permute weights once

    x = jax.random.normal(jax.random.PRNGKey(0), (2, 3, 28, 28), jnp.float32)

    fwd = jax.jit(net_forward)
    out = jax.block_until_ready(fwd(x, prepped))
    assert out.shape == (2, 5), out.shape

    ref = jax.block_until_ready(net_forward_ref(x, params))
    assert jnp.allclose(out, ref, rtol=2e-3, atol=2e-3), (out, ref)

    print("KERNEL_OK")
</pallas_src>

<mosaic_0001>
module attributes {stable_mosaic.version = 11 : i64} {
  func.func @conv_pool_kernel(%arg0: i32, %arg1: memref<288x128xf32, #tpu.memory_space<vmem>>, %arg2: memref<288x128xf32, #tpu.memory_space<vmem>>, %arg3: memref<288x128xf32, #tpu.memory_space<vmem>>, %arg4: memref<288x128xf32, #tpu.memory_space<vmem>>, %arg5: memref<128x128xf32, #tpu.memory_space<vmem>>, %arg6: memref<1x128xf32, #tpu.memory_space<vmem>>, %arg7: memref<288x128xf32, #tpu.memory_space<vmem>>) attributes {dimension_semantics = [#tpu.dimension_semantics<parallel>], iteration_bounds = array<i64: 1>, scalar_prefetch = 0 : i64, scratch_operands = 0 : i64, tpu.core_type = #tpu.core_type<tc>, window_params = [{transform_indices = @transform_0, window_bounds = array<i64: 288, 128>}, {transform_indices = @transform_1, window_bounds = array<i64: 288, 128>}, {transform_indices = @transform_2, window_bounds = array<i64: 288, 128>}, {transform_indices = @transform_3, window_bounds = array<i64: 288, 128>}, {pipeline_mode = #tpu.pipeline_mode<synchronous>, transform_indices = @transform_4, window_bounds = array<i64: 128, 128>}, {pipeline_mode = #tpu.pipeline_mode<synchronous>, transform_indices = @transform_5, window_bounds = array<i64: 1, 128>}, {transform_indices = @transform_6, window_bounds = array<i64: 288, 128>}]} {
    %c0 = arith.constant 0 : index
    %c0_0 = arith.constant 0 : index
    %0 = vector.load %arg5[%c0, %c0_0] : memref<128x128xf32, #tpu.memory_space<vmem>>, vector<128x128xf32>
    %c0_1 = arith.constant 0 : index
    %c0_2 = arith.constant 0 : index
    %1 = vector.load %arg1[%c0_1, %c0_2] : memref<288x128xf32, #tpu.memory_space<vmem>>, vector<288x128xf32>
    %cst = arith.constant dense<0.000000e+00> : vector<288x128xf32>
    %2 = tpu.matmul %1, %0, %cst {dimension_numbers = #tpu.dot_dimension_numbers<[1], [0], [0], [1], [0, 0, 1, 1], [], []>} : vector<288x128xf32>, vector<128x128xf32>, vector<288x128xf32> -> vector<288x128xf32>
    %c0_3 = arith.constant 0 : index
    %c0_4 = arith.constant 0 : index
    %3 = vector.load %arg2[%c0_3, %c0_4] : memref<288x128xf32, #tpu.memory_space<vmem>>, vector<288x128xf32>
    %cst_5 = arith.constant dense<0.000000e+00> : vector<288x128xf32>
    %4 = tpu.matmul %3, %0, %cst_5 {dimension_numbers = #tpu.dot_dimension_numbers<[1], [0], [0], [1], [0, 0, 1, 1], [], []>} : vector<288x128xf32>, vector<128x128xf32>, vector<288x128xf32> -> vector<288x128xf32>
    %c0_6 = arith.constant 0 : index
    %c0_7 = arith.constant 0 : index
    %5 = vector.load %arg3[%c0_6, %c0_7] : memref<288x128xf32, #tpu.memory_space<vmem>>, vector<288x128xf32>
    %cst_8 = arith.constant dense<0.000000e+00> : vector<288x128xf32>
    %6 = tpu.matmul %5, %0, %cst_8 {dimension_numbers = #tpu.dot_dimension_numbers<[1], [0], [0], [1], [0, 0, 1, 1], [], []>} : vector<288x128xf32>, vector<128x128xf32>, vector<288x128xf32> -> vector<288x128xf32>
    %c0_9 = arith.constant 0 : index
    %c0_10 = arith.constant 0 : index
    %7 = vector.load %arg4[%c0_9, %c0_10] : memref<288x128xf32, #tpu.memory_space<vmem>>, vector<288x128xf32>
    %cst_11 = arith.constant dense<0.000000e+00> : vector<288x128xf32>
    %8 = tpu.matmul %7, %0, %cst_11 {dimension_numbers = #tpu.dot_dimension_numbers<[1], [0], [0], [1], [0, 0, 1, 1], [], []>} : vector<288x128xf32>, vector<128x128xf32>, vector<288x128xf32> -> vector<288x128xf32>
    %9 = arith.maximumf %2, %4 : vector<288x128xf32>
    %10 = arith.maximumf %6, %8 : vector<288x128xf32>
    %11 = arith.maximumf %9, %10 : vector<288x128xf32>
    %c0_12 = arith.constant 0 : index
    %c0_13 = arith.constant 0 : index
    %12 = vector.load %arg6[%c0_12, %c0_13] : memref<1x128xf32, #tpu.memory_space<vmem>>, vector<1x128xf32>
    %13 = vector.broadcast %12 : vector<1x128xf32> to vector<288x128xf32>
    %14 = arith.addf %11, %13 : vector<288x128xf32>
    %cst_14 = arith.constant 0.000000e+00 : f32
    %15 = vector.broadcast %cst_14 : f32 to vector<288x128xf32>
    %16 = arith.maximumf %14, %15 : vector<288x128xf32>
    %c0_15 = arith.constant 0 : index
    %c0_16 = arith.constant 0 : index
    %17 = vector.load %arg7[%c0_15, %c0_16] : memref<288x128xf32, #tpu.memory_space<vmem>>, vector<288x128xf32>
    tpu.vector_store %arg7[%c0_15, %c0_16], %16 {strides = array<i32>} : memref<288x128xf32, #tpu.memory_space<vmem>>, vector<288x128xf32>,
    return
  }
  func.func @transform_0(%arg0: i32) -> (i32, i32) {
    %c0_i32 = arith.constant 0 : i32
    %c0_i32_0 = arith.constant 0 : i32
    return %arg0, %c0_i32 : i32, i32
  }
  func.func @transform_1(%arg0: i32) -> (i32, i32) {
    %c0_i32 = arith.constant 0 : i32
    %c0_i32_0 = arith.constant 0 : i32
    return %arg0, %c0_i32 : i32, i32
  }
  func.func @transform_2(%arg0: i32) -> (i32, i32) {
    %c0_i32 = arith.constant 0 : i32
    %c0_i32_0 = arith.constant 0 : i32
    return %arg0, %c0_i32 : i32, i32
  }
  func.func @transform_3(%arg0: i32) -> (i32, i32) {
    %c0_i32 = arith.constant 0 : i32
    %c0_i32_0 = arith.constant 0 : i32
    return %arg0, %c0_i32 : i32, i32
  }
  func.func @transform_4(%arg0: i32) -> (i32, i32) {
    %c0_i32 = arith.constant 0 : i32
    %c0_i32_0 = arith.constant 0 : i32
    %c0_i32_1 = arith.constant 0 : i32
    return %c0_i32, %c0_i32_0 : i32, i32
  }
  func.func @transform_5(%arg0: i32) -> (i32, i32) {
    %c0_i32 = arith.constant 0 : i32
    %c0_i32_0 = arith.constant 0 : i32
    %c0_i32_1 = arith.constant 0 : i32
    return %c0_i32, %c0_i32_0 : i32, i32
  }
  func.func @transform_6(%arg0: i32) -> (i32, i32) {
    %c0_i32 = arith.constant 0 : i32
    %c0_i32_0 = arith.constant 0 : i32
    return %arg0, %c0_i32 : i32, i32
  }
}

module attributes {stable_mosaic.version = 11 : i64} {
  func.func @conv_pool_kernel(%arg0: i32, %arg1: memref<32x256xf32, #tpu.memory_space<vmem>>, %arg2: memref<32x256xf32, #tpu.memory_space<vmem>>, %arg3: memref<32x256xf32, #tpu.memory_space<vmem>>, %arg4: memref<32x256xf32, #tpu.memory_space<vmem>>, %arg5: memref<256x128xf32, #tpu.memory_space<vmem>>, %arg6: memref<1x128xf32, #tpu.memory_space<vmem>>, %arg7: memref<32x128xf32, #tpu.memory_space<vmem>>) attributes {dimension_semantics = [#tpu.dimension_semantics<parallel>], iteration_bounds = array<i64: 1>, scalar_prefetch = 0 : i64, scratch_operands = 0 : i64, tpu.core_type = #tpu.core_type<tc>, window_params = [{transform_indices = @transform_0, window_bounds = array<i64: 32, 256>}, {transform_indices = @transform_1, window_bounds = array<i64: 32, 256>}, {transform_indices = @transform_2, window_bounds = array<i64: 32, 256>}, {transform_indices = @transform_3, window_bounds = array<i64: 32, 256>}, {pipeline_mode = #tpu.pipeline_mode<synchronous>, transform_indices = @transform_4, window_bounds = array<i64: 256, 128>}, {pipeline_mode = #tpu.pipeline_mode<synchronous>, transform_indices = @transform_5, window_bounds = array<i64: 1, 128>}, {transform_indices = @transform_6, window_bounds = array<i64: 32, 128>}]} {
    %c0 = arith.constant 0 : index
    %c0_0 = arith.constant 0 : index
    %0 = vector.load %arg5[%c0, %c0_0] : memref<256x128xf32, #tpu.memory_space<vmem>>, vector<256x128xf32>
    %c0_1 = arith.constant 0 : index
    %c0_2 = arith.constant 0 : index
    %1 = vector.load %arg1[%c0_1, %c0_2] : memref<32x256xf32, #tpu.memory_space<vmem>>, vector<32x256xf32>
    %cst = arith.constant dense<0.000000e+00> : vector<32x128xf32>
    %2 = tpu.matmul %1, %0, %cst {dimension_numbers = #tpu.dot_dimension_numbers<[1], [0], [0], [1], [0, 0, 1, 1], [], []>} : vector<32x256xf32>, vector<256x128xf32>, vector<32x128xf32> -> vector<32x128xf32>
    %c0_3 = arith.constant 0 : index
    %c0_4 = arith.constant 0 : index
    %3 = vector.load %arg2[%c0_3, %c0_4] : memref<32x256xf32, #tpu.memory_space<vmem>>, vector<32x256xf32>
    %cst_5 = arith.constant dense<0.000000e+00> : vector<32x128xf32>
    %4 = tpu.matmul %3, %0, %cst_5 {dimension_numbers = #tpu.dot_dimension_numbers<[1], [0], [0], [1], [0, 0, 1, 1], [], []>} : vector<32x256xf32>, vector<256x128xf32>, vector<32x128xf32> -> vector<32x128xf32>
    %c0_6 = arith.constant 0 : index
    %c0_7 = arith.constant 0 : index
    %5 = vector.load %arg3[%c0_6, %c0_7] : memref<32x256xf32, #tpu.memory_space<vmem>>, vector<32x256xf32>
    %cst_8 = arith.constant dense<0.000000e+00> : vector<32x128xf32>
    %6 = tpu.matmul %5, %0, %cst_8 {dimension_numbers = #tpu.dot_dimension_numbers<[1], [0], [0], [1], [0, 0, 1, 1], [], []>} : vector<32x256xf32>, vector<256x128xf32>, vector<32x128xf32> -> vector<32x128xf32>
    %c0_9 = arith.constant 0 : index
    %c0_10 = arith.constant 0 : index
    %7 = vector.load %arg4[%c0_9, %c0_10] : memref<32x256xf32, #tpu.memory_space<vmem>>, vector<32x256xf32>
    %cst_11 = arith.constant dense<0.000000e+00> : vector<32x128xf32>
    %8 = tpu.matmul %7, %0, %cst_11 {dimension_numbers = #tpu.dot_dimension_numbers<[1], [0], [0], [1], [0, 0, 1, 1], [], []>} : vector<32x256xf32>, vector<256x128xf32>, vector<32x128xf32> -> vector<32x128xf32>
    %9 = arith.maximumf %2, %4 : vector<32x128xf32>
    %10 = arith.maximumf %6, %8 : vector<32x128xf32>
    %11 = arith.maximumf %9, %10 : vector<32x128xf32>
    %c0_12 = arith.constant 0 : index
    %c0_13 = arith.constant 0 : index
    %12 = vector.load %arg6[%c0_12, %c0_13] : memref<1x128xf32, #tpu.memory_space<vmem>>, vector<1x128xf32>
    %13 = vector.broadcast %12 : vector<1x128xf32> to vector<32x128xf32>
    %14 = arith.addf %11, %13 : vector<32x128xf32>
    %cst_14 = arith.constant 0.000000e+00 : f32
    %15 = vector.broadcast %cst_14 : f32 to vector<32x128xf32>
    %16 = arith.maximumf %14, %15 : vector<32x128xf32>
    %c0_15 = arith.constant 0 : index
    %c0_16 = arith.constant 0 : index
    %17 = vector.load %arg7[%c0_15, %c0_16] : memref<32x128xf32, #tpu.memory_space<vmem>>, vector<32x128xf32>
    tpu.vector_store %arg7[%c0_15, %c0_16], %16 {strides = array<i32>} : memref<32x128xf32, #tpu.memory_space<vmem>>, vector<32x128xf32>,
    return
  }
  func.func @transform_0(%arg0: i32) -> (i32, i32) {
    %c0_i32 = arith.constant 0 : i32
    %c0_i32_0 = arith.constant 0 : i32
    return %arg0, %c0_i32 : i32, i32
  }
  func.func @transform_1(%arg0: i32) -> (i32, i32) {
    %c0_i32 = arith.constant 0 : i32
    %c0_i32_0 = arith.constant 0 : i32
    return %arg0, %c0_i32 : i32, i32
  }
  func.func @transform_2(%arg0: i32) -> (i32, i32) {
    %c0_i32 = arith.constant 0 : i32
    %c0_i32_0 = arith.constant 0 : i32
    return %arg0, %c0_i32 : i32, i32
  }
  func.func @transform_3(%arg0: i32) -> (i32, i32) {
    %c0_i32 = arith.constant 0 : i32
    %c0_i32_0 = arith.constant 0 : i32
    return %arg0, %c0_i32 : i32, i32
  }
  func.func @transform_4(%arg0: i32) -> (i32, i32) {
    %c0_i32 = arith.constant 0 : i32
    %c0_i32_0 = arith.constant 0 : i32
    %c0_i32_1 = arith.constant 0 : i32
    return %c0_i32, %c0_i32_0 : i32, i32
  }
  func.func @transform_5(%arg0: i32) -> (i32, i32) {
    %c0_i32 = arith.constant 0 : i32
    %c0_i32_0 = arith.constant 0 : i32
    %c0_i32_1 = arith.constant 0 : i32
    return %c0_i32, %c0_i32_0 : i32, i32
  }
  func.func @transform_6(%arg0: i32) -> (i32, i32) {
    %c0_i32 = arith.constant 0 : i32
    %c0_i32_0 = arith.constant 0 : i32
    return %arg0, %c0_i32 : i32, i32
  }
}

module attributes {stable_mosaic.version = 11 : i64} {
  func.func @fc_kernel(%arg0: i32, %arg1: memref<8x2048xf32, #tpu.memory_space<vmem>>, %arg2: memref<2048x128xf32, #tpu.memory_space<vmem>>, %arg3: memref<1x128xf32, #tpu.memory_space<vmem>>, %arg4: memref<128x128xf32, #tpu.memory_space<vmem>>, %arg5: memref<1x128xf32, #tpu.memory_space<vmem>>, %arg6: memref<128x128xf32, #tpu.memory_space<vmem>>, %arg7: memref<1x128xf32, #tpu.memory_space<vmem>>, %arg8: memref<8x128xf32, #tpu.memory_space<vmem>>) attributes {dimension_semantics = [#tpu.dimension_semantics<parallel>], iteration_bounds = array<i64: 1>, scalar_prefetch = 0 : i64, scratch_operands = 0 : i64, tpu.core_type = #tpu.core_type<tc>, window_params = [{transform_indices = @transform_0, window_bounds = array<i64: 8, 2048>}, {pipeline_mode = #tpu.pipeline_mode<synchronous>, transform_indices = @transform_1, window_bounds = array<i64: 2048, 128>}, {pipeline_mode = #tpu.pipeline_mode<synchronous>, transform_indices = @transform_2, window_bounds = array<i64: 1, 128>}, {pipeline_mode = #tpu.pipeline_mode<synchronous>, transform_indices = @transform_3, window_bounds = array<i64: 128, 128>}, {pipeline_mode = #tpu.pipeline_mode<synchronous>, transform_indices = @transform_4, window_bounds = array<i64: 1, 128>}, {pipeline_mode = #tpu.pipeline_mode<synchronous>, transform_indices = @transform_5, window_bounds = array<i64: 128, 128>}, {pipeline_mode = #tpu.pipeline_mode<synchronous>, transform_indices = @transform_6, window_bounds = array<i64: 1, 128>}, {transform_indices = @transform_7, window_bounds = array<i64: 8, 128>}]} {
    %c0 = arith.constant 0 : index
    %c0_0 = arith.constant 0 : index
    %0 = vector.load %arg1[%c0, %c0_0] : memref<8x2048xf32, #tpu.memory_space<vmem>>, vector<8x2048xf32>
    %c0_1 = arith.constant 0 : index
    %c0_2 = arith.constant 0 : index
    %1 = vector.load %arg2[%c0_1, %c0_2] : memref<2048x128xf32, #tpu.memory_space<vmem>>, vector<2048x128xf32>
    %cst = arith.constant dense<0.000000e+00> : vector<8x128xf32>
    %2 = tpu.matmul %0, %1, %cst {dimension_numbers = #tpu.dot_dimension_numbers<[1], [0], [0], [1], [0, 0, 1, 1], [], []>} : vector<8x2048xf32>, vector<2048x128xf32>, vector<8x128xf32> -> vector<8x128xf32>
    %c0_3 = arith.constant 0 : index
    %c0_4 = arith.constant 0 : index
    %3 = vector.load %arg3[%c0_3, %c0_4] : memref<1x128xf32, #tpu.memory_space<vmem>>, vector<1x128xf32>
    %4 = vector.broadcast %3 : vector<1x128xf32> to vector<8x128xf32>
    %5 = arith.addf %2, %4 : vector<8x128xf32>
    %cst_5 = arith.constant 0.000000e+00 : f32
    %6 = vector.broadcast %cst_5 : f32 to vector<8x128xf32>
    %7 = arith.maximumf %5, %6 : vector<8x128xf32>
    %c0_6 = arith.constant 0 : index
    %c0_7 = arith.constant 0 : index
    %8 = vector.load %arg4[%c0_6, %c0_7] : memref<128x128xf32, #tpu.memory_space<vmem>>, vector<128x128xf32>
    %cst_8 = arith.constant dense<0.000000e+00> : vector<8x128xf32>
    %9 = tpu.matmul %7, %8, %cst_8 {dimension_numbers = #tpu.dot_dimension_numbers<[1], [0], [0], [1], [0, 0, 1, 1], [], []>} : vector<8x128xf32>, vector<128x128xf32>, vector<8x128xf32> -> vector<8x128xf32>
    %c0_9 = arith.constant 0 : index
    %c0_10 = arith.constant 0 : index
    %10 = vector.load %arg5[%c0_9, %c0_10] : memref<1x128xf32, #tpu.memory_space<vmem>>, vector<1x128xf32>
    %11 = vector.broadcast %10 : vector<1x128xf32> to vector<8x128xf32>
    %12 = arith.addf %9, %11 : vector<8x128xf32>
    %cst_11 = arith.constant 0.000000e+00 : f32
    %13 = vector.broadcast %cst_11 : f32 to vector<8x128xf32>
    %14 = arith.maximumf %12, %13 : vector<8x128xf32>
    %c0_12 = arith.constant 0 : index
    %c0_13 = arith.constant 0 : index
    %15 = vector.load %arg6[%c0_12, %c0_13] : memref<128x128xf32, #tpu.memory_space<vmem>>, vector<128x128xf32>
    %cst_14 = arith.constant dense<0.000000e+00> : vector<8x128xf32>
    %16 = tpu.matmul %14, %15, %cst_14 {dimension_numbers = #tpu.dot_dimension_numbers<[1], [0], [0], [1], [0, 0, 1, 1], [], []>} : vector<8x128xf32>, vector<128x128xf32>, vector<8x128xf32> -> vector<8x128xf32>
    %c0_15 = arith.constant 0 : index
    %c0_16 = arith.constant 0 : index
    %17 = vector.load %arg7[%c0_15, %c0_16] : memref<1x128xf32, #tpu.memory_space<vmem>>, vector<1x128xf32>
    %18 = vector.broadcast %17 : vector<1x128xf32> to vector<8x128xf32>
    %19 = arith.addf %16, %18 : vector<8x128xf32>
    %c0_17 = arith.constant 0 : index
    %c0_18 = arith.constant 0 : index
    %20 = vector.load %arg8[%c0_17, %c0_18] : memref<8x128xf32, #tpu.memory_space<vmem>>, vector<8x128xf32>
    tpu.vector_store %arg8[%c0_17, %c0_18], %19 {strides = array<i32>} : memref<8x128xf32, #tpu.memory_space<vmem>>, vector<8x128xf32>,
    return
  }
  func.func @transform_0(%arg0: i32) -> (i32, i32) {
    %c0_i32 = arith.constant 0 : i32
    %c0_i32_0 = arith.constant 0 : i32
    return %arg0, %c0_i32 : i32, i32
  }
  func.func @transform_1(%arg0: i32) -> (i32, i32) {
    %c0_i32 = arith.constant 0 : i32
    %c0_i32_0 = arith.constant 0 : i32
    %c0_i32_1 = arith.constant 0 : i32
    return %c0_i32, %c0_i32_0 : i32, i32
  }
  func.func @transform_2(%arg0: i32) -> (i32, i32) {
    %c0_i32 = arith.constant 0 : i32
    %c0_i32_0 = arith.constant 0 : i32
    %c0_i32_1 = arith.constant 0 : i32
    return %c0_i32, %c0_i32_0 : i32, i32
  }
  func.func @transform_3(%arg0: i32) -> (i32, i32) {
    %c0_i32 = arith.constant 0 : i32
    %c0_i32_0 = arith.constant 0 : i32
    %c0_i32_1 = arith.constant 0 : i32
    return %c0_i32, %c0_i32_0 : i32, i32
  }
  func.func @transform_4(%arg0: i32) -> (i32, i32) {
    %c0_i32 = arith.constant 0 : i32
    %c0_i32_0 = arith.constant 0 : i32
    %c0_i32_1 = arith.constant 0 : i32
    return %c0_i32, %c0_i32_0 : i32, i32
  }
  func.func @transform_5(%arg0: i32) -> (i32, i32) {
    %c0_i32 = arith.constant 0 : i32
    %c0_i32_0 = arith.constant 0 : i32
    %c0_i32_1 = arith.constant 0 : i32
    return %c0_i32, %c0_i32_0 : i32, i32
  }
  func.func @transform_6(%arg0: i32) -> (i32, i32) {
    %c0_i32 = arith.constant 0 : i32
    %c0_i32_0 = arith.constant 0 : i32
    %c0_i32_1 = arith.constant 0 : i32
    return %c0_i32, %c0_i32_0 : i32, i32
  }
  func.func @transform_7(%arg0: i32) -> (i32, i32) {
    %c0_i32 = arith.constant 0 : i32
    %c0_i32_0 = arith.constant 0 : i32
    return %arg0, %c0_i32 : i32, i32
  }
}

</mosaic_0001>

<llo_original>
// kernel: net_forward.3
$region0: #{net_forward.3}
  #allocation0 [shape = 'u32[]', space=smem, size = 0x4, offset = 0x4, fixed_abs, tag = 'smem constant byte address 0x4 - core index']
  #allocation1 [shape = 'u32[144,128]{1,0:T(1,128)}', space=vmem, size = 0x12000, scoped, tag = 'internal scratch']
  %s0 = inlined_call_operand.vmem [shape: f32[288,128], index: 0, kind: input, shape index: {}]
  %s1 = inlined_call_operand.vmem [shape: f32[288,128], index: 1, kind: input, shape index: {}]
  %s2 = inlined_call_operand.vmem [shape: f32[288,128], index: 2, kind: input, shape index: {}]
  %s3 = inlined_call_operand.vmem [shape: f32[288,128], index: 3, kind: input, shape index: {}]
  %s4 = inlined_call_operand.vmem [shape: f32[128,128], index: 4, kind: input, shape index: {}]
  %s5 = inlined_call_operand.vmem [shape: f32[1,128], index: 5, kind: input, shape index: {}]
  %s6 = inlined_call_operand.vmem [shape: f32[288,128], index: 6, kind: output, shape index: {}]
  %s7 = sld [smem:[#allocation0]]
  $region34: #{net_forward.3} parent=0
    _
  %s9 = ssub.s32 1, %s7
  %s10 = scalar_select 0, %s9, %s7
  // Predicated region
  $region2: #{net_forward.3} parent=0 // pred_check
    _
  $region3: #{net_forward.3} parent=0 // pred_check_branch
    %12 = sbr.rel (0) target = $region5
  $region4: #{net_forward.3} parent=0 // pred_region
    _
  $region5: #{net_forward.3} parent=0 // pred_fallthru
    _
  // Predicated region
  $region6: #{net_forward.3} parent=0 // pred_check
    _
  $region7: #{net_forward.3} parent=0 // pred_check_branch
    %14 = sbr.rel (0) target = $region9
  $region8: #{net_forward.3} parent=0 // pred_region
    _
  $region9: #{net_forward.3} parent=0 // pred_fallthru
    _
  // Predicated region
  $region10: #{net_forward.3} parent=0 // pred_check
    _
  $region11: #{net_forward.3} parent=0 // pred_check_branch
    %16 = sbr.rel (0) target = $region13
  $region12: #{net_forward.3} parent=0 // pred_region
    _
  $region13: #{net_forward.3} parent=0 // pred_fallthru
    _
  // Predicated region
  $region14: #{net_forward.3} parent=0 // pred_check
    _
  $region15: #{net_forward.3} parent=0 // pred_check_branch
    %18 = sbr.rel (0) target = $region17
  $region16: #{net_forward.3} parent=0 // pred_region
    _
  $region17: #{net_forward.3} parent=0 // pred_fallthru
    _
  // Predicated region
  $region18: #{net_forward.3} parent=0 // pred_check
    _
  $region19: #{net_forward.3} parent=0 // pred_check_branch
    %20 = sbr.rel (0) target = $region21
  $region20: #{net_forward.3} parent=0 // pred_region
    _
  $region21: #{net_forward.3} parent=0 // pred_fallthru
    _
  // Predicated region
  $region22: #{net_forward.3} parent=0 // pred_check
    _
  $region23: #{net_forward.3} parent=0 // pred_check_branch
    %22 = sbr.rel (0) target = $region25
  $region24: #{net_forward.3} parent=0 // pred_region
    _
  $region25: #{net_forward.3} parent=0 // pred_fallthru
    _
  %v23 = vld [vmem:[%s4] sm:$0xff]
  %v24 = vld [vmem:[%s4 + $0x8] sm:$0xff]
  %v25 = vld [vmem:[%s4 + $0x10] sm:$0xff]
  %v26 = vld [vmem:[%s4 + $0x18] sm:$0xff]
  %v27 = vld [vmem:[%s4 + $0x20] sm:$0xff]
  %v28 = vld [vmem:[%s4 + $0x28] sm:$0xff]
  %v29 = vld [vmem:[%s4 + $0x30] sm:$0xff]
  %v30 = vld [vmem:[%s4 + $0x38] sm:$0xff]
  %v31 = vld [vmem:[%s4 + $0x40] sm:$0xff]
  %v32 = vld [vmem:[%s4 + $0x48] sm:$0xff]
  %v33 = vld [vmem:[%s4 + $0x50] sm:$0xff]
  %v34 = vld [vmem:[%s4 + $0x58] sm:$0xff]
  %v35 = vld [vmem:[%s4 + $0x60] sm:$0xff]
  %v36 = vld [vmem:[%s4 + $0x68] sm:$0xff]
  %v37 = vld [vmem:[%s4 + $0x70] sm:$0xff]
  %v38 = vld [vmem:[%s4 + $0x78] sm:$0xff]
  %v39 = vld [vmem:[%s0] sm:$0xff]
  %v40 = vld [vmem:[%s0 + $0x8] sm:$0xff]
  %v41 = vld [vmem:[%s0 + $0x10] sm:$0xff]
  %v42 = vld [vmem:[%s0 + $0x18] sm:$0xff]
  %v43 = vld [vmem:[%s0 + $0x20] sm:$0xff]
  %v44 = vld [vmem:[%s0 + $0x28] sm:$0xff]
  %v45 = vld [vmem:[%s0 + $0x30] sm:$0xff]
  %v46 = vld [vmem:[%s0 + $0x38] sm:$0xff]
  %v47 = vld [vmem:[%s0 + $0x40] sm:$0xff]
  %v48 = vld [vmem:[%s0 + $0x48] sm:$0xff]
  %v49 = vld [vmem:[%s0 + $0x50] sm:$0xff]
  %v50 = vld [vmem:[%s0 + $0x58] sm:$0xff]
  %v51 = vld [vmem:[%s0 + $0x60] sm:$0xff]
  %v52 = vld [vmem:[%s0 + $0x68] sm:$0xff]
  %v53 = vld [vmem:[%s0 + $0x70] sm:$0xff]
  %v54 = vld [vmem:[%s0 + $0x78] sm:$0xff]
  %v55 = vld [vmem:[%s0 + $0x80] sm:$0xff]
  %v56 = vld [vmem:[%s0 + $0x88] sm:$0xff]
  %v57 = vld [vmem:[%s0 + $0x90] sm:$0xff]
  %v58 = vld [vmem:[%s0 + $0x98] sm:$0xff]
  %v59 = vld [vmem:[%s0 + $0xa0] sm:$0xff]
  %v60 = vld [vmem:[%s0 + $0xa8] sm:$0xff]
  %v61 = vld [vmem:[%s0 + $0xb0] sm:$0xff]
  %v62 = vld [vmem:[%s0 + $0xb8] sm:$0xff]
  %v63 = vld [vmem:[%s0 + $0xc0] sm:$0xff]
  %v64 = vld [vmem:[%s0 + $0xc8] sm:$0xff]
  %v65 = vld [vmem:[%s0 + $0xd0] sm:$0xff]
  %v66 = vld [vmem:[%s0 + $0xd8] sm:$0xff]
  %v67 = vld [vmem:[%s0 + $0xe0] sm:$0xff]
  %v68 = vld [vmem:[%s0 + $0xe8] sm:$0xff]
  %v69 = vld [vmem:[%s0 + $0xf0] sm:$0xff]
  %v70 = vld [vmem:[%s0 + $0xf8] sm:$0xff]
  %v71 = vld [vmem:[%s0 + $0x100] sm:$0xff]
  %v72 = vld [vmem:[%s0 + $0x108] sm:$0xff]
  %v73 = vld [vmem:[%s0 + $0x110] sm:$0xff]
  %v74 = vld [vmem:[%s0 + $0x118] sm:$0xff]
  %75 = vmatprep.subr.mxu0 0.0
  %76 = vmatpush1.msra.mxu0 %v23
  %77 = vmatprep.subr.mxu0 0.0
  %78 = vmatpush1.msra.mxu0 %v24
  %79 = vmatprep.subr.mxu0 0.0
  %80 = vmatpush1.msra.mxu0 %v25
  %81 = vmatprep.subr.mxu0 0.0
  %82 = vmatpush1.msra.mxu0 %v26
  %83 = vmatprep.subr.mxu0 0.0
  %84 = vmatpush1.msra.mxu0 %v27
  %85 = vmatprep.subr.mxu0 0.0
  %86 = vmatpush1.msra.mxu0 %v28
  %87 = vmatprep.subr.mxu0 0.0
  %88 = vmatpush1.msra.mxu0 %v29
  %89 = vmatprep.subr.mxu0 0.0
  %90 = vmatpush1.msra.mxu0 %v30
  %91 = vmatprep.subr.mxu0 0.0
  %92 = vmatpush1.msra.mxu0 %v31
  %93 = vmatprep.subr.mxu0 0.0
  %94 = vmatpush1.msra.mxu0 %v32
  %95 = vmatprep.subr.mxu0 0.0
  %96 = vmatpush1.msra.mxu0 %v33
  %97 = vmatprep.subr.mxu0 0.0
  %98 = vmatpush1.msra.mxu0 %v34
  %99 = vmatprep.subr.mxu0 0.0
  %100 = vmatpush1.msra.mxu0 %v35
  %101 = vmatprep.subr.mxu0 0.0
  %102 = vmatpush1.msra.mxu0 %v36
  %103 = vmatprep.subr.mxu0 0.0
  %104 = vmatpush1.msra.mxu0 %v37
  %105 = vmatprep.subr.mxu0 0.0
  %106 = vmatpush1.msra.mxu0 %v38
  %107 = vmatprep.subr.mxu0 0.0
  %108 = vmatpush1.msra.mxu0 0.0
  %109 = vmatprep.subr.mxu0 0.0
  %110 = vmatpush1.msra.mxu0 0.0
  %111 = vmatprep.subr.mxu0 0.0
  %112 = vmatpush1.msra.mxu0 0.0
  %113 = vmatprep.subr.mxu0 0.0
  %114 = vmatpush1.msra.mxu0 0.0
  %115 = vmatprep.subr.mxu0 0.0
  %116 = vmatpush1.msra.mxu0 0.0
  %117 = vmatprep.subr.mxu0 0.0
  %118 = vmatpush1.msra.mxu0 0.0
  %119 = vmatprep.subr.mxu0 0.0
  %120 = vmatpush1.msra.mxu0 0.0
  %121 = vmatprep.subr.mxu0 0.0
  %122 = vmatpush1.msra.mxu0 0.0
  %123 = vmatprep.subr.mxu0 0.0
  %124 = vmatpush1.msra.mxu0 0.0
  %125 = vmatprep.subr.mxu0 0.0
  %126 = vmatpush1.msra.mxu0 0.0
  %127 = vmatprep.subr.mxu0 0.0
  %128 = vmatpush1.msra.mxu0 0.0
  %129 = vmatprep.subr.mxu0 0.0
  %130 = vmatpush1.msra.mxu0 0.0
  %131 = vmatprep.subr.mxu0 0.0
  %132 = vmatpush1.msra.mxu0 0.0
  %133 = vmatprep.subr.mxu0 0.0
  %134 = vmatpush1.msra.mxu0 0.0
  %135 = vmatprep.subr.mxu0 0.0
  %136 = vmatpush1.msra.mxu0 0.0
  %137 = vmatprep.subr.mxu0 0.0
  %138 = vmatpush1.msra.mxu0 0.0
  %139 = vmatprep.mubr.f32.mxu0 0.0
  %140 = vmatmul.mubr.f32.gmra.mrb[0].mxu0 %v39
  %v141 = vpop.f32.mrb[0].mxu0
  %v142 = vadd.f32 0.0, %v141
  %v143 = vpop.f32.mrb[0].mxu0
  %144 = vmatprep.mubr.f32.mxu0 0.0
  %145 = vmatmul.mubr.f32.gmra.mrb[0].mxu0 %v40
  %v146 = vpop.f32.mrb[0].mxu0
  %v147 = vadd.f32 0.0, %v146
  %v148 = vpop.f32.mrb[0].mxu0
  %149 = vmatprep.mubr.f32.mxu0 0.0
  %150 = vmatmul.mubr.f32.gmra.mrb[0].mxu0 %v41
  %v151 = vpop.f32.mrb[0].mxu0
  %v152 = vadd.f32 0.0, %v151
  %v153 = vpop.f32.mrb[0].mxu0
  %154 = vmatprep.mubr.f32.mxu0 0.0
  %155 = vmatmul.mubr.f32.gmra.mrb[0].mxu0 %v42
  %v156 = vpop.f32.mrb[0].mxu0
  %v157 = vadd.f32 0.0, %v156
  %v158 = vpop.f32.mrb[0].mxu0
  %159 = vmatprep.mubr.f32.mxu0 0.0
  %160 = vmatmul.mubr.f32.gmra.mrb[0].mxu0 %v43
  %v161 = vpop.f32.mrb[0].mxu0
  %v162 = vadd.f32 0.0, %v161
  %v163 = vpop.f32.mrb[0].mxu0
  %164 = vmatprep.mubr.f32.mxu0 0.0
  %165 = vmatmul.mubr.f32.gmra.mrb[0].mxu0 %v44
  %v166 = vpop.f32.mrb[0].mxu0
  %v167 = vadd.f32 0.0, %v166
  %v168 = vpop.f32.mrb[0].mxu0
  %169 = vmatprep.mubr.f32.mxu0 0.0
  %170 = vmatmul.mubr.f32.gmra.mrb[0].mxu0 %v45
  %v171 = vpop.f32.mrb[0].mxu0
  %v172 = vadd.f32 0.0, %v171
  %v173 = vpop.f32.mrb[0].mxu0
  %174 = vmatprep.mubr.f32.mxu0 0.0
  %175 = vmatmul.mubr.f32.gmra.mrb[0].mxu0 %v46
  %v176 = vpop.f32.mrb[0].mxu0
  %v177 = vadd.f32 0.0, %v176
  %v178 = vpop.f32.mrb[0].mxu0
  %179 = vmatprep.mubr.f32.mxu0 0.0
  %180 = vmatmul.mubr.f32.gmra.mrb[0].mxu0 %v47
  %v181 = vpop.f32.mrb[0].mxu0
  %v182 = vadd.f32 0.0, %v181
  %v183 = vpop.f32.mrb[0].mxu0
  %184 = vmatprep.mubr.f32.mxu0 0.0
  %185 = vmatmul.mubr.f32.gmra.mrb[0].mxu0 %v48
  %v186 = vpop.f32.mrb[0].mxu0
  %v187 = vadd.f32 0.0, %v186
  %v188 = vpop.f32.mrb[0].mxu0
  %189 = vmatprep.mubr.f32.mxu0 0.0
  %190 = vmatmul.mubr.f32.gmra.mrb[0].mxu0 %v49
  %v191 = vpop.f32.mrb[0].mxu0
  %v192 = vadd.f32 0.0, %v191
  %v193 = vpop.f32.mrb[0].mxu0
  %194 = vmatprep.mubr.f32.mxu0 0.0
  %195 = vmatmul.mubr.f32.gmra.mrb[0].mxu0 %v50
  %v196 = vpop.f32.mrb[0].mxu0
  %v197 = vadd.f32 0.0, %v196
  %v198 = vpop.f32.mrb[0].mxu0
  %199 = vmatprep.mubr.f32.mxu0 0.0
  %200 = vmatmul.mubr.f32.gmra.mrb[0].mxu0 %v51
  %v201 = vpop.f32.mrb[0].mxu0
  %v202 = vadd.f32 0.0, %v201
  %v203 = vpop.f32.mrb[0].mxu0
  %204 = vmatprep.mubr.f32.mxu0 0.0
  %205 = vmatmul.mubr.f32.gmra.mrb[0].mxu0 %v52
  %v206 = vpop.f32.mrb[0].mxu0
  %v207 = vadd.f32 0.0, %v206
  %v208 = vpop.f32.mrb[0].mxu0
  %209 = vmatprep.mubr.f32.mxu0 0.0
  %210 = vmatmul.mubr.f32.gmra.mrb[0].mxu0 %v53
  %v211 = vpop.f32.mrb[0].mxu0
  %v212 = vadd.f32 0.0, %v211
  %v213 = vpop.f32.mrb[0].mxu0
  %214 = vmatprep.mubr.f32.mxu0 0.0
  %215 = vmatmul.mubr.f32.gmra.mrb[0].mxu0 %v54
  %v216 = vpop.f32.mrb[0].mxu0
  %v217 = vadd.f32 0.0, %v216
  %v218 = vpop.f32.mrb[0].mxu0
  %219 = vmatprep.mubr.f32.mxu0 0.0
  %220 = vmatmul.mubr.f32.gmra.mrb[0].mxu0 %v55
  %v221 = vpop.f32.mrb[0].mxu0
  %v222 = vadd.f32 0.0, %v221
  %v223 = vpop.f32.mrb[0].mxu0
  %224 = vmatprep.mubr.f32.mxu0 0.0
  %225 = vmatmul.mubr.f32.gmra.mrb[0].mxu0 %v56
  %v226 = vpop.f32.mrb[0].mxu0
  %v227 = vadd.f32 0.0, %v226
  %v228 = vpop.f32.mrb[0].mxu0
  %229 = vmatprep.mubr.f32.mxu0 0.0
  %230 = vmatmul.mubr.f32.gmra.mrb[0].mxu0 %v57
  %v231 = vpop.f32.mrb[0].mxu0
  %v232 = vadd.f32 0.0, %v231
  %v233 = vpop.f32.mrb[0].mxu0
  %234 = vmatprep.mubr.f32.mxu0 0.0
  %235 = vmatmul.mubr.f32.gmra.mrb[0].mxu0 %v58
  %v236 = vpop.f32.mrb[0].mxu0
  %v237 = vadd.f32 0.0, %v236
  %v238 = vpop.f32.mrb[0].mxu0
  %239 = vmatprep.mubr.f32.mxu0 0.0
  %240 = vmatmul.mubr.f32.gmra.mrb[0].mxu0 %v59
  %v241 = vpop.f32.mrb[0].mxu0
  %v242 = vadd.f32 0.0, %v241
  %v243 = vpop.f32.mrb[0].mxu0
  %244 = vmatprep.mubr.f32.mxu0 0.0
  %245 = vmatmul.mubr.f32.gmra.mrb[0].mxu0 %v60
  %v246 = vpop.f32.mrb[0].mxu0
  %v247 = vadd.f32 0.0, %v246
  %v248 = vpop.f32.mrb[0].mxu0
  %249 = vmatprep.mubr.f32.mxu0 0.0
  %250 = vmatmul.mubr.f32.gmra.mrb[0].mxu0 %v61
  %v251 = vpop.f32.mrb[0].mxu0
  %v252 = vadd.f32 0.0, %v251
  %v253 = vpop.f32.mrb[0].mxu0
  %254 = vmatprep.mubr.f32.mxu0 0.0
  %255 = vmatmul.mubr.f32.gmra.mrb[0].mxu0 %v62
  %v256 = vpop.f32.mrb[0].mxu0
  %v257 = vadd.f32 0.0, %v256
  %v258 = vpop.f32.mrb[0].mxu0
  %259 = vmatprep.mubr.f32.mxu0 0.0
  %260 = vmatmul.mubr.f32.gmra.mrb[0].mxu0 %v63
  %v261 = vpop.f32.mrb[0].mxu0
  %v262 = vadd.f32 0.0, %v261
  %v263 = vpop.f32.mrb[0].mxu0
  %264 = vmatprep.mubr.f32.mxu0 0.0
  %265 = vmatmul.mubr.f32.gmra.mrb[0].mxu0 %v64
  %v266 = vpop.f32.mrb[0].mxu0
  %v267 = vadd.f32 0.0, %v266
  %v268 = vpop.f32.mrb[0].mxu0
  %269 = vmatprep.mubr.f32.mxu0 0.0
  %270 = vmatmul.mubr.f32.gmra.mrb[0].mxu0 %v65
  %v271 = vpop.f32.mrb[0].mxu0
  %v272 = vadd.f32 0.0, %v271
  %v273 = vpop.f32.mrb[0].mxu0
  %274 = vmatprep.mubr.f32.mxu0 0.0
  %275 = vmatmul.mubr.f32.gmra.mrb[0].mxu0 %v66
  %v276 = vpop.f32.mrb[0].mxu0
  %v277 = vadd.f32 0.0, %v276
  %v278 = vpop.f32.mrb[0].mxu0
  %279 = vmatprep.mubr.f32.mxu0 0.0
  %280 = vmatmul.mubr.f32.gmra.mrb[0].mxu0 %v67
  %v281 = vpop.f32.mrb[0].mxu0
  %v282 = vadd.f32 0.0, %v281
  %v283 = vpop.f32.mrb[0].mxu0
  %284 = vmatprep.mubr.f32.mxu0 0.0
  %285 = vmatmul.mubr.f32.gmra.mrb[0].mxu0 %v68
  %v286 = vpop.f32.mrb[0].mxu0
  %v287 = vadd.f32 0.0, %v286
  %v288 = vpop.f32.mrb[0].mxu0
  %289 = vmatprep.mubr.f32.mxu0 0.0
  %290 = vmatmul.mubr.f32.gmra.mrb[0].mxu0 %v69
  %v291 = vpop.f32.mrb[0].mxu0
  %v292 = vadd.f32 0.0, %v291
  %v293 = vpop.f32.mrb[0].mxu0
  %294 = vmatprep.mubr.f32.mxu0 0.0
  %295 = vmatmul.mubr.f32.gmra.mrb[0].mxu0 %v70
  %v296 = vpop.f32.mrb[0].mxu0
  %v297 = vadd.f32 0.0, %v296
  %v298 = vpop.f32.mrb[0].mxu0
  %299 = vmatprep.mubr.f32.mxu0 0.0
  %300 = vmatmul.mubr.f32.gmra.mrb[0].mxu0 %v71
  %v301 = vpop.f32.mrb[0].mxu0
  %v302 = vadd.f32 0.0, %v301
  %v303 = vpop.f32.mrb[0].mxu0
  %304 = vmatprep.mubr.f32.mxu0 0.0
  %305 = vmatmul.mubr.f32.gmra.mrb[0].mxu0 %v72
  %v306 = vpop.f32.mrb[0].mxu0
  %v307 = vadd.f32 0.0, %v306
  %v308 = vpop.f32.mrb[0].mxu0
  %309 = vmatprep.mubr.f32.mxu0 0.0
  %310 = vmatmul.mubr.f32.gmra.mrb[0].mxu0 %v73
  %v311 = vpop.f32.mrb[0].mxu0
  %v312 = vadd.f32 0.0, %v311
  %v313 = vpop.f32.mrb[0].mxu0
  %314 = vmatprep.mubr.f32.mxu0 0.0
  %315 = vmatmul.mubr.f32.gmra.mrb[0].mxu0 %v74
  %v316 = vpop.f32.mrb[0].mxu0
  %v317 = vadd.f32 0.0, %v316
  %v318 = vpop.f32.mrb[0].mxu0
  %319 = vdwg.mxu0
  %v320 = vld [vmem:[%s1] sm:$0xff]
  %v321 = vld [vmem:[%s1 + $0x8] sm:$0xff]
  %v322 = vld [vmem:[%s1 + $0x10] sm:$0xff]
  %v323 = vld [vmem:[%s1 + $0x18] sm:$0xff]
  %v324 = vld [vmem:[%s1 + $0x20] sm:$0xff]
  %v325 = vld [vmem:[%s1 + $0x28] sm:$0xff]
  %v326 = vld [vmem:[%s1 + $0x30] sm:$0xff]
  %v327 = vld [vmem:[%s1 + $0x38] sm:$0xff]
  %v328 = vld [vmem:[%s1 + $0x40] sm:$0xff]
  %v329 = vld [vmem:[%s1 + $0x48] sm:$0xff]
  %v330 = vld [vmem:[%s1 + $0x50] sm:$0xff]
  %v331 = vld [vmem:[%s1 + $0x58] sm:$0xff]
  %v332 = vld [vmem:[%s1 + $0x60] sm:$0xff]
  %v333 = vld [vmem:[%s1 + $0x68] sm:$0xff]
  %v334 = vld [vmem:[%s1 + $0x70] sm:$0xff]
  %v335 = vld [vmem:[%s1 + $0x78] sm:$0xff]
  %v336 = vld [vmem:[%s1 + $0x80] sm:$0xff]
  %v337 = vld [vmem:[%s1 + $0x88] sm:$0xff]
  %v338 = vld [vmem:[%s1 + $0x90] sm:$0xff]
  %v339 = vld [vmem:[%s1 + $0x98] sm:$0xff]
  %v340 = vld [vmem:[%s1 + $0xa0] sm:$0xff]
  %v341 = vld [vmem:[%s1 + $0xa8] sm:$0xff]
  %v342 = vld [vmem:[%s1 + $0xb0] sm:$0xff]
  %v343 = vld [vmem:[%s1 + $0xb8] sm:$0xff]
  %v344 = vld [vmem:[%s1 + $0xc0] sm:$0xff]
  %v345 = vld [vmem:[%s1 + $0xc8] sm:$0xff]
  %v346 = vld [vmem:[%s1 + $0xd0] sm:$0xff]
  %v347 = vld [vmem:[%s1 + $0xd8] sm:$0xff]
  %v348 = vld [vmem:[%s1 + $0xe0] sm:$0xff]
  %v349 = vld [vmem:[%s1 + $0xe8] sm:$0xff]
  %v350 = vld [vmem:[%s1 + $0xf0] sm:$0xff]
  %v351 = vld [vmem:[%s1 + $0xf8] sm:$0xff]
  %v352 = vld [vmem:[%s1 + $0x100] sm:$0xff]
  %v353 = vld [vmem:[%s1 + $0x108] sm:$0xff]
  %v354 = vld [vmem:[%s1 + $0x110] sm:$0xff]
  %v355 = vld [vmem:[%s1 + $0x118] sm:$0xff]
  %356 = vmatprep.subr.mxu0 0.0
  %357 = vmatpush1.msra.mxu0 %v23
  %358 = vmatprep.subr.mxu0 0.0
  %359 = vmatpush1.msra.mxu0 %v24
  %360 = vmatprep.subr.mxu0 0.0
  %361 = vmatpush1.msra.mxu0 %v25
  %362 = vmatprep.subr.mxu0 0.0
  %363 = vmatpush1.msra.mxu0 %v26
  %364 = vmatprep.subr.mxu0 0.0
  %365 = vmatpush1.msra.mxu0 %v27
  %366 = vmatprep.subr.mxu0 0.0
  %367 = vmatpush1.msra.mxu0 %v28
  %368 = vmatprep.subr.mxu0 0.0
  %369 = vmatpush1.msra.mxu0 %v29
  %370 = vmatprep.subr.mxu0 0.0
  %371 = vmatpush1.msra.mxu0 %v30
  %372 = vmatprep.subr.mxu0 0.0
  %373 = vmatpush1.msra.mxu0 %v31
  %374 = vmatprep.subr.mxu0 0.0
  %375 = vmatpush1.msra.mxu0 %v32
  %376 = vmatprep.subr.mxu0 0.0
  %377 = vmatpush1.msra.mxu0 %v33
  %378 = vmatprep.subr.mxu0 0.0
  %379 = vmatpush1.msra.mxu0 %v34
  %380 = vmatprep.subr.mxu0 0.0
  %381 = vmatpush1.msra.mxu0 %v35
  %382 = vmatprep.subr.mxu0 0.0
  %383 = vmatpush1.msra.mxu0 %v36
  %384 = vmatprep.subr.mxu0 0.0
  %385 = vmatpush1.msra.mxu0 %v37
  %386 = vmatprep.subr.mxu0 0.0
  %387 = vmatpush1.msra.mxu0 %v38
  %388 = vmatprep.subr.mxu0 0.0
  %389 = vmatpush1.msra.mxu0 0.0
  %390 = vmatprep.subr.mxu0 0.0
  %391 = vmatpush1.msra.mxu0 0.0
  %392 = vmatprep.subr.mxu0 0.0
  %393 = vmatpush1.msra.mxu0 0.0
  %394 = vmatprep.subr.mxu0 0.0
  %395 = vmatpush1.msra.mxu0 0.0
  %396 = vmatprep.subr.mxu0 0.0
  %397 = vmatpush1.msra.mxu0 0.0
  %398 = vmatprep.subr.mxu0 0.0
  %399 = vmatpush1.msra.mxu0 0.0
  %400 = vmatprep.subr.mxu0 0.0
  %401 = vmatpush1.msra.mxu0 0.0
  %402 = vmatprep.subr.mxu0 0.0
  %403 = vmatpush1.msra.mxu0 0.0
  %404 = vmatprep.subr.mxu0 0.0
  %405 = vmatpush1.msra.mxu0 0.0
  %406 = vmatprep.subr.mxu0 0.0
  %407 = vmatpush1.msra.mxu0 0.0
  %408 = vmatprep.subr.mxu0 0.0
  %409 = vmatpush1.msra.mxu0 0.0
  %410 = vmatprep.subr.mxu0 0.0
  %411 = vmatpush1.msra.mxu0 0.0
  %412 = vmatprep.subr.mxu0 0.0
  %413 = vmatpush1.msra.mxu0 0.0
  %414 = vmatprep.subr.mxu0 0.0
  %415 = vmatpush1.msra.mxu0 0.0
  %416 = vmatprep.subr.mxu0 0.0
  %417 = vmatpush1.msra.mxu0 0.0
  %418 = vmatprep.subr.mxu0 0.0
  %419 = vmatpush1.msra.mxu0 0.0
  %420 = vmatprep.mubr.f32.mxu0 0.0
  %421 = vmatmul.mubr.f32.gmra.mrb[0].mxu0 %v320
  %v422 = vpop.f32.mrb[0].mxu0
  %v423 = vadd.f32 0.0, %v422
  %v424 = vpop.f32.mrb[0].mxu0
  %425 = vmatprep.mubr.f32.mxu0 0.0
  %426 = vmatmul.mubr.f32.gmra.mrb[0].mxu0 %v321
  %v427 = vpop.f32.mrb[0].mxu0
  %v428 = vadd.f32 0.0, %v427
  %v429 = vpop.f32.mrb[0].mxu0
  %430 = vmatprep.mubr.f32.mxu0 0.0
  %431 = vmatmul.mubr.f32.gmra.mrb[0].mxu0 %v322
  %v432 = vpop.f32.mrb[0].mxu0
  %v433 = vadd.f32 0.0, %v432
  %v434 = vpop.f32.mrb[0].mxu0
  %435 = vmatprep.mubr.f32.mxu0 0.0
  %436 = vmatmul.mubr.f32.gmra.mrb[0].mxu0 %v323
  %v437 = vpop.f32.mrb[0].mxu0
  %v438 = vadd.f32 0.0, %v437
  %v439 = vpop.f32.mrb[0].mxu0
  %440 = vmatprep.mubr.f32.mxu0 0.0
  %441 = vmatmul.mubr.f32.gmra.mrb[0].mxu0 %v324
  %v442 = vpop.f32.mrb[0].mxu0
  %v443 = vadd.f32 0.0, %v442
  %v444 = vpop.f32.mrb[0].mxu0
  %445 = vmatprep.mubr.f32.mxu0 0.0
  %446 = vmatmul.mubr.f32.gmra.mrb[0].mxu0 %v325
  %v447 = vpop.f32.mrb[0].mxu0
  %v448 = vadd.f32 0.0, %v447
  %v449 = vpop.f32.mrb[0].mxu0
  %450 = vmatprep.mubr.f32.mxu0 0.0
  %451 = vmatmul.mubr.f32.gmra.mrb[0].mxu0 %v326
  %v452 = vpop.f32.mrb[0].mxu0
  %v453 = vadd.f32 0.0, %v452
  %v454 = vpop.f32.mrb[0].mxu0
  %455 = vmatprep.mubr.f32.mxu0 0.0
  %456 = vmatmul.mubr.f32.gmra.mrb[0].mxu0 %v327
  %v457 = vpop.f32.mrb[0].mxu0
  %v458 = vadd.f32 0.0, %v457
  %v459 = vpop.f32.mrb[0].mxu0
  %460 = vmatprep.mubr.f32.mxu0 0.0
  %461 = vmatmul.mubr.f32.gmra.mrb[0].mxu0 %v328
  %v462 = vpop.f32.mrb[0].mxu0
  %v463 = vadd.f32 0.0, %v462
  %v464 = vpop.f32.mrb[0].mxu0
  %465 = vmatprep.mubr.f32.mxu0 0.0
  %466 = vmatmul.mubr.f32.gmra.mrb[0].mxu0 %v329
  %v467 = vpop.f32.mrb[0].mxu0
  %v468 = vadd.f32 0.0, %v467
  %v469 = vpop.f32.mrb[0].mxu0
  %470 = vmatprep.mubr.f32.mxu0 0.0
  %471 = vmatmul.mubr.f32.gmra.mrb[0].mxu0 %v330
  %v472 = vpop.f32.mrb[0].mxu0
  %v473 = vadd.f32 0.0, %v472
  %v474 = vpop.f32.mrb[0].mxu0
  %475 = vmatprep.mubr.f32.mxu0 0.0
  %476 = vmatmul.mubr.f32.gmra.mrb[0].mxu0 %v331
  %v477 = vpop.f32.mrb[0].mxu0
  %v478 = vadd.f32 0.0, %v477
  %v479 = vpop.f32.mrb[0].mxu0
  %480 = vmatprep.mubr.f32.mxu0 0.0
  %481 = vmatmul.mubr.f32.gmra.mrb[0].mxu0 %v332
  %v482 = vpop.f32.mrb[0].mxu0
  %v483 = vadd.f32 0.0, %v482
  %v484 = vpop.f32.mrb[0].mxu0
  %485 = vmatprep.mubr.f32.mxu0 0.0
  %486 = vmatmul.mubr.f32.gmra.mrb[0].mxu0 %v333
  %v487 = vpop.f32.mrb[0].mxu0
  %v488 = vadd.f32 0.0, %v487
  %v489 = vpop.f32.mrb[0].mxu0
  %490 = vmatprep.mubr.f32.mxu0 0.0
  %491 = vmatmul.mubr.f32.gmra.mrb[0].mxu0 %v334
  %v492 = vpop.f32.mrb[0].mxu0
  %v493 = vadd.f32 0.0, %v492
  %v494 = vpop.f32.mrb[0].mxu0
  %495 = vmatprep.mubr.f32.mxu0 0.0
  %496 = vmatmul.mubr.f32.gmra.mrb[0].mxu0 %v335
  %v497 = vpop.f32.mrb[0].mxu0
  %v498 = vadd.f32 0.0, %v497
  %v499 = vpop.f32.mrb[0].mxu0
  %500 = vmatprep.mubr.f32.mxu0 0.0
  %501 = vmatmul.mubr.f32.gmra.mrb[0].mxu0 %v336
  %v502 = vpop.f32.mrb[0].mxu0
  %v503 = vadd.f32 0.0, %v502
  %v504 = vpop.f32.mrb[0].mxu0
  %505 = vmatprep.mubr.f32.mxu0 0.0
  %506 = vmatmul.mubr.f32.gmra.mrb[0].mxu0 %v337
  %v507 = vpop.f32.mrb[0].mxu0
  %v508 = vadd.f32 0.0, %v507
  %v509 = vpop.f32.mrb[0].mxu0
  %510 = vmatprep.mubr.f32.mxu0 0.0
  %511 = vmatmul.mubr.f32.gmra.mrb[0].mxu0 %v338
  %v512 = vpop.f32.mrb[0].mxu0
  %v513 = vadd.f32 0.0, %v512
  %v514 = vpop.f32.mrb[0].mxu0
  %515 = vmatprep.mubr.f32.mxu0 0.0
  %516 = vmatmul.mubr.f32.gmra.mrb[0].mxu0 %v339
  %v517 = vpop.f32.mrb[0].mxu0
  %v518 = vadd.f32 0.0, %v517
  %v519 = vpop.f32.mrb[0].mxu0
  %520 = vmatprep.mubr.f32.mxu0 0.0
  %521 = vmatmul.mubr.f32.gmra.mrb[0].mxu0 %v340
  %v522 = vpop.f32.mrb[0].mxu0
  %v523 = vadd.f32 0.0, %v522
  %v524 = vpop.f32.mrb[0].mxu0
  %525 = vmatprep.mubr.f32.mxu0 0.0
  %526 = vmatmul.mubr.f32.gmra.mrb[0].mxu0 %v341
  %v527 = vpop.f32.mrb[0].mxu0
  %v528 = vadd.f32 0.0, %v527
  %v529 = vpop.f32.mrb[0].mxu0
  %530 = vmatprep.mubr.f32.mxu0 0.0
  %531 = vmatmul.mubr.f32.gmra.mrb[0].mxu0 %v342
  %v532 = vpop.f32.mrb[0].mxu0
  %v533 = vadd.f32 0.0, %v532
  %v534 = vpop.f32.mrb[0].mxu0
  %535 = vmatprep.mubr.f32.mxu0 0.0
  %536 = vmatmul.mubr.f32.gmra.mrb[0].mxu0 %v343
  %v537 = vpop.f32.mrb[0].mxu0
  %v538 = vadd.f32 0.0, %v537
  %v539 = vpop.f32.mrb[0].mxu0
  %540 = vmatprep.mubr.f32.mxu0 0.0
  %541 = vmatmul.mubr.f32.gmra.mrb[0].mxu0 %v344
  %v542 = vpop.f32.mrb[0].mxu0
  %v543 = vadd.f32 0.0, %v542
  %v544 = vpop.f32.mrb[0].mxu0
  %545 = vmatprep.mubr.f32.mxu0 0.0
  %546 = vmatmul.mubr.f32.gmra.mrb[0].mxu0 %v345
  %v547 = vpop.f32.mrb[0].mxu0
  %v548 = vadd.f32 0.0, %v547
  %v549 = vpop.f32.mrb[0].mxu0
  %550 = vmatprep.mubr.f32.mxu0 0.0
  %551 = vmatmul.mubr.f32.gmra.mrb[0].mxu0 %v346
  %v552 = vpop.f32.mrb[0].mxu0
  %v553 = vadd.f32 0.0, %v552
  %v554 = vpop.f32.mrb[0].mxu0
  %555 = vmatprep.mubr.f32.mxu0 0.0
  %556 = vmatmul.mubr.f32.gmra.mrb[0].mxu0 %v347
  %v557 = vpop.f32.mrb[0].mxu0
  %v558 = vadd.f32 0.0, %v557
  %v559 = vpop.f32.mrb[0].mxu0
  %560 = vmatprep.mubr.f32.mxu0 0.0
  %561 = vmatmul.mubr.f32.gmra.mrb[0].mxu0 %v348
  %v562 = vpop.f32.mrb[0].mxu0
  %v563 = vadd.f32 0.0, %v562
  %v564 = vpop.f32.mrb[0].mxu0
  %565 = vmatprep.mubr.f32.mxu0 0.0
  %566 = vmatmul.mubr.f32.gmra.mrb[0].mxu0 %v349
  %v567 = vpop.f32.mrb[0].mxu0
  %v568 = vadd.f32 0.0, %v567
  %v569 = vpop.f32.mrb[0].mxu0
  %570 = vmatprep.mubr.f32.mxu0 0.0
  %571 = vmatmul.mubr.f32.gmra.mrb[0].mxu0 %v350
  %v572 = vpop.f32.mrb[0].mxu0
  %v573 = vadd.f32 0.0, %v572
  %v574 = vpop.f32.mrb[0].mxu0
  %575 = vmatprep.mubr.f32.mxu0 0.0
  %576 = vmatmul.mubr.f32.gmra.mrb[0].mxu0 %v351
  %v577 = vpop.f32.mrb[0].mxu0
  %v578 = vadd.f32 0.0, %v577
  %v579 = vpop.f32.mrb[0].mxu0
  %580 = vmatprep.mubr.f32.mxu0 0.0
  %581 = vmatmul.mubr.f32.gmra.mrb[0].mxu0 %v352
  %v582 = vpop.f32.mrb[0].mxu0
  %v583 = vadd.f32 0.0, %v582
  %v584 = vpop.f32.mrb[0].mxu0
  %585 = vmatprep.mubr.f32.mxu0 0.0
  %586 = vmatmul.mubr.f32.gmra.mrb[0].mxu0 %v353
  %v587 = vpop.f32.mrb[0].mxu0
  %v588 = vadd.f32 0.0, %v587
  %v589 = vpop.f32.mrb[0].mxu0
  %590 = vmatprep.mubr.f32.mxu0 0.0
  %591 = vmatmul.mubr.f32.gmra.mrb[0].mxu0 %v354
  %v592 = vpop.f32.mrb[0].mxu0
  %v593 = vadd.f32 0.0, %v592
  %v594 = vpop.f32.mrb[0].mxu0
  %595 = vmatprep.mubr.f32.mxu0 0.0
  %596 = vmatmul.mubr.f32.gmra.mrb[0].mxu0 %v355
  %v597 = vpop.f32.mrb[0].mxu0
  %v598 = vadd.f32 0.0, %v597
  %v599 = vpop.f32.mrb[0].mxu0
  %600 = vdwg.mxu0
  %v601 = vld [vmem:[%s2] sm:$0xff]
  %v602 = vld [vmem:[%s2 + $0x8] sm:$0xff]
  %v603 = vld [vmem:[%s2 + $0x10] sm:$0xff]
  %v604 = vld [vmem:[%s2 + $0x18] sm:$0xff]
  %v605 = vld [vmem:[%s2 + $0x20] sm:$0xff]
  %v606 = vld [vmem:[%s2 + $0x28] sm:$0xff]
  %v607 = vld [vmem:[%s2 + $0x30] sm:$0xff]
  %v608 = vld [vmem:[%s2 + $0x38] sm:$0xff]
  %v609 = vld [vmem:[%s2 + $0x40] sm:$0xff]
  %v610 = vld [vmem:[%s2 + $0x48] sm:$0xff]
  %v611 = vld [vmem:[%s2 + $0x50] sm:$0xff]
  %v612 = vld [vmem:[%s2 + $0x58] sm:$0xff]
  %v613 = vld [vmem:[%s2 + $0x60] sm:$0xff]
  %v614 = vld [vmem:[%s2 + $0x68] sm:$0xff]
  %v615 = vld [vmem:[%s2 + $0x70] sm:$0xff]
  %v616 = vld [vmem:[%s2 + $0x78] sm:$0xff]
  %v617 = vld [vmem:[%s2 + $0x80] sm:$0xff]
  %v618 = vld [vmem:[%s2 + $0x88] sm:$0xff]
  %v619 = vld [vmem:[%s2 + $0x90] sm:$0xff]
  %v620 = vld [vmem:[%s2 + $0x98] sm:$0xff]
  %v621 = vld [vmem:[%s2 + $0xa0] sm:$0xff]
  %v622 = vld [vmem:[%s2 + $0xa8] sm:$0xff]
  %v623 = vld [vmem:[%s2 + $0xb0] sm:$0xff]
  %v624 = vld [vmem:[%s2 + $0xb8] sm:$0xff]
  %v625 = vld [vmem:[%s2 + $0xc0] sm:$0xff]
  %v626 = vld [vmem:[%s2 + $0xc8] sm:$0xff]
  %v627 = vld [vmem:[%s2 + $0xd0] sm:$0xff]
  %v628 = vld [vmem:[%s2 + $0xd8] sm:$0xff]
  %v629 = vld [vmem:[%s2 + $0xe0] sm:$0xff]
  %v630 = vld [vmem:[%s2 + $0xe8] sm:$0xff]
  %v631 = vld [vmem:[%s2 + $0xf0] sm:$0xff]
  %v632 = vld [vmem:[%s2 + $0xf8] sm:$0xff]
  %v633 = vld [vmem:[%s2 + $0x100] sm:$0xff]
  %v634 = vld [vmem:[%s2 + $0x108] sm:$0xff]
  %v635 = vld [vmem:[%s2 + $0x110] sm:$0xff]
  %v636 = vld [vmem:[%s2 + $0x118] sm:$0xff]
  %637 = vmatprep.subr.mxu0 0.0
  %638 = vmatpush1.msra.mxu0 %v23
  %639 = vmatprep.subr.mxu0 0.0
  %640 = vmatpush1.msra.mxu0 %v24
  %641 = vmatprep.subr.mxu0 0.0
  %642 = vmatpush1.msra.mxu0 %v25
  %643 = vmatprep.subr.mxu0 0.0
  %644 = vmatpush1.msra.mxu0 %v26
  %645 = vmatprep.subr.mxu0 0.0
  %646 = vmatpush1.msra.mxu0 %v27
  %647 = vmatprep.subr.mxu0 0.0
  %648 = vmatpush1.msra.mxu0 %v28
  %649 = vmatprep.subr.mxu0 0.0
  %650 = vmatpush1.msra.mxu0 %v29
  %651 = vmatprep.subr.mxu0 0.0
  %652 = vmatpush1.msra.mxu0 %v30
  %653 = vmatprep.subr.mxu0 0.0
  %654 = vmatpush1.msra.mxu0 %v31
  %655 = vmatprep.subr.mxu0 0.0
  %656 = vmatpush1.msra.mxu0 %v32
  %657 = vmatprep.subr.mxu0 0.0
  %658 = vmatpush1.msra.mxu0 %v33
  %659 = vmatprep.subr.mxu0 0.0
  %660 = vmatpush1.msra.mxu0 %v34
  %661 = vmatprep.subr.mxu0 0.0
  %662 = vmatpush1.msra.mxu0 %v35
  %663 = vmatprep.subr.mxu0 0.0
  %664 = vmatpush1.msra.mxu0 %v36
  %665 = vmatprep.subr.mxu0 0.0
  %666 = vmatpush1.msra.mxu0 %v37
  %667 = vmatprep.subr.mxu0 0.0
  %668 = vmatpush1.msra.mxu0 %v38
  %669 = vmatprep.subr.mxu0 0.0
  %670 = vmatpush1.msra.mxu0 0.0
  %671 = vmatprep.subr.mxu0 0.0
  %672 = vmatpush1.msra.mxu0 0.0
  %673 = vmatprep.subr.mxu0 0.0
  %674 = vmatpush1.msra.mxu0 0.0
  %675 = vmatprep.subr.mxu0 0.0
  %676 = vmatpush1.msra.mxu0 0.0
  %677 = vmatprep.subr.mxu0 0.0
  %678 = vmatpush1.msra.mxu0 0.0
  %679 = vmatprep.subr.mxu0 0.0
  %680 = vmatpush1.msra.mxu0 0.0
  %681 = vmatprep.subr.mxu0 0.0
  %682 = vmatpush1.msra.mxu0 0.0
  %683 = vmatprep.subr.mxu0 0.0
  %684 = vmatpush1.msra.mxu0 0.0
  %685 = vmatprep.subr.mxu0 0.0
  %686 = vmatpush1.msra.mxu0 0.0
  %687 = vmatprep.subr.mxu0 0.0
  %688 = vmatpush1.msra.mxu0 0.0
  %689 = vmatprep.subr.mxu0 0.0
  %690 = vmatpush1.msra.mxu0 0.0
  %691 = vmatprep.subr.mxu0 0.0
  %692 = vmatpush1.msra.mxu0 0.0
  %693 = vmatprep.subr.mxu0 0.0
  %694 = vmatpush1.msra.mxu0 0.0
  %695 = vmatprep.subr.mxu0 0.0
  %696 = vmatpush1.msra.mxu0 0.0
  %697 = vmatprep.subr.mxu0 0.0
  %698 = vmatpush1.msra.mxu0 0.0
  %699 = vmatprep.subr.mxu0 0.0
  %700 = vmatpush1.msra.mxu0 0.0
  %701 = vmatprep.mubr.f32.mxu0 0.0
  %702 = vmatmul.mubr.f32.gmra.mrb[0].mxu0 %v601
  %v703 = vpop.f32.mrb[0].mxu0
  %v704 = vadd.f32 0.0, %v703
  %v705 = vpop.f32.mrb[0].mxu0
  %706 = vmatprep.mubr.f32.mxu0 0.0
  %707 = vmatmul.mubr.f32.gmra.mrb[0].mxu0 %v602
  %v708 = vpop.f32.mrb[0].mxu0
  %v709 = vadd.f32 0.0, %v708
  %v710 = vpop.f32.mrb[0].mxu0
  %711 = vmatprep.mubr.f32.mxu0 0.0
  %712 = vmatmul.mubr.f32.gmra.mrb[0].mxu0 %v603
  %v713 = vpop.f32.mrb[0].mxu0
  %v714 = vadd.f32 0.0, %v713
  %v715 = vpop.f32.mrb[0].mxu0
  %716 = vmatprep.mubr.f32.mxu0 0.0
  %717 = vmatmul.mubr.f32.gmra.mrb[0].mxu0 %v604
  %v718 = vpop.f32.mrb[0].mxu0
  %v719 = vadd.f32 0.0, %v718
  %v720 = vpop.f32.mrb[0].mxu0
  %721 = vmatprep.mubr.f32.mxu0 0.0
  %722 = vmatmul.mubr.f32.gmra.mrb[0].mxu0 %v605
  %v723 = vpop.f32.mrb[0].mxu0
  %v724 = vadd.f32 0.0, %v723
  %v725 = vpop.f32.mrb[0].mxu0
  %726 = vmatprep.mubr.f32.mxu0 0.0
  %727 = vmatmul.mubr.f32.gmra.mrb[0].mxu0 %v606
  %v728 = vpop.f32.mrb[0].mxu0
  %v729 = vadd.f32 0.0, %v728
  %v730 = vpop.f32.mrb[0].mxu0
  %731 = vmatprep.mubr.f32.mxu0 0.0
  %732 = vmatmul.mubr.f32.gmra.mrb[0].mxu0 %v607
  %v733 = vpop.f32.mrb[0].mxu0
  %v734 = vadd.f32 0.0, %v733
  %v735 = vpop.f32.mrb[0].mxu0
  %736 = vmatprep.mubr.f32.mxu0 0.0
  %737 = vmatmul.mubr.f32.gmra.mrb[0].mxu0 %v608
  %v738 = vpop.f32.mrb[0].mxu0
  %v739 = vadd.f32 0.0, %v738
  %v740 = vpop.f32.mrb[0].mxu0
  %741 = vmatprep.mubr.f32.mxu0 0.0
  %742 = vmatmul.mubr.f32.gmra.mrb[0].mxu0 %v609
  %v743 = vpop.f32.mrb[0].mxu0
  %v744 = vadd.f32 0.0, %v743
  %v745 = vpop.f32.mrb[0].mxu0
  %746 = vmatprep.mubr.f32.mxu0 0.0
  %747 = vmatmul.mubr.f32.gmra.mrb[0].mxu0 %v610
  %v748 = vpop.f32.mrb[0].mxu0
  %v749 = vadd.f32 0.0, %v748
  %v750 = vpop.f32.mrb[0].mxu0
  %751 = vmatprep.mubr.f32.mxu0 0.0
  %752 = vmatmul.mubr.f32.gmra.mrb[0].mxu0 %v611
  %v753 = vpop.f32.mrb[0].mxu0
  %v754 = vadd.f32 0.0, %v753
  %v755 = vpop.f32.mrb[0].mxu0
  %756 = vmatprep.mubr.f32.mxu0 0.0
  %757 = vmatmul.mubr.f32.gmra.mrb[0].mxu0 %v612
  %v758 = vpop.f32.mrb[0].mxu0
  %v759 = vadd.f32 0.0, %v758
  %v760 = vpop.f32.mrb[0].mxu0
  %761 = vmatprep.mubr.f32.mxu0 0.0
  %762 = vmatmul.mubr.f32.gmra.mrb[0].mxu0 %v613
  %v763 = vpop.f32.mrb[0].mxu0
  %v764 = vadd.f32 0.0, %v763
  %v765 = vpop.f32.mrb[0].mxu0
  %766 = vmatprep.mubr.f32.mxu0 0.0
  %767 = vmatmul.mubr.f32.gmra.mrb[0].mxu0 %v614
  %v768 = vpop.f32.mrb[0].mxu0
  %v769 = vadd.f32 0.0, %v768
  %v770 = vpop.f32.mrb[0].mxu0
  %771 = vmatprep.mubr.f32.mxu0 0.0
  %772 = vmatmul.mubr.f32.gmra.mrb[0].mxu0 %v615
  %v773 = vpop.f32.mrb[0].mxu0
  %v774 = vadd.f32 0.0, %v773
  %v775 = vpop.f32.mrb[0].mxu0
  %776 = vmatprep.mubr.f32.mxu0 0.0
  %777 = vmatmul.mubr.f32.gmra.mrb[0].mxu0 %v616
  %v778 = vpop.f32.mrb[0].mxu0
  %v779 = vadd.f32 0.0, %v778
  %v780 = vpop.f32.mrb[0].mxu0
  %781 = vmatprep.mubr.f32.mxu0 0.0
  %782 = vmatmul.mubr.f32.gmra.mrb[0].mxu0 %v617
  %v783 = vpop.f32.mrb[0].mxu0
  %v784 = vadd.f32 0.0, %v783
  %v785 = vpop.f32.mrb[0].mxu0
  %786 = vmatprep.mubr.f32.mxu0 0.0
  %787 = vmatmul.mubr.f32.gmra.mrb[0].mxu0 %v618
  %v788 = vpop.f32.mrb[0].mxu0
  %v789 = vadd.f32 0.0, %v788
  %v790 = vpop.f32.mrb[0].mxu0
  %791 = vmatprep.mubr.f32.mxu0 0.0
  %792 = vmatmul.mubr.f32.gmra.mrb[0].mxu0 %v619
  %v793 = vpop.f32.mrb[0].mxu0
  %v794 = vadd.f32 0.0, %v793
  %v795 = vpop.f32.mrb[0].mxu0
  %796 = vmatprep.mubr.f32.mxu0 0.0
  %797 = vmatmul.mubr.f32.gmra.mrb[0].mxu0 %v620
  %v798 = vpop.f32.mrb[0].mxu0
  %v799 = vadd.f32 0.0, %v798
  %v800 = vpop.f32.mrb[0].mxu0
  %801 = vmatprep.mubr.f32.mxu0 0.0
  %802 = vmatmul.mubr.f32.gmra.mrb[0].mxu0 %v621
  %v803 = vpop.f32.mrb[0].mxu0
  %v804 = vadd.f32 0.0, %v803
  %v805 = vpop.f32.mrb[0].mxu0
  %806 = vmatprep.mubr.f32.mxu0 0.0
  %807 = vmatmul.mubr.f32.gmra.mrb[0].mxu0 %v622
  %v808 = vpop.f32.mrb[0].mxu0
  %v809 = vadd.f32 0.0, %v808
  %v810 = vpop.f32.mrb[0].mxu0
  %811 = vmatprep.mubr.f32.mxu0 0.0
  %812 = vmatmul.mubr.f32.gmra.mrb[0].mxu0 %v623
  %v813 = vpop.f32.mrb[0].mxu0
  %v814 = vadd.f32 0.0, %v813
  %v815 = vpop.f32.mrb[0].mxu0
  %816 = vmatprep.mubr.f32.mxu0 0.0
  %817 = vmatmul.mubr.f32.gmra.mrb[0].mxu0 %v624
  %v818 = vpop.f32.mrb[0].mxu0
  %v819 = vadd.f32 0.0, %v818
  %v820 = vpop.f32.mrb[0].mxu0
  %821 = vmatprep.mubr.f32.mxu0 0.0
  %822 = vmatmul.mubr.f32.gmra.mrb[0].mxu0 %v625
  %v823 = vpop.f32.mrb[0].mxu0
  %v824 = vadd.f32 0.0, %v823
  %v825 = vpop.f32.mrb[0].mxu0
  %826 = vmatprep.mubr.f32.mxu0 0.0
  %827 = vmatmul.mubr.f32.gmra.mrb[0].mxu0 %v626
  %v828 = vpop.f32.mrb[0].mxu0
  %v829 = vadd.f32 0.0, %v828
  %v830 = vpop.f32.mrb[0].mxu0
  %831 = vmatprep.mubr.f32.mxu0 0.0
  %832 = vmatmul.mubr.f32.gmra.mrb[0].mxu0 %v627
  %v833 = vpop.f32.mrb[0].mxu0
  %v834 = vadd.f32 0.0, %v833
  %v835 = vpop.f32.mrb[0].mxu0
  %836 = vmatprep.mubr.f32.mxu0 0.0
  %837 = vmatmul.mubr.f32.gmra.mrb[0].mxu0 %v628
  %v838 = vpop.f32.mrb[0].mxu0
  %v839 = vadd.f32 0.0, %v838
  %v840 = vpop.f32.mrb[0].mxu0
  %841 = vmatprep.mubr.f32.mxu0 0.0
  %842 = vmatmul.mubr.f32.gmra.mrb[0].mxu0 %v629
  %v843 = vpop.f32.mrb[0].mxu0
  %v844 = vadd.f32 0.0, %v843
  %v845 = vpop.f32.mrb[0].mxu0
  %846 = vmatprep.mubr.f32.mxu0 0.0
  %847 = vmatmul.mubr.f32.gmra.mrb[0].mxu0 %v630
  %v848 = vpop.f32.mrb[0].mxu0
  %v849 = vadd.f32 0.0, %v848
  %v850 = vpop.f32.mrb[0].mxu0
  %851 = vmatprep.mubr.f32.mxu0 0.0
  %852 = vmatmul.mubr.f32.gmra.mrb[0].mxu0 %v631
  %v853 = vpop.f32.mrb[0].mxu0
  %v854 = vadd.f32 0.0, %v853
  %v855 = vpop.f32.mrb[0].mxu0
  %856 = vmatprep.mubr.f32.mxu0 0.0
  %857 = vmatmul.mubr.f32.gmra.mrb[0].mxu0 %v632
  %v858 = vpop.f32.mrb[0].mxu0
  %v859 = vadd.f32 0.0, %v858
  %v860 = vpop.f32.mrb[0].mxu0
  %861 = vmatprep.mubr.f32.mxu0 0.0
  %862 = vmatmul.mubr.f32.gmra.mrb[0].mxu0 %v633
  %v863 = vpop.f32.mrb[0].mxu0
  %v864 = vadd.f32 0.0, %v863
  %v865 = vpop.f32.mrb[0].mxu0
  %866 = vmatprep.mubr.f32.mxu0 0.0
  %867 = vmatmul.mubr.f32.gmra.mrb[0].mxu0 %v634
  %v868 = vpop.f32.mrb[0].mxu0
  %v869 = vadd.f32 0.0, %v868
  %v870 = vpop.f32.mrb[0].mxu0
  %871 = vmatprep.mubr.f32.mxu0 0.0
  %872 = vmatmul.mubr.f32.gmra.mrb[0].mxu0 %v635
  %v873 = vpop.f32.mrb[0].mxu0
  %v874 = vadd.f32 0.0, %v873
  %v875 = vpop.f32.mrb[0].mxu0
  %876 = vmatprep.mubr.f32.mxu0 0.0
  %877 = vmatmul.mubr.f32.gmra.mrb[0].mxu0 %v636
  %v878 = vpop.f32.mrb[0].mxu0
  %v879 = vadd.f32 0.0, %v878
  %v880 = vpop.f32.mrb[0].mxu0
  %881 = vdwg.mxu0
  %v882 = vld [vmem:[%s3] sm:$0xff]
  %v883 = vld [vmem:[%s3 + $0x8] sm:$0xff]
  %v884 = vld [vmem:[%s3 + $0x10] sm:$0xff]
  %v885 = vld [vmem:[%s3 + $0x18] sm:$0xff]
  %v886 = vld [vmem:[%s3 + $0x20] sm:$0xff]
  %v887 = vld [vmem:[%s3 + $0x28] sm:$0xff]
  %v888 = vld [vmem:[%s3 + $0x30] sm:$0xff]
  %v889 = vld [vmem:[%s3 + $0x38] sm:$0xff]
  %v890 = vld [vmem:[%s3 + $0x40] sm:$0xff]
  %v891 = vld [vmem:[%s3 + $0x48] sm:$0xff]
  %v892 = vld [vmem:[%s3 + $0x50] sm:$0xff]
  %v893 = vld [vmem:[%s3 + $0x58] sm:$0xff]
  %v894 = vld [vmem:[%s3 + $0x60] sm:$0xff]
  %v895 = vld [vmem:[%s3 + $0x68] sm:$0xff]
  %v896 = vld [vmem:[%s3 + $0x70] sm:$0xff]
  %v897 = vld [vmem:[%s3 + $0x78] sm:$0xff]
  %v898 = vld [vmem:[%s3 + $0x80] sm:$0xff]
  %v899 = vld [vmem:[%s3 + $0x88] sm:$0xff]
  %v900 = vld [vmem:[%s3 + $0x90] sm:$0xff]
  %v901 = vld [vmem:[%s3 + $0x98] sm:$0xff]
  %v902 = vld [vmem:[%s3 + $0xa0] sm:$0xff]
  %v903 = vld [vmem:[%s3 + $0xa8] sm:$0xff]
  %v904 = vld [vmem:[%s3 + $0xb0] sm:$0xff]
  %v905 = vld [vmem:[%s3 + $0xb8] sm:$0xff]
  %v906 = vld [vmem:[%s3 + $0xc0] sm:$0xff]
  %v907 = vld [vmem:[%s3 + $0xc8] sm:$0xff]
  %v908 = vld [vmem:[%s3 + $0xd0] sm:$0xff]
  %v909 = vld [vmem:[%s3 + $0xd8] sm:$0xff]
  %v910 = vld [vmem:[%s3 + $0xe0] sm:$0xff]
  %v911 = vld [vmem:[%s3 + $0xe8] sm:$0xff]
  %v912 = vld [vmem:[%s3 + $0xf0] sm:$0xff]
  %v913 = vld [vmem:[%s3 + $0xf8] sm:$0xff]
  %v914 = vld [vmem:[%s3 + $0x100] sm:$0xff]
  %v915 = vld [vmem:[%s3 + $0x108] sm:$0xff]
  %v916 = vld [vmem:[%s3 + $0x110] sm:$0xff]
  %v917 = vld [vmem:[%s3 + $0x118] sm:$0xff]
  %918 = vmatprep.subr.mxu0 0.0
  %919 = vmatpush1.msra.mxu0 %v23
  %920 = vmatprep.subr.mxu0 0.0
  %921 = vmatpush1.msra.mxu0 %v24
  %922 = vmatprep.subr.mxu0 0.0
  %923 = vmatpush1.msra.mxu0 %v25
  %924 = vmatprep.subr.mxu0 0.0
  %925 = vmatpush1.msra.mxu0 %v26
  %926 = vmatprep.subr.mxu0 0.0
  %927 = vmatpush1.msra.mxu0 %v27
  %928 = vmatprep.subr.mxu0 0.0
  %929 = vmatpush1.msra.mxu0 %v28
  %930 = vmatprep.subr.mxu0 0.0
  %931 = vmatpush1.msra.mxu0 %v29
  %932 = vmatprep.subr.mxu0 0.0
  %933 = vmatpush1.msra.mxu0 %v30
  %934 = vmatprep.subr.mxu0 0.0
  %935 = vmatpush1.msra.mxu0 %v31
  %936 = vmatprep.subr.mxu0 0.0
  %937 = vmatpush1.msra.mxu0 %v32
  %938 = vmatprep.subr.mxu0 0.0
  %939 = vmatpush1.msra.mxu0 %v33
  %940 = vmatprep.subr.mxu0 0.0
  %941 = vmatpush1.msra.mxu0 %v34
  %942 = vmatprep.subr.mxu0 0.0
  %943 = vmatpush1.msra.mxu0 %v35
  %944 = vmatprep.subr.mxu0 0.0
  %945 = vmatpush1.msra.mxu0 %v36
  %946 = vmatprep.subr.mxu0 0.0
  %947 = vmatpush1.msra.mxu0 %v37
  %948 = vmatprep.subr.mxu0 0.0
  %949 = vmatpush1.msra.mxu0 %v38
  %950 = vmatprep.subr.mxu0 0.0
  %951 = vmatpush1.msra.mxu0 0.0
  %952 = vmatprep.subr.mxu0 0.0
  %953 = vmatpush1.msra.mxu0 0.0
  %954 = vmatprep.subr.mxu0 0.0
  %955 = vmatpush1.msra.mxu0 0.0
  %956 = vmatprep.subr.mxu0 0.0
  %957 = vmatpush1.msra.mxu0 0.0
  %958 = vmatprep.subr.mxu0 0.0
  %959 = vmatpush1.msra.mxu0 0.0
  %960 = vmatprep.subr.mxu0 0.0
  %961 = vmatpush1.msra.mxu0 0.0
  %962 = vmatprep.subr.mxu0 0.0
  %963 = vmatpush1.msra.mxu0 0.0
  %964 = vmatprep.subr.mxu0 0.0
  %965 = vmatpush1.msra.mxu0 0.0
  %966 = vmatprep.subr.mxu0 0.0
  %967 = vmatpush1.msra.mxu0 0.0
  %968 = vmatprep.subr.mxu0 0.0
  %969 = vmatpush1.msra.mxu0 0.0
  %970 = vmatprep.subr.mxu0 0.0
  %971 = vmatpush1.msra.mxu0 0.0
  %972 = vmatprep.subr.mxu0 0.0
  %973 = vmatpush1.msra.mxu0 0.0
  %974 = vmatprep.subr.mxu0 0.0
  %975 = vmatpush1.msra.mxu0 0.0
  %976 = vmatprep.subr.mxu0 0.0
  %977 = vmatpush1.msra.mxu0 0.0
  %978 = vmatprep.subr.mxu0 0.0
  %979 = vmatpush1.msra.mxu0 0.0
  %980 = vmatprep.subr.mxu0 0.0
  %981 = vmatpush1.msra.mxu0 0.0
  %982 = vmatprep.mubr.f32.mxu0 0.0
  %983 = vmatmul.mubr.f32.gmra.mrb[0].mxu0 %v882
  %v984 = vpop.f32.mrb[0].mxu0
  %v985 = vadd.f32 0.0, %v984
  %v986 = vpop.f32.mrb[0].mxu0
  %987 = vmatprep.mubr.f32.mxu0 0.0
  %988 = vmatmul.mubr.f32.gmra.mrb[0].mxu0 %v883
  %v989 = vpop.f32.mrb[0].mxu0
  %v990 = vadd.f32 0.0, %v989
  %v991 = vpop.f32.mrb[0].mxu0
  %992 = vmatprep.mubr.f32.mxu0 0.0
  %993 = vmatmul.mubr.f32.gmra.mrb[0].mxu0 %v884
  %v994 = vpop.f32.mrb[0].mxu0
  %v995 = vadd.f32 0.0, %v994
  %v996 = vpop.f32.mrb[0].mxu0
  %997 = vmatprep.mubr.f32.mxu0 0.0
  %998 = vmatmul.mubr.f32.gmra.mrb[0].mxu0 %v885
  %v999 = vpop.f32.mrb[0].mxu0
  %v1000 = vadd.f32 0.0, %v999
  %v1001 = vpop.f32.mrb[0].mxu0
  %1002 = vmatprep.mubr.f32.mxu0 0.0
  %1003 = vmatmul.mubr.f32.gmra.mrb[0].mxu0 %v886
  %v1004 = vpop.f32.mrb[0].mxu0
  %v1005 = vadd.f32 0.0, %v1004
  %v1006 = vpop.f32.mrb[0].mxu0
  %1007 = vmatprep.mubr.f32.mxu0 0.0
  %1008 = vmatmul.mubr.f32.gmra.mrb[0].mxu0 %v887
  %v1009 = vpop.f32.mrb[0].mxu0
  %v1010 = vadd.f32 0.0, %v1009
  %v1011 = vpop.f32.mrb[0].mxu0
  %1012 = vmatprep.mubr.f32.mxu0 0.0
  %1013 = vmatmul.mubr.f32.gmra.mrb[0].mxu0 %v888
  %v1014 = vpop.f32.mrb[0].mxu0
  %v1015 = vadd.f32 0.0, %v1014
  %v1016 = vpop.f32.mrb[0].mxu0
  %1017 = vmatprep.mubr.f32.mxu0 0.0
  %1018 = vmatmul.mubr.f32.gmra.mrb[0].mxu0 %v889
  %v1019 = vpop.f32.mrb[0].mxu0
  %v1020 = vadd.f32 0.0, %v1019
  %v1021 = vpop.f32.mrb[0].mxu0
  %1022 = vmatprep.mubr.f32.mxu0 0.0
  %1023 = vmatmul.mubr.f32.gmra.mrb[0].mxu0 %v890
  %v1024 = vpop.f32.mrb[0].mxu0
  %v1025 = vadd.f32 0.0, %v1024
  %v1026 = vpop.f32.mrb[0].mxu0
  %1027 = vmatprep.mubr.f32.mxu0 0.0
  %1028 = vmatmul.mubr.f32.gmra.mrb[0].mxu0 %v891
  %v1029 = vpop.f32.mrb[0].mxu0
  %v1030 = vadd.f32 0.0, %v1029
  %v1031 = vpop.f32.mrb[0].mxu0
  %1032 = vmatprep.mubr.f32.mxu0 0.0
  %1033 = vmatmul.mubr.f32.gmra.mrb[0].mxu0 %v892
  %v1034 = vpop.f32.mrb[0].mxu0
  %v1035 = vadd.f32 0.0, %v1034
  %v1036 = vpop.f32.mrb[0].mxu0
  %1037 = vmatprep.mubr.f32.mxu0 0.0
  %1038 = vmatmul.mubr.f32.gmra.mrb[0].mxu0 %v893
  %v1039 = vpop.f32.mrb[0].mxu0
  %v1040 = vadd.f32 0.0, %v1039
  %v1041 = vpop.f32.mrb[0].mxu0
  %1042 = vmatprep.mubr.f32.mxu0 0.0
  %1043 = vmatmul.mubr.f32.gmra.mrb[0].mxu0 %v894
  %v1044 = vpop.f32.mrb[0].mxu0
  %v1045 = vadd.f32 0.0, %v1044
  %v1046 = vpop.f32.mrb[0].mxu0
  %1047 = vmatprep.mubr.f32.mxu0 0.0
  %1048 = vmatmul.mubr.f32.gmra.mrb[0].mxu0 %v895
  %v1049 = vpop.f32.mrb[0].mxu0
  %v1050 = vadd.f32 0.0, %v1049
  %v1051 = vpop.f32.mrb[0].mxu0
  %1052 = vmatprep.mubr.f32.mxu0 0.0
  %1053 = vmatmul.mubr.f32.gmra.mrb[0].mxu0 %v896
  %v1054 = vpop.f32.mrb[0].mxu0
  %v1055 = vadd.f32 0.0, %v1054
  %v1056 = vpop.f32.mrb[0].mxu0
  %1057 = vmatprep.mubr.f32.mxu0 0.0
  %1058 = vmatmul.mubr.f32.gmra.mrb[0].mxu0 %v897
  %v1059 = vpop.f32.mrb[0].mxu0
  %v1060 = vadd.f32 0.0, %v1059
  %v1061 = vpop.f32.mrb[0].mxu0
  %1062 = vmatprep.mubr.f32.mxu0 0.0
  %1063 = vmatmul.mubr.f32.gmra.mrb[0].mxu0 %v898
  %v1064 = vpop.f32.mrb[0].mxu0
  %v1065 = vadd.f32 0.0, %v1064
  %v1066 = vpop.f32.mrb[0].mxu0
  %1067 = vmatprep.mubr.f32.mxu0 0.0
  %1068 = vmatmul.mubr.f32.gmra.mrb[0].mxu0 %v899
  %v1069 = vpop.f32.mrb[0].mxu0
  %v1070 = vadd.f32 0.0, %v1069
  %v1071 = vpop.f32.mrb[0].mxu0
  %1072 = vmatprep.mubr.f32.mxu0 0.0
  %1073 = vmatmul.mubr.f32.gmra.mrb[0].mxu0 %v900
  %v1074 = vpop.f32.mrb[0].mxu0
  %v1075 = vadd.f32 0.0, %v1074
  %v1076 = vpop.f32.mrb[0].mxu0
  %1077 = vmatprep.mubr.f32.mxu0 0.0
  %1078 = vmatmul.mubr.f32.gmra.mrb[0].mxu0 %v901
  %v1079 = vpop.f32.mrb[0].mxu0
  %v1080 = vadd.f32 0.0, %v1079
  %v1081 = vpop.f32.mrb[0].mxu0
  %1082 = vmatprep.mubr.f32.mxu0 0.0
  %1083 = vmatmul.mubr.f32.gmra.mrb[0].mxu0 %v902
  %v1084 = vpop.f32.mrb[0].mxu0
  %v1085 = vadd.f32 0.0, %v1084
  %v1086 = vpop.f32.mrb[0].mxu0
  %1087 = vmatprep.mubr.f32.mxu0 0.0
  %1088 = vmatmul.mubr.f32.gmra.mrb[0].mxu0 %v903
  %v1089 = vpop.f32.mrb[0].mxu0
  %v1090 = vadd.f32 0.0, %v1089
  %v1091 = vpop.f32.mrb[0].mxu0
  %1092 = vmatprep.mubr.f32.mxu0 0.0
  %1093 = vmatmul.mubr.f32.gmra.mrb[0].mxu0 %v904
  %v1094 = vpop.f32.mrb[0].mxu0
  %v1095 = vadd.f32 0.0, %v1094
  %v1096 = vpop.f32.mrb[0].mxu0
  %1097 = vmatprep.mubr.f32.mxu0 0.0
  %1098 = vmatmul.mubr.f32.gmra.mrb[0].mxu0 %v905
  %v1099 = vpop.f32.mrb[0].mxu0
  %v1100 = vadd.f32 0.0, %v1099
  %v1101 = vpop.f32.mrb[0].mxu0
  %1102 = vmatprep.mubr.f32.mxu0 0.0
  %1103 = vmatmul.mubr.f32.gmra.mrb[0].mxu0 %v906
  %v1104 = vpop.f32.mrb[0].mxu0
  %v1105 = vadd.f32 0.0, %v1104
  %v1106 = vpop.f32.mrb[0].mxu0
  %1107 = vmatprep.mubr.f32.mxu0 0.0
  %1108 = vmatmul.mubr.f32.gmra.mrb[0].mxu0 %v907
  %v1109 = vpop.f32.mrb[0].mxu0
  %v1110 = vadd.f32 0.0, %v1109
  %v1111 = vpop.f32.mrb[0].mxu0
  %1112 = vmatprep.mubr.f32.mxu0 0.0
  %1113 = vmatmul.mubr.f32.gmra.mrb[0].mxu0 %v908
  %v1114 = vpop.f32.mrb[0].mxu0
  %v1115 = vadd.f32 0.0, %v1114
  %v1116 = vpop.f32.mrb[0].mxu0
  %1117 = vmatprep.mubr.f32.mxu0 0.0
  %1118 = vmatmul.mubr.f32.gmra.mrb[0].mxu0 %v909
  %v1119 = vpop.f32.mrb[0].mxu0
  %v1120 = vadd.f32 0.0, %v1119
  %v1121 = vpop.f32.mrb[0].mxu0
  %1122 = vmatprep.mubr.f32.mxu0 0.0
  %1123 = vmatmul.mubr.f32.gmra.mrb[0].mxu0 %v910
  %v1124 = vpop.f32.mrb[0].mxu0
  %v1125 = vadd.f32 0.0, %v1124
  %v1126 = vpop.f32.mrb[0].mxu0
  %1127 = vmatprep.mubr.f32.mxu0 0.0
  %1128 = vmatmul.mubr.f32.gmra.mrb[0].mxu0 %v911
  %v1129 = vpop.f32.mrb[0].mxu0
  %v1130 = vadd.f32 0.0, %v1129
  %v1131 = vpop.f32.mrb[0].mxu0
  %1132 = vmatprep.mubr.f32.mxu0 0.0
  %1133 = vmatmul.mubr.f32.gmra.mrb[0].mxu0 %v912
  %v1134 = vpop.f32.mrb[0].mxu0
  %v1135 = vadd.f32 0.0, %v1134
  %v1136 = vpop.f32.mrb[0].mxu0
  %1137 = vmatprep.mubr.f32.mxu0 0.0
  %1138 = vmatmul.mubr.f32.gmra.mrb[0].mxu0 %v913
  %v1139 = vpop.f32.mrb[0].mxu0
  %v1140 = vadd.f32 0.0, %v1139
  %v1141 = vpop.f32.mrb[0].mxu0
  %1142 = vmatprep.mubr.f32.mxu0 0.0
  %1143 = vmatmul.mubr.f32.gmra.mrb[0].mxu0 %v914
  %v1144 = vpop.f32.mrb[0].mxu0
  %v1145 = vadd.f32 0.0, %v1144
  %v1146 = vpop.f32.mrb[0].mxu0
  %1147 = vmatprep.mubr.f32.mxu0 0.0
  %1148 = vmatmul.mubr.f32.gmra.mrb[0].mxu0 %v915
  %v1149 = vpop.f32.mrb[0].mxu0
  %v1150 = vadd.f32 0.0, %v1149
  %v1151 = vpop.f32.mrb[0].mxu0
  %1152 = vmatprep.mubr.f32.mxu0 0.0
  %1153 = vmatmul.mubr.f32.gmra.mrb[0].mxu0 %v916
  %v1154 = vpop.f32.mrb[0].mxu0
  %v1155 = vadd.f32 0.0, %v1154
  %v1156 = vpop.f32.mrb[0].mxu0
  %1157 = vmatprep.mubr.f32.mxu0 0.0
  %1158 = vmatmul.mubr.f32.gmra.mrb[0].mxu0 %v917
  %v1159 = vpop.f32.mrb[0].mxu0
  %v1160 = vadd.f32 0.0, %v1159
  %v1161 = vpop.f32.mrb[0].mxu0
  %1162 = vdwg.mxu0
  %v1163 = vmax.f32 %v142, %v423
  %v1164 = vmax.f32 %v147, %v428
  %v1165 = vmax.f32 %v152, %v433
  %v1166 = vmax.f32 %v157, %v438
  %v1167 = vmax.f32 %v162, %v443
  %v1168 = vmax.f32 %v167, %v448
  %v1169 = vmax.f32 %v172, %v453
  %v1170 = vmax.f32 %v177, %v458
  %v1171 = vmax.f32 %v182, %v463
  %v1172 = vmax.f32 %v187, %v468
  %v1173 = vmax.f32 %v192, %v473
  %v1174 = vmax.f32 %v197, %v478
  %v1175 = vmax.f32 %v202, %v483
  %v1176 = vmax.f32 %v207, %v488
  %v1177 = vmax.f32 %v212, %v493
  %v1178 = vmax.f32 %v217, %v498
  %v1179 = vmax.f32 %v222, %v503
  %v1180 = vmax.f32 %v227, %v508
  %v1181 = vmax.f32 %v232, %v513
  %v1182 = vmax.f32 %v237, %v518
  %v1183 = vmax.f32 %v242, %v523
  %v1184 = vmax.f32 %v247, %v528
  %v1185 = vmax.f32 %v252, %v533
  %v1186 = vmax.f32 %v257, %v538
  %v1187 = vmax.f32 %v262, %v543
  %v1188 = vmax.f32 %v267, %v548
  %v1189 = vmax.f32 %v272, %v553
  %v1190 = vmax.f32 %v277, %v558
  %v1191 = vmax.f32 %v282, %v563
  %v1192 = vmax.f32 %v287, %v568
  %v1193 = vmax.f32 %v292, %v573
  %v1194 = vmax.f32 %v297, %v578
  %v1195 = vmax.f32 %v302, %v583
  %v1196 = vmax.f32 %v307, %v588
  %v1197 = vmax.f32 %v312, %v593
  %v1198 = vmax.f32 %v317, %v598
  %v1199 = vmax.f32 %v704, %v985
  %v1200 = vmax.f32 %v709, %v990
  %v1201 = vmax.f32 %v714, %v995
  %v1202 = vmax.f32 %v719, %v1000
  %v1203 = vmax.f32 %v724, %v1005
  %v1204 = vmax.f32 %v729, %v1010
  %v1205 = vmax.f32 %v734, %v1015
  %v1206 = vmax.f32 %v739, %v1020
  %v1207 = vmax.f32 %v744, %v1025
  %v1208 = vmax.f32 %v749, %v1030
  %v1209 = vmax.f32 %v754, %v1035
  %v1210 = vmax.f32 %v759, %v1040
  %v1211 = vmax.f32 %v764, %v1045
  %v1212 = vmax.f32 %v769, %v1050
  %v1213 = vmax.f32 %v774, %v1055
  %v1214 = vmax.f32 %v779, %v1060
  %v1215 = vmax.f32 %v784, %v1065
  %v1216 = vmax.f32 %v789, %v1070
  %v1217 = vmax.f32 %v794, %v1075
  %v1218 = vmax.f32 %v799, %v1080
  %v1219 = vmax.f32 %v804, %v1085
  %v1220 = vmax.f32 %v809, %v1090
  %v1221 = vmax.f32 %v814, %v1095
  %v1222 = vmax.f32 %v819, %v1100
  %v1223 = vmax.f32 %v824, %v1105
  %v1224 = vmax.f32 %v829, %v1110
  %v1225 = vmax.f32 %v834, %v1115
  %v1226 = vmax.f32 %v839, %v1120
  %v1227 = vmax.f32 %v844, %v1125
  %v1228 = vmax.f32 %v849, %v1130
  %v1229 = vmax.f32 %v854, %v1135
  %v1230 = vmax.f32 %v859, %v1140
  %v1231 = vmax.f32 %v864, %v1145
  %v1232 = vmax.f32 %v869, %v1150
  %v1233 = vmax.f32 %v874, %v1155
  %v1234 = vmax.f32 %v879, %v1160
  %v1235 = vmax.f32 %v1163, %v1199
  %v1236 = vmax.f32 %v1164, %v1200
  %v1237 = vmax.f32 %v1165, %v1201
  %v1238 = vmax.f32 %v1166, %v1202
  %v1239 = vmax.f32 %v1167, %v1203
  %v1240 = vmax.f32 %v1168, %v1204
  %v1241 = vmax.f32 %v1169, %v1205
  %v1242 = vmax.f32 %v1170, %v1206
  %v1243 = vmax.f32 %v1171, %v1207
  %v1244 = vmax.f32 %v1172, %v1208
  %v1245 = vmax.f32 %v1173, %v1209
  %v1246 = vmax.f32 %v1174, %v1210
  %v1247 = vmax.f32 %v1175, %v1211
  %v1248 = vmax.f32 %v1176, %v1212
  %v1249 = vmax.f32 %v1177, %v1213
  %v1250 = vmax.f32 %v1178, %v1214
  %v1251 = vmax.f32 %v1179, %v1215
  %v1252 = vmax.f32 %v1180, %v1216
  %v1253 = vmax.f32 %v1181, %v1217
  %v1254 = vmax.f32 %v1182, %v1218
  %v1255 = vmax.f32 %v1183, %v1219
  %v1256 = vmax.f32 %v1184, %v1220
  %v1257 = vmax.f32 %v1185, %v1221
  %v1258 = vmax.f32 %v1186, %v1222
  %v1259 = vmax.f32 %v1187, %v1223
  %v1260 = vmax.f32 %v1188, %v1224
  %v1261 = vmax.f32 %v1189, %v1225
  %v1262 = vmax.f32 %v1190, %v1226
  %v1263 = vmax.f32 %v1191, %v1227
  %v1264 = vmax.f32 %v1192, %v1228
  %v1265 = vmax.f32 %v1193, %v1229
  %v1266 = vmax.f32 %v1194, %v1230
  %v1267 = vmax.f32 %v1195, %v1231
  %v1268 = vmax.f32 %v1196, %v1232
  %v1269 = vmax.f32 %v1197, %v1233
  %v1270 = vmax.f32 %v1198, %v1234
  %v1271 = vld [vmem:[%s5] sm:$0x1]
  %v1273 = vlaneseq
  %v1274 = vshrl.u32 %v1273, 7
  %v1275 = vsub.s32 0, %v1274
  %v1276 = vrot.slane %v1271, %v1275
  %v1278 = vadd.f32 %v1235, %v1276
  %v1279 = vadd.f32 %v1236, %v1276
  %v1280 = vadd.f32 %v1237, %v1276
  %v1281 = vadd.f32 %v1238, %v1276
  %v1282 = vadd.f32 %v1239, %v1276
  %v1283 = vadd.f32 %v1240, %v1276
  %v1284 = vadd.f32 %v1241, %v1276
  %v1285 = vadd.f32 %v1242, %v1276
  %v1286 = vadd.f32 %v1243, %v1276
  %v1287 = vadd.f32 %v1244, %v1276
  %v1288 = vadd.f32 %v1245, %v1276
  %v1289 = vadd.f32 %v1246, %v1276
  %v1290 = vadd.f32 %v1247, %v1276
  %v1291 = vadd.f32 %v1248, %v1276
  %v1292 = vadd.f32 %v1249, %v1276
  %v1293 = vadd.f32 %v1250, %v1276
  %v1294 = vadd.f32 %v1251, %v1276
  %v1295 = vadd.f32 %v1252, %v1276
  %v1296 = vadd.f32 %v1253, %v1276
  %v1297 = vadd.f32 %v1254, %v1276
  %v1298 = vadd.f32 %v1255, %v1276
  %v1299 = vadd.f32 %v1256, %v1276
  %v1300 = vadd.f32 %v1257, %v1276
  %v1301 = vadd.f32 %v1258, %v1276
  %v1302 = vadd.f32 %v1259, %v1276
  %v1303 = vadd.f32 %v1260, %v1276
  %v1304 = vadd.f32 %v1261, %v1276
  %v1305 = vadd.f32 %v1262, %v1276
  %v1306 = vadd.f32 %v1263, %v1276
  %v1307 = vadd.f32 %v1264, %v1276
  %v1308 = vadd.f32 %v1265, %v1276
  %v1309 = vadd.f32 %v1266, %v1276
  %v1310 = vadd.f32 %v1267, %v1276
  %v1311 = vadd.f32 %v1268, %v1276
  %v1312 = vadd.f32 %v1269, %v1276
  %v1313 = vadd.f32 %v1270, %v1276
  %v1314 = vmax.f32 %v1278, 0.0
  %v1315 = vmax.f32 %v1279, 0.0
  %v1316 = vmax.f32 %v1280, 0.0
  %v1317 = vmax.f32 %v1281, 0.0
  %v1318 = vmax.f32 %v1282, 0.0
  %v1319 = vmax.f32 %v1283, 0.0
  %v1320 = vmax.f32 %v1284, 0.0
  %v1321 = vmax.f32 %v1285, 0.0
  %v1322 = vmax.f32 %v1286, 0.0
  %v1323 = vmax.f32 %v1287, 0.0
  %v1324 = vmax.f32 %v1288, 0.0
  %v1325 = vmax.f32 %v1289, 0.0
  %v1326 = vmax.f32 %v1290, 0.0
  %v1327 = vmax.f32 %v1291, 0.0
  %v1328 = vmax.f32 %v1292, 0.0
  %v1329 = vmax.f32 %v1293, 0.0
  %v1330 = vmax.f32 %v1294, 0.0
  %v1331 = vmax.f32 %v1295, 0.0
  %v1332 = vmax.f32 %v1296, 0.0
  %v1333 = vmax.f32 %v1297, 0.0
  %v1334 = vmax.f32 %v1298, 0.0
  %v1335 = vmax.f32 %v1299, 0.0
  %v1336 = vmax.f32 %v1300, 0.0
  %v1337 = vmax.f32 %v1301, 0.0
  %v1338 = vmax.f32 %v1302, 0.0
  %v1339 = vmax.f32 %v1303, 0.0
  %v1340 = vmax.f32 %v1304, 0.0
  %v1341 = vmax.f32 %v1305, 0.0
  %v1342 = vmax.f32 %v1306, 0.0
  %v1343 = vmax.f32 %v1307, 0.0
  %v1344 = vmax.f32 %v1308, 0.0
  %v1345 = vmax.f32 %v1309, 0.0
  %v1346 = vmax.f32 %v1310, 0.0
  %v1347 = vmax.f32 %v1311, 0.0
  %v1348 = vmax.f32 %v1312, 0.0
  %v1349 = vmax.f32 %v1313, 0.0
  %1350 = vst [vmem:[%s6] sm:$0xff] %v1314
  %1351 = vst [vmem:[%s6 + $0x8] sm:$0xff] %v1315
  %1352 = vst [vmem:[%s6 + $0x10] sm:$0xff] %v1316
  %1353 = vst [vmem:[%s6 + $0x18] sm:$0xff] %v1317
  %1354 = vst [vmem:[%s6 + $0x20] sm:$0xff] %v1318
  %1355 = vst [vmem:[%s6 + $0x28] sm:$0xff] %v1319
  %1356 = vst [vmem:[%s6 + $0x30] sm:$0xff] %v1320
  %1357 = vst [vmem:[%s6 + $0x38] sm:$0xff] %v1321
  %1358 = vst [vmem:[%s6 + $0x40] sm:$0xff] %v1322
  %1359 = vst [vmem:[%s6 + $0x48] sm:$0xff] %v1323
  %1360 = vst [vmem:[%s6 + $0x50] sm:$0xff] %v1324
  %1361 = vst [vmem:[%s6 + $0x58] sm:$0xff] %v1325
  %1362 = vst [vmem:[%s6 + $0x60] sm:$0xff] %v1326
  %1363 = vst [vmem:[%s6 + $0x68] sm:$0xff] %v1327
  %1364 = vst [vmem:[%s6 + $0x70] sm:$0xff] %v1328
  %1365 = vst [vmem:[%s6 + $0x78] sm:$0xff] %v1329
  %1366 = vst [vmem:[%s6 + $0x80] sm:$0xff] %v1330
  %1367 = vst [vmem:[%s6 + $0x88] sm:$0xff] %v1331
  %1368 = vst [vmem:[%s6 + $0x90] sm:$0xff] %v1332
  %1369 = vst [vmem:[%s6 + $0x98] sm:$0xff] %v1333
  %1370 = vst [vmem:[%s6 + $0xa0] sm:$0xff] %v1334
  %1371 = vst [vmem:[%s6 + $0xa8] sm:$0xff] %v1335
  %1372 = vst [vmem:[%s6 + $0xb0] sm:$0xff] %v1336
  %1373 = vst [vmem:[%s6 + $0xb8] sm:$0xff] %v1337
  %1374 = vst [vmem:[%s6 + $0xc0] sm:$0xff] %v1338
  %1375 = vst [vmem:[%s6 + $0xc8] sm:$0xff] %v1339
  %1376 = vst [vmem:[%s6 + $0xd0] sm:$0xff] %v1340
  %1377 = vst [vmem:[%s6 + $0xd8] sm:$0xff] %v1341
  %1378 = vst [vmem:[%s6 + $0xe0] sm:$0xff] %v1342
  %1379 = vst [vmem:[%s6 + $0xe8] sm:$0xff] %v1343
  %1380 = vst [vmem:[%s6 + $0xf0] sm:$0xff] %v1344
  %1381 = vst [vmem:[%s6 + $0xf8] sm:$0xff] %v1345
  %1382 = vst [vmem:[%s6 + $0x100] sm:$0xff] %v1346
  %1383 = vst [vmem:[%s6 + $0x108] sm:$0xff] %v1347
  %1384 = vst [vmem:[%s6 + $0x110] sm:$0xff] %v1348
  %1385 = vst [vmem:[%s6 + $0x118] sm:$0xff] %v1349
  // Predicated region
  $region26: #{net_forward.3} parent=0 // pred_check
    _
  $region27: #{net_forward.3} parent=0 // pred_check_branch
    %1387 = sbr.rel (0) target = $region29
  $region28: #{net_forward.3} parent=0 // pred_region
    _
  $region29: #{net_forward.3} parent=0 // pred_fallthru
    _
  // Predicated region
  $region30: #{net_forward.3} parent=0 // pred_check
    _
  $region31: #{net_forward.3} parent=0 // pred_check_branch
    %1389 = sbr.rel (0) target = $region33
  $region32: #{net_forward.3} parent=0 // pred_region
    _
  $region33: #{net_forward.3} parent=0 // pred_fallthru
    _

// kernel: net_forward.4
$region0: #{net_forward.4}
  #allocation0 [shape = 'u32[]', space=smem, size = 0x4, offset = 0x4, fixed_abs, tag = 'smem constant byte address 0x4 - core index']
  #allocation1 [shape = 'u32[144,128]{1,0:T(1,128)}', space=vmem, size = 0x12000, scoped, tag = 'internal scratch']
  %s0 = inlined_call_operand.vmem [shape: f32[32,256], index: 0, kind: input, shape index: {}]
  %s1 = inlined_call_operand.vmem [shape: f32[32,256], index: 1, kind: input, shape index: {}]
  %s2 = inlined_call_operand.vmem [shape: f32[32,256], index: 2, kind: input, shape index: {}]
  %s3 = inlined_call_operand.vmem [shape: f32[32,256], index: 3, kind: input, shape index: {}]
  %s4 = inlined_call_operand.vmem [shape: f32[256,128], index: 4, kind: input, shape index: {}]
  %s5 = inlined_call_operand.vmem [shape: f32[1,128], index: 5, kind: input, shape index: {}]
  %s6 = inlined_call_operand.vmem [shape: f32[32,128], index: 6, kind: output, shape index: {}]
  %s7 = sld [smem:[#allocation0]]
  $region34: #{net_forward.4} parent=0
    _
  %s9 = ssub.s32 1, %s7
  %s10 = scalar_select 0, %s9, %s7
  // Predicated region
  $region2: #{net_forward.4} parent=0 // pred_check
    _
  $region3: #{net_forward.4} parent=0 // pred_check_branch
    %12 = sbr.rel (0) target = $region5
  $region4: #{net_forward.4} parent=0 // pred_region
    _
  $region5: #{net_forward.4} parent=0 // pred_fallthru
    _
  // Predicated region
  $region6: #{net_forward.4} parent=0 // pred_check
    _
  $region7: #{net_forward.4} parent=0 // pred_check_branch
    %14 = sbr.rel (0) target = $region9
  $region8: #{net_forward.4} parent=0 // pred_region
    _
  $region9: #{net_forward.4} parent=0 // pred_fallthru
    _
  // Predicated region
  $region10: #{net_forward.4} parent=0 // pred_check
    _
  $region11: #{net_forward.4} parent=0 // pred_check_branch
    %16 = sbr.rel (0) target = $region13
  $region12: #{net_forward.4} parent=0 // pred_region
    _
  $region13: #{net_forward.4} parent=0 // pred_fallthru
    _
  // Predicated region
  $region14: #{net_forward.4} parent=0 // pred_check
    _
  $region15: #{net_forward.4} parent=0 // pred_check_branch
    %18 = sbr.rel (0) target = $region17
  $region16: #{net_forward.4} parent=0 // pred_region
    _
  $region17: #{net_forward.4} parent=0 // pred_fallthru
    _
  // Predicated region
  $region18: #{net_forward.4} parent=0 // pred_check
    _
  $region19: #{net_forward.4} parent=0 // pred_check_branch
    %20 = sbr.rel (0) target = $region21
  $region20: #{net_forward.4} parent=0 // pred_region
    _
  $region21: #{net_forward.4} parent=0 // pred_fallthru
    _
  // Predicated region
  $region22: #{net_forward.4} parent=0 // pred_check
    _
  $region23: #{net_forward.4} parent=0 // pred_check_branch
    %22 = sbr.rel (0) target = $region25
  $region24: #{net_forward.4} parent=0 // pred_region
    _
  $region25: #{net_forward.4} parent=0 // pred_fallthru
    _
  %v23 = vld [vmem:[%s4] sm:$0xff]
  %v24 = vld [vmem:[%s4 + $0x8] sm:$0xff]
  %v25 = vld [vmem:[%s4 + $0x10] sm:$0xff]
  %v26 = vld [vmem:[%s4 + $0x18] sm:$0xff]
  %v27 = vld [vmem:[%s4 + $0x20] sm:$0xff]
  %v28 = vld [vmem:[%s4 + $0x28] sm:$0xff]
  %v29 = vld [vmem:[%s4 + $0x30] sm:$0xff]
  %v30 = vld [vmem:[%s4 + $0x38] sm:$0xff]
  %v31 = vld [vmem:[%s4 + $0x40] sm:$0xff]
  %v32 = vld [vmem:[%s4 + $0x48] sm:$0xff]
  %v33 = vld [vmem:[%s4 + $0x50] sm:$0xff]
  %v34 = vld [vmem:[%s4 + $0x58] sm:$0xff]
  %v35 = vld [vmem:[%s4 + $0x60] sm:$0xff]
  %v36 = vld [vmem:[%s4 + $0x68] sm:$0xff]
  %v37 = vld [vmem:[%s4 + $0x70] sm:$0xff]
  %v38 = vld [vmem:[%s4 + $0x78] sm:$0xff]
  %v39 = vld [vmem:[%s4 + $0x80] sm:$0xff]
  %v40 = vld [vmem:[%s4 + $0x88] sm:$0xff]
  %v41 = vld [vmem:[%s4 + $0x90] sm:$0xff]
  %v42 = vld [vmem:[%s4 + $0x98] sm:$0xff]
  %v43 = vld [vmem:[%s4 + $0xa0] sm:$0xff]
  %v44 = vld [vmem:[%s4 + $0xa8] sm:$0xff]
  %v45 = vld [vmem:[%s4 + $0xb0] sm:$0xff]
  %v46 = vld [vmem:[%s4 + $0xb8] sm:$0xff]
  %v47 = vld [vmem:[%s4 + $0xc0] sm:$0xff]
  %v48 = vld [vmem:[%s4 + $0xc8] sm:$0xff]
  %v49 = vld [vmem:[%s4 + $0xd0] sm:$0xff]
  %v50 = vld [vmem:[%s4 + $0xd8] sm:$0xff]
  %v51 = vld [vmem:[%s4 + $0xe0] sm:$0xff]
  %v52 = vld [vmem:[%s4 + $0xe8] sm:$0xff]
  %v53 = vld [vmem:[%s4 + $0xf0] sm:$0xff]
  %v54 = vld [vmem:[%s4 + $0xf8] sm:$0xff]
  %v55 = vld [vmem:[%s0] sm:$0xff]
  %v56 = vld [vmem:[%s0 + $0x8] sm:$0xff]
  %v57 = vld [vmem:[%s0 + $0x10] sm:$0xff]
  %v58 = vld [vmem:[%s0 + $0x18] sm:$0xff]
  %v59 = vld [vmem:[%s0 + $0x20] sm:$0xff]
  %v60 = vld [vmem:[%s0 + $0x28] sm:$0xff]
  %v61 = vld [vmem:[%s0 + $0x30] sm:$0xff]
  %v62 = vld [vmem:[%s0 + $0x38] sm:$0xff]
  %63 = vmatprep.subr.mxu0 0.0
  %64 = vmatpush1.msra.mxu0 %v23
  %65 = vmatprep.subr.mxu0 0.0
  %66 = vmatpush1.msra.mxu0 %v24
  %67 = vmatprep.subr.mxu0 0.0
  %68 = vmatpush1.msra.mxu0 %v25
  %69 = vmatprep.subr.mxu0 0.0
  %70 = vmatpush1.msra.mxu0 %v26
  %71 = vmatprep.subr.mxu0 0.0
  %72 = vmatpush1.msra.mxu0 %v27
  %73 = vmatprep.subr.mxu0 0.0
  %74 = vmatpush1.msra.mxu0 %v28
  %75 = vmatprep.subr.mxu0 0.0
  %76 = vmatpush1.msra.mxu0 %v29
  %77 = vmatprep.subr.mxu0 0.0
  %78 = vmatpush1.msra.mxu0 %v30
  %79 = vmatprep.subr.mxu0 0.0
  %80 = vmatpush1.msra.mxu0 %v31
  %81 = vmatprep.subr.mxu0 0.0
  %82 = vmatpush1.msra.mxu0 %v32
  %83 = vmatprep.subr.mxu0 0.0
  %84 = vmatpush1.msra.mxu0 %v33
  %85 = vmatprep.subr.mxu0 0.0
  %86 = vmatpush1.msra.mxu0 %v34
  %87 = vmatprep.subr.mxu0 0.0
  %88 = vmatpush1.msra.mxu0 %v35
  %89 = vmatprep.subr.mxu0 0.0
  %90 = vmatpush1.msra.mxu0 %v36
  %91 = vmatprep.subr.mxu0 0.0
  %92 = vmatpush1.msra.mxu0 %v37
  %93 = vmatprep.subr.mxu0 0.0
  %94 = vmatpush1.msra.mxu0 %v38
  %95 = vmatprep.subr.mxu0 0.0
  %96 = vmatpush1.msra.mxu0 %v39
  %97 = vmatprep.subr.mxu0 0.0
  %98 = vmatpush1.msra.mxu0 %v40
  %99 = vmatprep.subr.mxu0 0.0
  %100 = vmatpush1.msra.mxu0 %v41
  %101 = vmatprep.subr.mxu0 0.0
  %102 = vmatpush1.msra.mxu0 %v42
  %103 = vmatprep.subr.mxu0 0.0
  %104 = vmatpush1.msra.mxu0 %v43
  %105 = vmatprep.subr.mxu0 0.0
  %106 = vmatpush1.msra.mxu0 %v44
  %107 = vmatprep.subr.mxu0 0.0
  %108 = vmatpush1.msra.mxu0 %v45
  %109 = vmatprep.subr.mxu0 0.0
  %110 = vmatpush1.msra.mxu0 %v46
  %111 = vmatprep.subr.mxu0 0.0
  %112 = vmatpush1.msra.mxu0 %v47
  %113 = vmatprep.subr.mxu0 0.0
  %114 = vmatpush1.msra.mxu0 %v48
  %115 = vmatprep.subr.mxu0 0.0
  %116 = vmatpush1.msra.mxu0 %v49
  %117 = vmatprep.subr.mxu0 0.0
  %118 = vmatpush1.msra.mxu0 %v50
  %119 = vmatprep.subr.mxu0 0.0
  %120 = vmatpush1.msra.mxu0 %v51
  %121 = vmatprep.subr.mxu0 0.0
  %122 = vmatpush1.msra.mxu0 %v52
  %123 = vmatprep.subr.mxu0 0.0
  %124 = vmatpush1.msra.mxu0 %v53
  %125 = vmatprep.subr.mxu0 0.0
  %126 = vmatpush1.msra.mxu0 %v54
  %127 = vmatprep.mubr.f32.mxu0 %v56
  %128 = vmatmul.mubr.f32.gmra.mrb[0].mxu0 %v55
  %v129 = vpop.f32.mrb[0].mxu0
  %v130 = vadd.f32 0.0, %v129
  %v131 = vpop.f32.mrb[0].mxu0
  %132 = vmatprep.mubr.f32.mxu0 %v58
  %133 = vmatmul.mubr.f32.gmra.mrb[0].mxu0 %v57
  %v134 = vpop.f32.mrb[0].mxu0
  %v135 = vadd.f32 0.0, %v134
  %v136 = vpop.f32.mrb[0].mxu0
  %137 = vmatprep.mubr.f32.mxu0 %v60
  %138 = vmatmul.mubr.f32.gmra.mrb[0].mxu0 %v59
  %v139 = vpop.f32.mrb[0].mxu0
  %v140 = vadd.f32 0.0, %v139
  %v141 = vpop.f32.mrb[0].mxu0
  %142 = vmatprep.mubr.f32.mxu0 %v62
  %143 = vmatmul.mubr.f32.gmra.mrb[0].mxu0 %v61
  %v144 = vpop.f32.mrb[0].mxu0
  %v145 = vadd.f32 0.0, %v144
  %v146 = vpop.f32.mrb[0].mxu0
  %147 = vdwg.mxu0
  %v148 = vld [vmem:[%s1] sm:$0xff]
  %v149 = vld [vmem:[%s1 + $0x8] sm:$0xff]
  %v150 = vld [vmem:[%s1 + $0x10] sm:$0xff]
  %v151 = vld [vmem:[%s1 + $0x18] sm:$0xff]
  %v152 = vld [vmem:[%s1 + $0x20] sm:$0xff]
  %v153 = vld [vmem:[%s1 + $0x28] sm:$0xff]
  %v154 = vld [vmem:[%s1 + $0x30] sm:$0xff]
  %v155 = vld [vmem:[%s1 + $0x38] sm:$0xff]
  %156 = vmatprep.subr.mxu0 0.0
  %157 = vmatpush1.msra.mxu0 %v23
  %158 = vmatprep.subr.mxu0 0.0
  %159 = vmatpush1.msra.mxu0 %v24
  %160 = vmatprep.subr.mxu0 0.0
  %161 = vmatpush1.msra.mxu0 %v25
  %162 = vmatprep.subr.mxu0 0.0
  %163 = vmatpush1.msra.mxu0 %v26
  %164 = vmatprep.subr.mxu0 0.0
  %165 = vmatpush1.msra.mxu0 %v27
  %166 = vmatprep.subr.mxu0 0.0
  %167 = vmatpush1.msra.mxu0 %v28
  %168 = vmatprep.subr.mxu0 0.0
  %169 = vmatpush1.msra.mxu0 %v29
  %170 = vmatprep.subr.mxu0 0.0
  %171 = vmatpush1.msra.mxu0 %v30
  %172 = vmatprep.subr.mxu0 0.0
  %173 = vmatpush1.msra.mxu0 %v31
  %174 = vmatprep.subr.mxu0 0.0
  %175 = vmatpush1.msra.mxu0 %v32
  %176 = vmatprep.subr.mxu0 0.0
  %177 = vmatpush1.msra.mxu0 %v33
  %178 = vmatprep.subr.mxu0 0.0
  %179 = vmatpush1.msra.mxu0 %v34
  %180 = vmatprep.subr.mxu0 0.0
  %181 = vmatpush1.msra.mxu0 %v35
  %182 = vmatprep.subr.mxu0 0.0
  %183 = vmatpush1.msra.mxu0 %v36
  %184 = vmatprep.subr.mxu0 0.0
  %185 = vmatpush1.msra.mxu0 %v37
  %186 = vmatprep.subr.mxu0 0.0
  %187 = vmatpush1.msra.mxu0 %v38
  %188 = vmatprep.subr.mxu0 0.0
  %189 = vmatpush1.msra.mxu0 %v39
  %190 = vmatprep.subr.mxu0 0.0
  %191 = vmatpush1.msra.mxu0 %v40
  %192 = vmatprep.subr.mxu0 0.0
  %193 = vmatpush1.msra.mxu0 %v41
  %194 = vmatprep.subr.mxu0 0.0
  %195 = vmatpush1.msra.mxu0 %v42
  %196 = vmatprep.subr.mxu0 0.0
  %197 = vmatpush1.msra.mxu0 %v43
  %198 = vmatprep.subr.mxu0 0.0
  %199 = vmatpush1.msra.mxu0 %v44
  %200 = vmatprep.subr.mxu0 0.0
  %201 = vmatpush1.msra.mxu0 %v45
  %202 = vmatprep.subr.mxu0 0.0
  %203 = vmatpush1.msra.mxu0 %v46
  %204 = vmatprep.subr.mxu0 0.0
  %205 = vmatpush1.msra.mxu0 %v47
  %206 = vmatprep.subr.mxu0 0.0
  %207 = vmatpush1.msra.mxu0 %v48
  %208 = vmatprep.subr.mxu0 0.0
  %209 = vmatpush1.msra.mxu0 %v49
  %210 = vmatprep.subr.mxu0 0.0
  %211 = vmatpush1.msra.mxu0 %v50
  %212 = vmatprep.subr.mxu0 0.0
  %213 = vmatpush1.msra.mxu0 %v51
  %214 = vmatprep.subr.mxu0 0.0
  %215 = vmatpush1.msra.mxu0 %v52
  %216 = vmatprep.subr.mxu0 0.0
  %217 = vmatpush1.msra.mxu0 %v53
  %218 = vmatprep.subr.mxu0 0.0
  %219 = vmatpush1.msra.mxu0 %v54
  %220 = vmatprep.mubr.f32.mxu0 %v149
  %221 = vmatmul.mubr.f32.gmra.mrb[0].mxu0 %v148
  %v222 = vpop.f32.mrb[0].mxu0
  %v223 = vadd.f32 0.0, %v222
  %v224 = vpop.f32.mrb[0].mxu0
  %225 = vmatprep.mubr.f32.mxu0 %v151
  %226 = vmatmul.mubr.f32.gmra.mrb[0].mxu0 %v150
  %v227 = vpop.f32.mrb[0].mxu0
  %v228 = vadd.f32 0.0, %v227
  %v229 = vpop.f32.mrb[0].mxu0
  %230 = vmatprep.mubr.f32.mxu0 %v153
  %231 = vmatmul.mubr.f32.gmra.mrb[0].mxu0 %v152
  %v232 = vpop.f32.mrb[0].mxu0
  %v233 = vadd.f32 0.0, %v232
  %v234 = vpop.f32.mrb[0].mxu0
  %235 = vmatprep.mubr.f32.mxu0 %v155
  %236 = vmatmul.mubr.f32.gmra.mrb[0].mxu0 %v154
  %v237 = vpop.f32.mrb[0].mxu0
  %v238 = vadd.f32 0.0, %v237
  %v239 = vpop.f32.mrb[0].mxu0
  %240 = vdwg.mxu0
  %v241 = vld [vmem:[%s2] sm:$0xff]
  %v242 = vld [vmem:[%s2 + $0x8] sm:$0xff]
  %v243 = vld [vmem:[%s2 + $0x10] sm:$0xff]
  %v244 = vld [vmem:[%s2 + $0x18] sm:$0xff]
  %v245 = vld [vmem:[%s2 + $0x20] sm:$0xff]
  %v246 = vld [vmem:[%s2 + $0x28] sm:$0xff]
  %v247 = vld [vmem:[%s2 + $0x30] sm:$0xff]
  %v248 = vld [vmem:[%s2 + $0x38] sm:$0xff]
  %249 = vmatprep.subr.mxu0 0.0
  %250 = vmatpush1.msra.mxu0 %v23
  %251 = vmatprep.subr.mxu0 0.0
  %252 = vmatpush1.msra.mxu0 %v24
  %253 = vmatprep.subr.mxu0 0.0
  %254 = vmatpush1.msra.mxu0 %v25
  %255 = vmatprep.subr.mxu0 0.0
  %256 = vmatpush1.msra.mxu0 %v26
  %257 = vmatprep.subr.mxu0 0.0
  %258 = vmatpush1.msra.mxu0 %v27
  %259 = vmatprep.subr.mxu0 0.0
  %260 = vmatpush1.msra.mxu0 %v28
  %261 = vmatprep.subr.mxu0 0.0
  %262 = vmatpush1.msra.mxu0 %v29
  %263 = vmatprep.subr.mxu0 0.0
  %264 = vmatpush1.msra.mxu0 %v30
  %265 = vmatprep.subr.mxu0 0.0
  %266 = vmatpush1.msra.mxu0 %v31
  %267 = vmatprep.subr.mxu0 0.0
  %268 = vmatpush1.msra.mxu0 %v32
  %269 = vmatprep.subr.mxu0 0.0
  %270 = vmatpush1.msra.mxu0 %v33
  %271 = vmatprep.subr.mxu0 0.0
  %272 = vmatpush1.msra.mxu0 %v34
  %273 = vmatprep.subr.mxu0 0.0
  %274 = vmatpush1.msra.mxu0 %v35
  %275 = vmatprep.subr.mxu0 0.0
  %276 = vmatpush1.msra.mxu0 %v36
  %277 = vmatprep.subr.mxu0 0.0
  %278 = vmatpush1.msra.mxu0 %v37
  %279 = vmatprep.subr.mxu0 0.0
  %280 = vmatpush1.msra.mxu0 %v38
  %281 = vmatprep.subr.mxu0 0.0
  %282 = vmatpush1.msra.mxu0 %v39
  %283 = vmatprep.subr.mxu0 0.0
  %284 = vmatpush1.msra.mxu0 %v40
  %285 = vmatprep.subr.mxu0 0.0
  %286 = vmatpush1.msra.mxu0 %v41
  %287 = vmatprep.subr.mxu0 0.0
  %288 = vmatpush1.msra.mxu0 %v42
  %289 = vmatprep.subr.mxu0 0.0
  %290 = vmatpush1.msra.mxu0 %v43
  %291 = vmatprep.subr.mxu0 0.0
  %292 = vmatpush1.msra.mxu0 %v44
  %293 = vmatprep.subr.mxu0 0.0
  %294 = vmatpush1.msra.mxu0 %v45
  %295 = vmatprep.subr.mxu0 0.0
  %296 = vmatpush1.msra.mxu0 %v46
  %297 = vmatprep.subr.mxu0 0.0
  %298 = vmatpush1.msra.mxu0 %v47
  %299 = vmatprep.subr.mxu0 0.0
  %300 = vmatpush1.msra.mxu0 %v48
  %301 = vmatprep.subr.mxu0 0.0
  %302 = vmatpush1.msra.mxu0 %v49
  %303 = vmatprep.subr.mxu0 0.0
  %304 = vmatpush1.msra.mxu0 %v50
  %305 = vmatprep.subr.mxu0 0.0
  %306 = vmatpush1.msra.mxu0 %v51
  %307 = vmatprep.subr.mxu0 0.0
  %308 = vmatpush1.msra.mxu0 %v52
  %309 = vmatprep.subr.mxu0 0.0
  %310 = vmatpush1.msra.mxu0 %v53
  %311 = vmatprep.subr.mxu0 0.0
  %312 = vmatpush1.msra.mxu0 %v54
  %313 = vmatprep.mubr.f32.mxu0 %v242
  %314 = vmatmul.mubr.f32.gmra.mrb[0].mxu0 %v241
  %v315 = vpop.f32.mrb[0].mxu0
  %v316 = vadd.f32 0.0, %v315
  %v317 = vpop.f32.mrb[0].mxu0
  %318 = vmatprep.mubr.f32.mxu0 %v244
  %319 = vmatmul.mubr.f32.gmra.mrb[0].mxu0 %v243
  %v320 = vpop.f32.mrb[0].mxu0
  %v321 = vadd.f32 0.0, %v320
  %v322 = vpop.f32.mrb[0].mxu0
  %323 = vmatprep.mubr.f32.mxu0 %v246
  %324 = vmatmul.mubr.f32.gmra.mrb[0].mxu0 %v245
  %v325 = vpop.f32.mrb[0].mxu0
  %v326 = vadd.f32 0.0, %v325
  %v327 = vpop.f32.mrb[0].mxu0
  %328 = vmatprep.mubr.f32.mxu0 %v248
  %329 = vmatmul.mubr.f32.gmra.mrb[0].mxu0 %v247
  %v330 = vpop.f32.mrb[0].mxu0
  %v331 = vadd.f32 0.0, %v330
  %v332 = vpop.f32.mrb[0].mxu0
  %333 = vdwg.mxu0
  %v334 = vld [vmem:[%s3] sm:$0xff]
  %v335 = vld [vmem:[%s3 + $0x8] sm:$0xff]
  %v336 = vld [vmem:[%s3 + $0x10] sm:$0xff]
  %v337 = vld [vmem:[%s3 + $0x18] sm:$0xff]
  %v338 = vld [vmem:[%s3 + $0x20] sm:$0xff]
  %v339 = vld [vmem:[%s3 + $0x28] sm:$0xff]
  %v340 = vld [vmem:[%s3 + $0x30] sm:$0xff]
  %v341 = vld [vmem:[%s3 + $0x38] sm:$0xff]
  %342 = vmatprep.subr.mxu0 0.0
  %343 = vmatpush1.msra.mxu0 %v23
  %344 = vmatprep.subr.mxu0 0.0
  %345 = vmatpush1.msra.mxu0 %v24
  %346 = vmatprep.subr.mxu0 0.0
  %347 = vmatpush1.msra.mxu0 %v25
  %348 = vmatprep.subr.mxu0 0.0
  %349 = vmatpush1.msra.mxu0 %v26
  %350 = vmatprep.subr.mxu0 0.0
  %351 = vmatpush1.msra.mxu0 %v27
  %352 = vmatprep.subr.mxu0 0.0
  %353 = vmatpush1.msra.mxu0 %v28
  %354 = vmatprep.subr.mxu0 0.0
  %355 = vmatpush1.msra.mxu0 %v29
  %356 = vmatprep.subr.mxu0 0.0
  %357 = vmatpush1.msra.mxu0 %v30
  %358 = vmatprep.subr.mxu0 0.0
  %359 = vmatpush1.msra.mxu0 %v31
  %360 = vmatprep.subr.mxu0 0.0
  %361 = vmatpush1.msra.mxu0 %v32
  %362 = vmatprep.subr.mxu0 0.0
  %363 = vmatpush1.msra.mxu0 %v33
  %364 = vmatprep.subr.mxu0 0.0
  %365 = vmatpush1.msra.mxu0 %v34
  %366 = vmatprep.subr.mxu0 0.0
  %367 = vmatpush1.msra.mxu0 %v35
  %368 = vmatprep.subr.mxu0 0.0
  %369 = vmatpush1.msra.mxu0 %v36
  %370 = vmatprep.subr.mxu0 0.0
  %371 = vmatpush1.msra.mxu0 %v37
  %372 = vmatprep.subr.mxu0 0.0
  %373 = vmatpush1.msra.mxu0 %v38
  %374 = vmatprep.subr.mxu0 0.0
  %375 = vmatpush1.msra.mxu0 %v39
  %376 = vmatprep.subr.mxu0 0.0
  %377 = vmatpush1.msra.mxu0 %v40
  %378 = vmatprep.subr.mxu0 0.0
  %379 = vmatpush1.msra.mxu0 %v41
  %380 = vmatprep.subr.mxu0 0.0
  %381 = vmatpush1.msra.mxu0 %v42
  %382 = vmatprep.subr.mxu0 0.0
  %383 = vmatpush1.msra.mxu0 %v43
  %384 = vmatprep.subr.mxu0 0.0
  %385 = vmatpush1.msra.mxu0 %v44
  %386 = vmatprep.subr.mxu0 0.0
  %387 = vmatpush1.msra.mxu0 %v45
  %388 = vmatprep.subr.mxu0 0.0
  %389 = vmatpush1.msra.mxu0 %v46
  %390 = vmatprep.subr.mxu0 0.0
  %391 = vmatpush1.msra.mxu0 %v47
  %392 = vmatprep.subr.mxu0 0.0
  %393 = vmatpush1.msra.mxu0 %v48
  %394 = vmatprep.subr.mxu0 0.0
  %395 = vmatpush1.msra.mxu0 %v49
  %396 = vmatprep.subr.mxu0 0.0
  %397 = vmatpush1.msra.mxu0 %v50
  %398 = vmatprep.subr.mxu0 0.0
  %399 = vmatpush1.msra.mxu0 %v51
  %400 = vmatprep.subr.mxu0 0.0
  %401 = vmatpush1.msra.mxu0 %v52
  %402 = vmatprep.subr.mxu0 0.0
  %403 = vmatpush1.msra.mxu0 %v53
  %404 = vmatprep.subr.mxu0 0.0
  %405 = vmatpush1.msra.mxu0 %v54
  %406 = vmatprep.mubr.f32.mxu0 %v335
  %407 = vmatmul.mubr.f32.gmra.mrb[0].mxu0 %v334
  %v408 = vpop.f32.mrb[0].mxu0
  %v409 = vadd.f32 0.0, %v408
  %v410 = vpop.f32.mrb[0].mxu0
  %411 = vmatprep.mubr.f32.mxu0 %v337
  %412 = vmatmul.mubr.f32.gmra.mrb[0].mxu0 %v336
  %v413 = vpop.f32.mrb[0].mxu0
  %v414 = vadd.f32 0.0, %v413
  %v415 = vpop.f32.mrb[0].mxu0
  %416 = vmatprep.mubr.f32.mxu0 %v339
  %417 = vmatmul.mubr.f32.gmra.mrb[0].mxu0 %v338
  %v418 = vpop.f32.mrb[0].mxu0
  %v419 = vadd.f32 0.0, %v418
  %v420 = vpop.f32.mrb[0].mxu0
  %421 = vmatprep.mubr.f32.mxu0 %v341
  %422 = vmatmul.mubr.f32.gmra.mrb[0].mxu0 %v340
  %v423 = vpop.f32.mrb[0].mxu0
  %v424 = vadd.f32 0.0, %v423
  %v425 = vpop.f32.mrb[0].mxu0
  %426 = vdwg.mxu0
  %v427 = vmax.f32 %v130, %v223
  %v428 = vmax.f32 %v135, %v228
  %v429 = vmax.f32 %v140, %v233
  %v430 = vmax.f32 %v145, %v238
  %v431 = vmax.f32 %v316, %v409
  %v432 = vmax.f32 %v321, %v414
  %v433 = vmax.f32 %v326, %v419
  %v434 = vmax.f32 %v331, %v424
  %v435 = vmax.f32 %v427, %v431
  %v436 = vmax.f32 %v428, %v432
  %v437 = vmax.f32 %v429, %v433
  %v438 = vmax.f32 %v430, %v434
  %v439 = vld [vmem:[%s5] sm:$0x1]
  %v441 = vlaneseq
  %v442 = vshrl.u32 %v441, 7
  %v443 = vsub.s32 0, %v442
  %v444 = vrot.slane %v439, %v443
  %v446 = vadd.f32 %v435, %v444
  %v447 = vadd.f32 %v436, %v444
  %v448 = vadd.f32 %v437, %v444
  %v449 = vadd.f32 %v438, %v444
  %v450 = vmax.f32 %v446, 0.0
  %v451 = vmax.f32 %v447, 0.0
  %v452 = vmax.f32 %v448, 0.0
  %v453 = vmax.f32 %v449, 0.0
  %454 = vst [vmem:[%s6] sm:$0xff] %v450
  %455 = vst [vmem:[%s6 + $0x8] sm:$0xff] %v451
  %456 = vst [vmem:[%s6 + $0x10] sm:$0xff] %v452
  %457 = vst [vmem:[%s6 + $0x18] sm:$0xff] %v453
  // Predicated region
  $region26: #{net_forward.4} parent=0 // pred_check
    _
  $region27: #{net_forward.4} parent=0 // pred_check_branch
    %459 = sbr.rel (0) target = $region29
  $region28: #{net_forward.4} parent=0 // pred_region
    _
  $region29: #{net_forward.4} parent=0 // pred_fallthru
    _
  // Predicated region
  $region30: #{net_forward.4} parent=0 // pred_check
    _
  $region31: #{net_forward.4} parent=0 // pred_check_branch
    %461 = sbr.rel (0) target = $region33
  $region32: #{net_forward.4} parent=0 // pred_region
    _
  $region33: #{net_forward.4} parent=0 // pred_fallthru
    _

// kernel: net_forward.5
$region0: #{net_forward.5}
  #allocation0 [shape = 'u32[]', space=smem, size = 0x4, offset = 0x4, fixed_abs, tag = 'smem constant byte address 0x4 - core index']
  #allocation1 [shape = 'u32[144,128]{1,0:T(1,128)}', space=vmem, size = 0x12000, scoped, tag = 'internal scratch']
  %s0 = inlined_call_operand.vmem [shape: f32[8,2048], index: 0, kind: input, shape index: {}]
  %s1 = inlined_call_operand.vmem [shape: f32[2048,128], index: 1, kind: input, shape index: {}]
  %s2 = inlined_call_operand.vmem [shape: f32[1,128], index: 2, kind: input, shape index: {}]
  %s3 = inlined_call_operand.vmem [shape: f32[128,128], index: 3, kind: input, shape index: {}]
  %s4 = inlined_call_operand.vmem [shape: f32[1,128], index: 4, kind: input, shape index: {}]
  %s5 = inlined_call_operand.vmem [shape: f32[128,128], index: 5, kind: input, shape index: {}]
  %s6 = inlined_call_operand.vmem [shape: f32[1,128], index: 6, kind: input, shape index: {}]
  %s7 = inlined_call_operand.vmem [shape: f32[8,128], index: 7, kind: output, shape index: {}]
  %s8 = sld [smem:[#allocation0]]
  $region38: #{net_forward.5} parent=0
    _
  %s10 = ssub.s32 1, %s8
  %s11 = scalar_select 0, %s10, %s8
  // Predicated region
  $region2: #{net_forward.5} parent=0 // pred_check
    _
  $region3: #{net_forward.5} parent=0 // pred_check_branch
    %13 = sbr.rel (0) target = $region5
  $region4: #{net_forward.5} parent=0 // pred_region
    _
  $region5: #{net_forward.5} parent=0 // pred_fallthru
    _
  // Predicated region
  $region6: #{net_forward.5} parent=0 // pred_check
    _
  $region7: #{net_forward.5} parent=0 // pred_check_branch
    %15 = sbr.rel (0) target = $region9
  $region8: #{net_forward.5} parent=0 // pred_region
    _
  $region9: #{net_forward.5} parent=0 // pred_fallthru
    _
  // Predicated region
  $region10: #{net_forward.5} parent=0 // pred_check
    _
  $region11: #{net_forward.5} parent=0 // pred_check_branch
    %17 = sbr.rel (0) target = $region13
  $region12: #{net_forward.5} parent=0 // pred_region
    _
  $region13: #{net_forward.5} parent=0 // pred_fallthru
    _
  // Predicated region
  $region14: #{net_forward.5} parent=0 // pred_check
    _
  $region15: #{net_forward.5} parent=0 // pred_check_branch
    %19 = sbr.rel (0) target = $region17
  $region16: #{net_forward.5} parent=0 // pred_region
    _
  $region17: #{net_forward.5} parent=0 // pred_fallthru
    _
  // Predicated region
  $region18: #{net_forward.5} parent=0 // pred_check
    _
  $region19: #{net_forward.5} parent=0 // pred_check_branch
    %21 = sbr.rel (0) target = $region21
  $region20: #{net_forward.5} parent=0 // pred_region
    _
  $region21: #{net_forward.5} parent=0 // pred_fallthru
    _
  // Predicated region
  $region22: #{net_forward.5} parent=0 // pred_check
    _
  $region23: #{net_forward.5} parent=0 // pred_check_branch
    %23 = sbr.rel (0) target = $region25
  $region24: #{net_forward.5} parent=0 // pred_region
    _
  $region25: #{net_forward.5} parent=0 // pred_fallthru
    _
  // Predicated region
  $region26: #{net_forward.5} parent=0 // pred_check
    _
  $region27: #{net_forward.5} parent=0 // pred_check_branch
    %25 = sbr.rel (0) target = $region29
  $region28: #{net_forward.5} parent=0 // pred_region
    _
  $region29: #{net_forward.5} parent=0 // pred_fallthru
    _
  %v26 = vld [vmem:[%s0] sm:$0xff]
  %v27 = vld [vmem:[%s0 + $0x8] sm:$0xff]
  %v28 = vld [vmem:[%s0 + $0x10] sm:$0xff]
  %v29 = vld [vmem:[%s0 + $0x18] sm:$0xff]
  %v30 = vld [vmem:[%s0 + $0x20] sm:$0xff]
  %v31 = vld [vmem:[%s0 + $0x28] sm:$0xff]
  %v32 = vld [vmem:[%s0 + $0x30] sm:$0xff]
  %v33 = vld [vmem:[%s0 + $0x38] sm:$0xff]
  %v34 = vld [vmem:[%s0 + $0x40] sm:$0xff]
  %v35 = vld [vmem:[%s0 + $0x48] sm:$0xff]
  %v36 = vld [vmem:[%s0 + $0x50] sm:$0xff]
  %v37 = vld [vmem:[%s0 + $0x58] sm:$0xff]
  %v38 = vld [vmem:[%s0 + $0x60] sm:$0xff]
  %v39 = vld [vmem:[%s0 + $0x68] sm:$0xff]
  %v40 = vld [vmem:[%s0 + $0x70] sm:$0xff]
  %v41 = vld [vmem:[%s0 + $0x78] sm:$0xff]
  %v42 = vld [vmem:[%s1] sm:$0xff]
  %v43 = vld [vmem:[%s1 + $0x8] sm:$0xff]
  %v44 = vld [vmem:[%s1 + $0x10] sm:$0xff]
  %v45 = vld [vmem:[%s1 + $0x18] sm:$0xff]
  %v46 = vld [vmem:[%s1 + $0x20] sm:$0xff]
  %v47 = vld [vmem:[%s1 + $0x28] sm:$0xff]
  %v48 = vld [vmem:[%s1 + $0x30] sm:$0xff]
  %v49 = vld [vmem:[%s1 + $0x38] sm:$0xff]
  %v50 = vld [vmem:[%s1 + $0x40] sm:$0xff]
  %v51 = vld [vmem:[%s1 + $0x48] sm:$0xff]
  %v52 = vld [vmem:[%s1 + $0x50] sm:$0xff]
  %v53 = vld [vmem:[%s1 + $0x58] sm:$0xff]
  %v54 = vld [vmem:[%s1 + $0x60] sm:$0xff]
  %v55 = vld [vmem:[%s1 + $0x68] sm:$0xff]
  %v56 = vld [vmem:[%s1 + $0x70] sm:$0xff]
  %v57 = vld [vmem:[%s1 + $0x78] sm:$0xff]
  %v58 = vld [vmem:[%s1 + $0x80] sm:$0xff]
  %v59 = vld [vmem:[%s1 + $0x88] sm:$0xff]
  %v60 = vld [vmem:[%s1 + $0x90] sm:$0xff]
  %v61 = vld [vmem:[%s1 + $0x98] sm:$0xff]
  %v62 = vld [vmem:[%s1 + $0xa0] sm:$0xff]
  %v63 = vld [vmem:[%s1 + $0xa8] sm:$0xff]
  %v64 = vld [vmem:[%s1 + $0xb0] sm:$0xff]
  %v65 = vld [vmem:[%s1 + $0xb8] sm:$0xff]
  %v66 = vld [vmem:[%s1 + $0xc0] sm:$0xff]
  %v67 = vld [vmem:[%s1 + $0xc8] sm:$0xff]
  %v68 = vld [vmem:[%s1 + $0xd0] sm:$0xff]
  %v69 = vld [vmem:[%s1 + $0xd8] sm:$0xff]
  %v70 = vld [vmem:[%s1 + $0xe0] sm:$0xff]
  %v71 = vld [vmem:[%s1 + $0xe8] sm:$0xff]
  %v72 = vld [vmem:[%s1 + $0xf0] sm:$0xff]
  %v73 = vld [vmem:[%s1 + $0xf8] sm:$0xff]
  %v74 = vld [vmem:[%s1 + $0x100] sm:$0xff]
  %v75 = vld [vmem:[%s1 + $0x108] sm:$0xff]
  %v76 = vld [vmem:[%s1 + $0x110] sm:$0xff]
  %v77 = vld [vmem:[%s1 + $0x118] sm:$0xff]
  %v78 = vld [vmem:[%s1 + $0x120] sm:$0xff]
  %v79 = vld [vmem:[%s1 + $0x128] sm:$0xff]
  %v80 = vld [vmem:[%s1 + $0x130] sm:$0xff]
  %v81 = vld [vmem:[%s1 + $0x138] sm:$0xff]
  %v82 = vld [vmem:[%s1 + $0x140] sm:$0xff]
  %v83 = vld [vmem:[%s1 + $0x148] sm:$0xff]
  %v84 = vld [vmem:[%s1 + $0x150] sm:$0xff]
  %v85 = vld [vmem:[%s1 + $0x158] sm:$0xff]
  %v86 = vld [vmem:[%s1 + $0x160] sm:$0xff]
  %v87 = vld [vmem:[%s1 + $0x168] sm:$0xff]
  %v88 = vld [vmem:[%s1 + $0x170] sm:$0xff]
  %v89 = vld [vmem:[%s1 + $0x178] sm:$0xff]
  %v90 = vld [vmem:[%s1 + $0x180] sm:$0xff]
  %v91 = vld [vmem:[%s1 + $0x188] sm:$0xff]
  %v92 = vld [vmem:[%s1 + $0x190] sm:$0xff]
  %v93 = vld [vmem:[%s1 + $0x198] sm:$0xff]
  %v94 = vld [vmem:[%s1 + $0x1a0] sm:$0xff]
  %v95 = vld [vmem:[%s1 + $0x1a8] sm:$0xff]
  %v96 = vld [vmem:[%s1 + $0x1b0] sm:$0xff]
  %v97 = vld [vmem:[%s1 + $0x1b8] sm:$0xff]
  %v98 = vld [vmem:[%s1 + $0x1c0] sm:$0xff]
  %v99 = vld [vmem:[%s1 + $0x1c8] sm:$0xff]
  %v100 = vld [vmem:[%s1 + $0x1d0] sm:$0xff]
  %v101 = vld [vmem:[%s1 + $0x1d8] sm:$0xff]
  %v102 = vld [vmem:[%s1 + $0x1e0] sm:$0xff]
  %v103 = vld [vmem:[%s1 + $0x1e8] sm:$0xff]
  %v104 = vld [vmem:[%s1 + $0x1f0] sm:$0xff]
  %v105 = vld [vmem:[%s1 + $0x1f8] sm:$0xff]
  %v106 = vld [vmem:[%s1 + $0x200] sm:$0xff]
  %v107 = vld [vmem:[%s1 + $0x208] sm:$0xff]
  %v108 = vld [vmem:[%s1 + $0x210] sm:$0xff]
  %v109 = vld [vmem:[%s1 + $0x218] sm:$0xff]
  %v110 = vld [vmem:[%s1 + $0x220] sm:$0xff]
  %v111 = vld [vmem:[%s1 + $0x228] sm:$0xff]
  %v112 = vld [vmem:[%s1 + $0x230] sm:$0xff]
  %v113 = vld [vmem:[%s1 + $0x238] sm:$0xff]
  %v114 = vld [vmem:[%s1 + $0x240] sm:$0xff]
  %v115 = vld [vmem:[%s1 + $0x248] sm:$0xff]
  %v116 = vld [vmem:[%s1 + $0x250] sm:$0xff]
  %v117 = vld [vmem:[%s1 + $0x258] sm:$0xff]
  %v118 = vld [vmem:[%s1 + $0x260] sm:$0xff]
  %v119 = vld [vmem:[%s1 + $0x268] sm:$0xff]
  %v120 = vld [vmem:[%s1 + $0x270] sm:$0xff]
  %v121 = vld [vmem:[%s1 + $0x278] sm:$0xff]
  %v122 = vld [vmem:[%s1 + $0x280] sm:$0xff]
  %v123 = vld [vmem:[%s1 + $0x288] sm:$0xff]
  %v124 = vld [vmem:[%s1 + $0x290] sm:$0xff]
  %v125 = vld [vmem:[%s1 + $0x298] sm:$0xff]
  %v126 = vld [vmem:[%s1 + $0x2a0] sm:$0xff]
  %v127 = vld [vmem:[%s1 + $0x2a8] sm:$0xff]
  %v128 = vld [vmem:[%s1 + $0x2b0] sm:$0xff]
  %v129 = vld [vmem:[%s1 + $0x2b8] sm:$0xff]
  %v130 = vld [vmem:[%s1 + $0x2c0] sm:$0xff]
  %v131 = vld [vmem:[%s1 + $0x2c8] sm:$0xff]
  %v132 = vld [vmem:[%s1 + $0x2d0] sm:$0xff]
  %v133 = vld [vmem:[%s1 + $0x2d8] sm:$0xff]
  %v134 = vld [vmem:[%s1 + $0x2e0] sm:$0xff]
  %v135 = vld [vmem:[%s1 + $0x2e8] sm:$0xff]
  %v136 = vld [vmem:[%s1 + $0x2f0] sm:$0xff]
  %v137 = vld [vmem:[%s1 + $0x2f8] sm:$0xff]
  %v138 = vld [vmem:[%s1 + $0x300] sm:$0xff]
  %v139 = vld [vmem:[%s1 + $0x308] sm:$0xff]
  %v140 = vld [vmem:[%s1 + $0x310] sm:$0xff]
  %v141 = vld [vmem:[%s1 + $0x318] sm:$0xff]
  %v142 = vld [vmem:[%s1 + $0x320] sm:$0xff]
  %v143 = vld [vmem:[%s1 + $0x328] sm:$0xff]
  %v144 = vld [vmem:[%s1 + $0x330] sm:$0xff]
  %v145 = vld [vmem:[%s1 + $0x338] sm:$0xff]
  %v146 = vld [vmem:[%s1 + $0x340] sm:$0xff]
  %v147 = vld [vmem:[%s1 + $0x348] sm:$0xff]
  %v148 = vld [vmem:[%s1 + $0x350] sm:$0xff]
  %v149 = vld [vmem:[%s1 + $0x358] sm:$0xff]
  %v150 = vld [vmem:[%s1 + $0x360] sm:$0xff]
  %v151 = vld [vmem:[%s1 + $0x368] sm:$0xff]
  %v152 = vld [vmem:[%s1 + $0x370] sm:$0xff]
  %v153 = vld [vmem:[%s1 + $0x378] sm:$0xff]
  %v154 = vld [vmem:[%s1 + $0x380] sm:$0xff]
  %v155 = vld [vmem:[%s1 + $0x388] sm:$0xff]
  %v156 = vld [vmem:[%s1 + $0x390] sm:$0xff]
  %v157 = vld [vmem:[%s1 + $0x398] sm:$0xff]
  %v158 = vld [vmem:[%s1 + $0x3a0] sm:$0xff]
  %v159 = vld [vmem:[%s1 + $0x3a8] sm:$0xff]
  %v160 = vld [vmem:[%s1 + $0x3b0] sm:$0xff]
  %v161 = vld [vmem:[%s1 + $0x3b8] sm:$0xff]
  %v162 = vld [vmem:[%s1 + $0x3c0] sm:$0xff]
  %v163 = vld [vmem:[%s1 + $0x3c8] sm:$0xff]
  %v164 = vld [vmem:[%s1 + $0x3d0] sm:$0xff]
  %v165 = vld [vmem:[%s1 + $0x3d8] sm:$0xff]
  %v166 = vld [vmem:[%s1 + $0x3e0] sm:$0xff]
  %v167 = vld [vmem:[%s1 + $0x3e8] sm:$0xff]
  %v168 = vld [vmem:[%s1 + $0x3f0] sm:$0xff]
  %v169 = vld [vmem:[%s1 + $0x3f8] sm:$0xff]
  %v170 = vld [vmem:[%s1 + $0x400] sm:$0xff]
  %v171 = vld [vmem:[%s1 + $0x408] sm:$0xff]
  %v172 = vld [vmem:[%s1 + $0x410] sm:$0xff]
  %v173 = vld [vmem:[%s1 + $0x418] sm:$0xff]
  %v174 = vld [vmem:[%s1 + $0x420] sm:$0xff]
  %v175 = vld [vmem:[%s1 + $0x428] sm:$0xff]
  %v176 = vld [vmem:[%s1 + $0x430] sm:$0xff]
  %v177 = vld [vmem:[%s1 + $0x438] sm:$0xff]
  %v178 = vld [vmem:[%s1 + $0x440] sm:$0xff]
  %v179 = vld [vmem:[%s1 + $0x448] sm:$0xff]
  %v180 = vld [vmem:[%s1 + $0x450] sm:$0xff]
  %v181 = vld [vmem:[%s1 + $0x458] sm:$0xff]
  %v182 = vld [vmem:[%s1 + $0x460] sm:$0xff]
  %v183 = vld [vmem:[%s1 + $0x468] sm:$0xff]
  %v184 = vld [vmem:[%s1 + $0x470] sm:$0xff]
  %v185 = vld [vmem:[%s1 + $0x478] sm:$0xff]
  %v186 = vld [vmem:[%s1 + $0x480] sm:$0xff]
  %v187 = vld [vmem:[%s1 + $0x488] sm:$0xff]
  %v188 = vld [vmem:[%s1 + $0x490] sm:$0xff]
  %v189 = vld [vmem:[%s1 + $0x498] sm:$0xff]
  %v190 = vld [vmem:[%s1 + $0x4a0] sm:$0xff]
  %v191 = vld [vmem:[%s1 + $0x4a8] sm:$0xff]
  %v192 = vld [vmem:[%s1 + $0x4b0] sm:$0xff]
  %v193 = vld [vmem:[%s1 + $0x4b8] sm:$0xff]
  %v194 = vld [vmem:[%s1 + $0x4c0] sm:$0xff]
  %v195 = vld [vmem:[%s1 + $0x4c8] sm:$0xff]
  %v196 = vld [vmem:[%s1 + $0x4d0] sm:$0xff]
  %v197 = vld [vmem:[%s1 + $0x4d8] sm:$0xff]
  %v198 = vld [vmem:[%s1 + $0x4e0] sm:$0xff]
  %v199 = vld [vmem:[%s1 + $0x4e8] sm:$0xff]
  %v200 = vld [vmem:[%s1 + $0x4f0] sm:$0xff]
  %v201 = vld [vmem:[%s1 + $0x4f8] sm:$0xff]
  %v202 = vld [vmem:[%s1 + $0x500] sm:$0xff]
  %v203 = vld [vmem:[%s1 + $0x508] sm:$0xff]
  %v204 = vld [vmem:[%s1 + $0x510] sm:$0xff]
  %v205 = vld [vmem:[%s1 + $0x518] sm:$0xff]
  %v206 = vld [vmem:[%s1 + $0x520] sm:$0xff]
  %v207 = vld [vmem:[%s1 + $0x528] sm:$0xff]
  %v208 = vld [vmem:[%s1 + $0x530] sm:$0xff]
  %v209 = vld [vmem:[%s1 + $0x538] sm:$0xff]
  %v210 = vld [vmem:[%s1 + $0x540] sm:$0xff]
  %v211 = vld [vmem:[%s1 + $0x548] sm:$0xff]
  %v212 = vld [vmem:[%s1 + $0x550] sm:$0xff]
  %v213 = vld [vmem:[%s1 + $0x558] sm:$0xff]
  %v214 = vld [vmem:[%s1 + $0x560] sm:$0xff]
  %v215 = vld [vmem:[%s1 + $0x568] sm:$0xff]
  %v216 = vld [vmem:[%s1 + $0x570] sm:$0xff]
  %v217 = vld [vmem:[%s1 + $0x578] sm:$0xff]
  %v218 = vld [vmem:[%s1 + $0x580] sm:$0xff]
  %v219 = vld [vmem:[%s1 + $0x588] sm:$0xff]
  %v220 = vld [vmem:[%s1 + $0x590] sm:$0xff]
  %v221 = vld [vmem:[%s1 + $0x598] sm:$0xff]
  %v222 = vld [vmem:[%s1 + $0x5a0] sm:$0xff]
  %v223 = vld [vmem:[%s1 + $0x5a8] sm:$0xff]
  %v224 = vld [vmem:[%s1 + $0x5b0] sm:$0xff]
  %v225 = vld [vmem:[%s1 + $0x5b8] sm:$0xff]
  %v226 = vld [vmem:[%s1 + $0x5c0] sm:$0xff]
  %v227 = vld [vmem:[%s1 + $0x5c8] sm:$0xff]
  %v228 = vld [vmem:[%s1 + $0x5d0] sm:$0xff]
  %v229 = vld [vmem:[%s1 + $0x5d8] sm:$0xff]
  %v230 = vld [vmem:[%s1 + $0x5e0] sm:$0xff]
  %v231 = vld [vmem:[%s1 + $0x5e8] sm:$0xff]
  %v232 = vld [vmem:[%s1 + $0x5f0] sm:$0xff]
  %v233 = vld [vmem:[%s1 + $0x5f8] sm:$0xff]
  %v234 = vld [vmem:[%s1 + $0x600] sm:$0xff]
  %v235 = vld [vmem:[%s1 + $0x608] sm:$0xff]
  %v236 = vld [vmem:[%s1 + $0x610] sm:$0xff]
  %v237 = vld [vmem:[%s1 + $0x618] sm:$0xff]
  %v238 = vld [vmem:[%s1 + $0x620] sm:$0xff]
  %v239 = vld [vmem:[%s1 + $0x628] sm:$0xff]
  %v240 = vld [vmem:[%s1 + $0x630] sm:$0xff]
  %v241 = vld [vmem:[%s1 + $0x638] sm:$0xff]
  %v242 = vld [vmem:[%s1 + $0x640] sm:$0xff]
  %v243 = vld [vmem:[%s1 + $0x648] sm:$0xff]
  %v244 = vld [vmem:[%s1 + $0x650] sm:$0xff]
  %v245 = vld [vmem:[%s1 + $0x658] sm:$0xff]
  %v246 = vld [vmem:[%s1 + $0x660] sm:$0xff]
  %v247 = vld [vmem:[%s1 + $0x668] sm:$0xff]
  %v248 = vld [vmem:[%s1 + $0x670] sm:$0xff]
  %v249 = vld [vmem:[%s1 + $0x678] sm:$0xff]
  %v250 = vld [vmem:[%s1 + $0x680] sm:$0xff]
  %v251 = vld [vmem:[%s1 + $0x688] sm:$0xff]
  %v252 = vld [vmem:[%s1 + $0x690] sm:$0xff]
  %v253 = vld [vmem:[%s1 + $0x698] sm:$0xff]
  %v254 = vld [vmem:[%s1 + $0x6a0] sm:$0xff]
  %v255 = vld [vmem:[%s1 + $0x6a8] sm:$0xff]
  %v256 = vld [vmem:[%s1 + $0x6b0] sm:$0xff]
  %v257 = vld [vmem:[%s1 + $0x6b8] sm:$0xff]
  %v258 = vld [vmem:[%s1 + $0x6c0] sm:$0xff]
  %v259 = vld [vmem:[%s1 + $0x6c8] sm:$0xff]
  %v260 = vld [vmem:[%s1 + $0x6d0] sm:$0xff]
  %v261 = vld [vmem:[%s1 + $0x6d8] sm:$0xff]
  %v262 = vld [vmem:[%s1 + $0x6e0] sm:$0xff]
  %v263 = vld [vmem:[%s1 + $0x6e8] sm:$0xff]
  %v264 = vld [vmem:[%s1 + $0x6f0] sm:$0xff]
  %v265 = vld [vmem:[%s1 + $0x6f8] sm:$0xff]
  %v266 = vld [vmem:[%s1 + $0x700] sm:$0xff]
  %v267 = vld [vmem:[%s1 + $0x708] sm:$0xff]
  %v268 = vld [vmem:[%s1 + $0x710] sm:$0xff]
  %v269 = vld [vmem:[%s1 + $0x718] sm:$0xff]
  %v270 = vld [vmem:[%s1 + $0x720] sm:$0xff]
  %v271 = vld [vmem:[%s1 + $0x728] sm:$0xff]
  %v272 = vld [vmem:[%s1 + $0x730] sm:$0xff]
  %v273 = vld [vmem:[%s1 + $0x738] sm:$0xff]
  %v274 = vld [vmem:[%s1 + $0x740] sm:$0xff]
  %v275 = vld [vmem:[%s1 + $0x748] sm:$0xff]
  %v276 = vld [vmem:[%s1 + $0x750] sm:$0xff]
  %v277 = vld [vmem:[%s1 + $0x758] sm:$0xff]
  %v278 = vld [vmem:[%s1 + $0x760] sm:$0xff]
  %v279 = vld [vmem:[%s1 + $0x768] sm:$0xff]
  %v280 = vld [vmem:[%s1 + $0x770] sm:$0xff]
  %v281 = vld [vmem:[%s1 + $0x778] sm:$0xff]
  %v282 = vld [vmem:[%s1 + $0x780] sm:$0xff]
  %v283 = vld [vmem:[%s1 + $0x788] sm:$0xff]
  %v284 = vld [vmem:[%s1 + $0x790] sm:$0xff]
  %v285 = vld [vmem:[%s1 + $0x798] sm:$0xff]
  %v286 = vld [vmem:[%s1 + $0x7a0] sm:$0xff]
  %v287 = vld [vmem:[%s1 + $0x7a8] sm:$0xff]
  %v288 = vld [vmem:[%s1 + $0x7b0] sm:$0xff]
  %v289 = vld [vmem:[%s1 + $0x7b8] sm:$0xff]
  %v290 = vld [vmem:[%s1 + $0x7c0] sm:$0xff]
  %v291 = vld [vmem:[%s1 + $0x7c8] sm:$0xff]
  %v292 = vld [vmem:[%s1 + $0x7d0] sm:$0xff]
  %v293 = vld [vmem:[%s1 + $0x7d8] sm:$0xff]
  %v294 = vld [vmem:[%s1 + $0x7e0] sm:$0xff]
  %v295 = vld [vmem:[%s1 + $0x7e8] sm:$0xff]
  %v296 = vld [vmem:[%s1 + $0x7f0] sm:$0xff]
  %v297 = vld [vmem:[%s1 + $0x7f8] sm:$0xff]
  %v298 = vld [vmem:[%s2] sm:$0x1]
  %v300 = vlaneseq
  %v301 = vshrl.u32 %v300, 7
  %v302 = vsub.s32 0, %v301
  %v303 = vrot.slane %v298, %v302
  %305 = vmatprep.subr.mxu0 0.0
  %306 = vmatpush1.msra.mxu0 %v42
  %307 = vmatprep.subr.mxu0 0.0
  %308 = vmatpush1.msra.mxu0 %v43
  %309 = vmatprep.subr.mxu0 0.0
  %310 = vmatpush1.msra.mxu0 %v44
  %311 = vmatprep.subr.mxu0 0.0
  %312 = vmatpush1.msra.mxu0 %v45
  %313 = vmatprep.subr.mxu0 0.0
  %314 = vmatpush1.msra.mxu0 %v46
  %315 = vmatprep.subr.mxu0 0.0
  %316 = vmatpush1.msra.mxu0 %v47
  %317 = vmatprep.subr.mxu0 0.0
  %318 = vmatpush1.msra.mxu0 %v48
  %319 = vmatprep.subr.mxu0 0.0
  %320 = vmatpush1.msra.mxu0 %v49
  %321 = vmatprep.subr.mxu0 0.0
  %322 = vmatpush1.msra.mxu0 %v50
  %323 = vmatprep.subr.mxu0 0.0
  %324 = vmatpush1.msra.mxu0 %v51
  %325 = vmatprep.subr.mxu0 0.0
  %326 = vmatpush1.msra.mxu0 %v52
  %327 = vmatprep.subr.mxu0 0.0
  %328 = vmatpush1.msra.mxu0 %v53
  %329 = vmatprep.subr.mxu0 0.0
  %330 = vmatpush1.msra.mxu0 %v54
  %331 = vmatprep.subr.mxu0 0.0
  %332 = vmatpush1.msra.mxu0 %v55
  %333 = vmatprep.subr.mxu0 0.0
  %334 = vmatpush1.msra.mxu0 %v56
  %335 = vmatprep.subr.mxu0 0.0
  %336 = vmatpush1.msra.mxu0 %v57
  %337 = vmatprep.subr.mxu0 0.0
  %338 = vmatpush1.msra.mxu0 %v58
  %339 = vmatprep.subr.mxu0 0.0
  %340 = vmatpush1.msra.mxu0 %v59
  %341 = vmatprep.subr.mxu0 0.0
  %342 = vmatpush1.msra.mxu0 %v60
  %343 = vmatprep.subr.mxu0 0.0
  %344 = vmatpush1.msra.mxu0 %v61
  %345 = vmatprep.subr.mxu0 0.0
  %346 = vmatpush1.msra.mxu0 %v62
  %347 = vmatprep.subr.mxu0 0.0
  %348 = vmatpush1.msra.mxu0 %v63
  %349 = vmatprep.subr.mxu0 0.0
  %350 = vmatpush1.msra.mxu0 %v64
  %351 = vmatprep.subr.mxu0 0.0
  %352 = vmatpush1.msra.mxu0 %v65
  %353 = vmatprep.subr.mxu0 0.0
  %354 = vmatpush1.msra.mxu0 %v66
  %355 = vmatprep.subr.mxu0 0.0
  %356 = vmatpush1.msra.mxu0 %v67
  %357 = vmatprep.subr.mxu0 0.0
  %358 = vmatpush1.msra.mxu0 %v68
  %359 = vmatprep.subr.mxu0 0.0
  %360 = vmatpush1.msra.mxu0 %v69
  %361 = vmatprep.subr.mxu0 0.0
  %362 = vmatpush1.msra.mxu0 %v70
  %363 = vmatprep.subr.mxu0 0.0
  %364 = vmatpush1.msra.mxu0 %v71
  %365 = vmatprep.subr.mxu0 0.0
  %366 = vmatpush1.msra.mxu0 %v72
  %367 = vmatprep.subr.mxu0 0.0
  %368 = vmatpush1.msra.mxu0 %v73
  %369 = vmatprep.mubr.f32.mxu0 %v27
  %370 = vmatmul.mubr.f32.gmra.mrb[0].mxu0 %v26
  %v371 = vpop.f32.mrb[0].mxu0
  %v372 = vadd.f32 %v303, %v371
  %v373 = vpop.f32.mrb[0].mxu0
  %374 = vdwg.mxu0
  %375 = vmatprep.subr.mxu0 0.0
  %376 = vmatpush1.msra.mxu0 %v74
  %377 = vmatprep.subr.mxu0 0.0
  %378 = vmatpush1.msra.mxu0 %v75
  %379 = vmatprep.subr.mxu0 0.0
  %380 = vmatpush1.msra.mxu0 %v76
  %381 = vmatprep.subr.mxu0 0.0
  %382 = vmatpush1.msra.mxu0 %v77
  %383 = vmatprep.subr.mxu0 0.0
  %384 = vmatpush1.msra.mxu0 %v78
  %385 = vmatprep.subr.mxu0 0.0
  %386 = vmatpush1.msra.mxu0 %v79
  %387 = vmatprep.subr.mxu0 0.0
  %388 = vmatpush1.msra.mxu0 %v80
  %389 = vmatprep.subr.mxu0 0.0
  %390 = vmatpush1.msra.mxu0 %v81
  %391 = vmatprep.subr.mxu0 0.0
  %392 = vmatpush1.msra.mxu0 %v82
  %393 = vmatprep.subr.mxu0 0.0
  %394 = vmatpush1.msra.mxu0 %v83
  %395 = vmatprep.subr.mxu0 0.0
  %396 = vmatpush1.msra.mxu0 %v84
  %397 = vmatprep.subr.mxu0 0.0
  %398 = vmatpush1.msra.mxu0 %v85
  %399 = vmatprep.subr.mxu0 0.0
  %400 = vmatpush1.msra.mxu0 %v86
  %401 = vmatprep.subr.mxu0 0.0
  %402 = vmatpush1.msra.mxu0 %v87
  %403 = vmatprep.subr.mxu0 0.0
  %404 = vmatpush1.msra.mxu0 %v88
  %405 = vmatprep.subr.mxu0 0.0
  %406 = vmatpush1.msra.mxu0 %v89
  %407 = vmatprep.subr.mxu0 0.0
  %408 = vmatpush1.msra.mxu0 %v90
  %409 = vmatprep.subr.mxu0 0.0
  %410 = vmatpush1.msra.mxu0 %v91
  %411 = vmatprep.subr.mxu0 0.0
  %412 = vmatpush1.msra.mxu0 %v92
  %413 = vmatprep.subr.mxu0 0.0
  %414 = vmatpush1.msra.mxu0 %v93
  %415 = vmatprep.subr.mxu0 0.0
  %416 = vmatpush1.msra.mxu0 %v94
  %417 = vmatprep.subr.mxu0 0.0
  %418 = vmatpush1.msra.mxu0 %v95
  %419 = vmatprep.subr.mxu0 0.0
  %420 = vmatpush1.msra.mxu0 %v96
  %421 = vmatprep.subr.mxu0 0.0
  %422 = vmatpush1.msra.mxu0 %v97
  %423 = vmatprep.subr.mxu0 0.0
  %424 = vmatpush1.msra.mxu0 %v98
  %425 = vmatprep.subr.mxu0 0.0
  %426 = vmatpush1.msra.mxu0 %v99
  %427 = vmatprep.subr.mxu0 0.0
  %428 = vmatpush1.msra.mxu0 %v100
  %429 = vmatprep.subr.mxu0 0.0
  %430 = vmatpush1.msra.mxu0 %v101
  %431 = vmatprep.subr.mxu0 0.0
  %432 = vmatpush1.msra.mxu0 %v102
  %433 = vmatprep.subr.mxu0 0.0
  %434 = vmatpush1.msra.mxu0 %v103
  %435 = vmatprep.subr.mxu0 0.0
  %436 = vmatpush1.msra.mxu0 %v104
  %437 = vmatprep.subr.mxu0 0.0
  %438 = vmatpush1.msra.mxu0 %v105
  %439 = vmatprep.mubr.f32.mxu0 %v29
  %440 = vmatmul.mubr.f32.gmra.mrb[0].mxu0 %v28
  %v441 = vpop.f32.mrb[0].mxu0
  %v442 = vadd.f32 %v372, %v441
  %v443 = vpop.f32.mrb[0].mxu0
  %444 = vdwg.mxu0
  %445 = vmatprep.subr.mxu0 0.0
  %446 = vmatpush1.msra.mxu0 %v106
  %447 = vmatprep.subr.mxu0 0.0
  %448 = vmatpush1.msra.mxu0 %v107
  %449 = vmatprep.subr.mxu0 0.0
  %450 = vmatpush1.msra.mxu0 %v108
  %451 = vmatprep.subr.mxu0 0.0
  %452 = vmatpush1.msra.mxu0 %v109
  %453 = vmatprep.subr.mxu0 0.0
  %454 = vmatpush1.msra.mxu0 %v110
  %455 = vmatprep.subr.mxu0 0.0
  %456 = vmatpush1.msra.mxu0 %v111
  %457 = vmatprep.subr.mxu0 0.0
  %458 = vmatpush1.msra.mxu0 %v112
  %459 = vmatprep.subr.mxu0 0.0
  %460 = vmatpush1.msra.mxu0 %v113
  %461 = vmatprep.subr.mxu0 0.0
  %462 = vmatpush1.msra.mxu0 %v114
  %463 = vmatprep.subr.mxu0 0.0
  %464 = vmatpush1.msra.mxu0 %v115
  %465 = vmatprep.subr.mxu0 0.0
  %466 = vmatpush1.msra.mxu0 %v116
  %467 = vmatprep.subr.mxu0 0.0
  %468 = vmatpush1.msra.mxu0 %v117
  %469 = vmatprep.subr.mxu0 0.0
  %470 = vmatpush1.msra.mxu0 %v118
  %471 = vmatprep.subr.mxu0 0.0
  %472 = vmatpush1.msra.mxu0 %v119
  %473 = vmatprep.subr.mxu0 0.0
  %474 = vmatpush1.msra.mxu0 %v120
  %475 = vmatprep.subr.mxu0 0.0
  %476 = vmatpush1.msra.mxu0 %v121
  %477 = vmatprep.subr.mxu0 0.0
  %478 = vmatpush1.msra.mxu0 %v122
  %479 = vmatprep.subr.mxu0 0.0
  %480 = vmatpush1.msra.mxu0 %v123
  %481 = vmatprep.subr.mxu0 0.0
  %482 = vmatpush1.msra.mxu0 %v124
  %483 = vmatprep.subr.mxu0 0.0
  %484 = vmatpush1.msra.mxu0 %v125
  %485 = vmatprep.subr.mxu0 0.0
  %486 = vmatpush1.msra.mxu0 %v126
  %487 = vmatprep.subr.mxu0 0.0
  %488 = vmatpush1.msra.mxu0 %v127
  %489 = vmatprep.subr.mxu0 0.0
  %490 = vmatpush1.msra.mxu0 %v128
  %491 = vmatprep.subr.mxu0 0.0
  %492 = vmatpush1.msra.mxu0 %v129
  %493 = vmatprep.subr.mxu0 0.0
  %494 = vmatpush1.msra.mxu0 %v130
  %495 = vmatprep.subr.mxu0 0.0
  %496 = vmatpush1.msra.mxu0 %v131
  %497 = vmatprep.subr.mxu0 0.0
  %498 = vmatpush1.msra.mxu0 %v132
  %499 = vmatprep.subr.mxu0 0.0
  %500 = vmatpush1.msra.mxu0 %v133
  %501 = vmatprep.subr.mxu0 0.0
  %502 = vmatpush1.msra.mxu0 %v134
  %503 = vmatprep.subr.mxu0 0.0
  %504 = vmatpush1.msra.mxu0 %v135
  %505 = vmatprep.subr.mxu0 0.0
  %506 = vmatpush1.msra.mxu0 %v136
  %507 = vmatprep.subr.mxu0 0.0
  %508 = vmatpush1.msra.mxu0 %v137
  %509 = vmatprep.mubr.f32.mxu0 %v31
  %510 = vmatmul.mubr.f32.gmra.mrb[0].mxu0 %v30
  %v511 = vpop.f32.mrb[0].mxu0
  %v512 = vadd.f32 %v442, %v511
  %v513 = vpop.f32.mrb[0].mxu0
  %514 = vdwg.mxu0
  %515 = vmatprep.subr.mxu0 0.0
  %516 = vmatpush1.msra.mxu0 %v138
  %517 = vmatprep.subr.mxu0 0.0
  %518 = vmatpush1.msra.mxu0 %v139
  %519 = vmatprep.subr.mxu0 0.0
  %520 = vmatpush1.msra.mxu0 %v140
  %521 = vmatprep.subr.mxu0 0.0
  %522 = vmatpush1.msra.mxu0 %v141
  %523 = vmatprep.subr.mxu0 0.0
  %524 = vmatpush1.msra.mxu0 %v142
  %525 = vmatprep.subr.mxu0 0.0
  %526 = vmatpush1.msra.mxu0 %v143
  %527 = vmatprep.subr.mxu0 0.0
  %528 = vmatpush1.msra.mxu0 %v144
  %529 = vmatprep.subr.mxu0 0.0
  %530 = vmatpush1.msra.mxu0 %v145
  %531 = vmatprep.subr.mxu0 0.0
  %532 = vmatpush1.msra.mxu0 %v146
  %533 = vmatprep.subr.mxu0 0.0
  %534 = vmatpush1.msra.mxu0 %v147
  %535 = vmatprep.subr.mxu0 0.0
  %536 = vmatpush1.msra.mxu0 %v148
  %537 = vmatprep.subr.mxu0 0.0
  %538 = vmatpush1.msra.mxu0 %v149
  %539 = vmatprep.subr.mxu0 0.0
  %540 = vmatpush1.msra.mxu0 %v150
  %541 = vmatprep.subr.mxu0 0.0
  %542 = vmatpush1.msra.mxu0 %v151
  %543 = vmatprep.subr.mxu0 0.0
  %544 = vmatpush1.msra.mxu0 %v152
  %545 = vmatprep.subr.mxu0 0.0
  %546 = vmatpush1.msra.mxu0 %v153
  %547 = vmatprep.subr.mxu0 0.0
  %548 = vmatpush1.msra.mxu0 %v154
  %549 = vmatprep.subr.mxu0 0.0
  %550 = vmatpush1.msra.mxu0 %v155
  %551 = vmatprep.subr.mxu0 0.0
  %552 = vmatpush1.msra.mxu0 %v156
  %553 = vmatprep.subr.mxu0 0.0
  %554 = vmatpush1.msra.mxu0 %v157
  %555 = vmatprep.subr.mxu0 0.0
  %556 = vmatpush1.msra.mxu0 %v158
  %557 = vmatprep.subr.mxu0 0.0
  %558 = vmatpush1.msra.mxu0 %v159
  %559 = vmatprep.subr.mxu0 0.0
  %560 = vmatpush1.msra.mxu0 %v160
  %561 = vmatprep.subr.mxu0 0.0
  %562 = vmatpush1.msra.mxu0 %v161
  %563 = vmatprep.subr.mxu0 0.0
  %564 = vmatpush1.msra.mxu0 %v162
  %565 = vmatprep.subr.mxu0 0.0
  %566 = vmatpush1.msra.mxu0 %v163
  %567 = vmatprep.subr.mxu0 0.0
  %568 = vmatpush1.msra.mxu0 %v164
  %569 = vmatprep.subr.mxu0 0.0
  %570 = vmatpush1.msra.mxu0 %v165
  %571 = vmatprep.subr.mxu0 0.0
  %572 = vmatpush1.msra.mxu0 %v166
  %573 = vmatprep.subr.mxu0 0.0
  %574 = vmatpush1.msra.mxu0 %v167
  %575 = vmatprep.subr.mxu0 0.0
  %576 = vmatpush1.msra.mxu0 %v168
  %577 = vmatprep.subr.mxu0 0.0
  %578 = vmatpush1.msra.mxu0 %v169
  %579 = vmatprep.mubr.f32.mxu0 %v33
  %580 = vmatmul.mubr.f32.gmra.mrb[0].mxu0 %v32
  %v581 = vpop.f32.mrb[0].mxu0
  %v582 = vadd.f32 %v512, %v581
  %v583 = vpop.f32.mrb[0].mxu0
  %584 = vdwg.mxu0
  %585 = vmatprep.subr.mxu0 0.0
  %586 = vmatpush1.msra.mxu0 %v170
  %587 = vmatprep.subr.mxu0 0.0
  %588 = vmatpush1.msra.mxu0 %v171
  %589 = vmatprep.subr.mxu0 0.0
  %590 = vmatpush1.msra.mxu0 %v172
  %591 = vmatprep.subr.mxu0 0.0
  %592 = vmatpush1.msra.mxu0 %v173
  %593 = vmatprep.subr.mxu0 0.0
  %594 = vmatpush1.msra.mxu0 %v174
  %595 = vmatprep.subr.mxu0 0.0
  %596 = vmatpush1.msra.mxu0 %v175
  %597 = vmatprep.subr.mxu0 0.0
  %598 = vmatpush1.msra.mxu0 %v176
  %599 = vmatprep.subr.mxu0 0.0
  %600 = vmatpush1.msra.mxu0 %v177
  %601 = vmatprep.subr.mxu0 0.0
  %602 = vmatpush1.msra.mxu0 %v178
  %603 = vmatprep.subr.mxu0 0.0
  %604 = vmatpush1.msra.mxu0 %v179
  %605 = vmatprep.subr.mxu0 0.0
  %606 = vmatpush1.msra.mxu0 %v180
  %607 = vmatprep.subr.mxu0 0.0
  %608 = vmatpush1.msra.mxu0 %v181
  %609 = vmatprep.subr.mxu0 0.0
  %610 = vmatpush1.msra.mxu0 %v182
  %611 = vmatprep.subr.mxu0 0.0
  %612 = vmatpush1.msra.mxu0 %v183
  %613 = vmatprep.subr.mxu0 0.0
  %614 = vmatpush1.msra.mxu0 %v184
  %615 = vmatprep.subr.mxu0 0.0
  %616 = vmatpush1.msra.mxu0 %v185
  %617 = vmatprep.subr.mxu0 0.0
  %618 = vmatpush1.msra.mxu0 %v186
  %619 = vmatprep.subr.mxu0 0.0
  %620 = vmatpush1.msra.mxu0 %v187
  %621 = vmatprep.subr.mxu0 0.0
  %622 = vmatpush1.msra.mxu0 %v188
  %623 = vmatprep.subr.mxu0 0.0
  %624 = vmatpush1.msra.mxu0 %v189
  %625 = vmatprep.subr.mxu0 0.0
  %626 = vmatpush1.msra.mxu0 %v190
  %627 = vmatprep.subr.mxu0 0.0
  %628 = vmatpush1.msra.mxu0 %v191
  %629 = vmatprep.subr.mxu0 0.0
  %630 = vmatpush1.msra.mxu0 %v192
  %631 = vmatprep.subr.mxu0 0.0
  %632 = vmatpush1.msra.mxu0 %v193
  %633 = vmatprep.subr.mxu0 0.0
  %634 = vmatpush1.msra.mxu0 %v194
  %635 = vmatprep.subr.mxu0 0.0
  %636 = vmatpush1.msra.mxu0 %v195
  %637 = vmatprep.subr.mxu0 0.0
  %638 = vmatpush1.msra.mxu0 %v196
  %639 = vmatprep.subr.mxu0 0.0
  %640 = vmatpush1.msra.mxu0 %v197
  %641 = vmatprep.subr.mxu0 0.0
  %642 = vmatpush1.msra.mxu0 %v198
  %643 = vmatprep.subr.mxu0 0.0
  %644 = vmatpush1.msra.mxu0 %v199
  %645 = vmatprep.subr.mxu0 0.0
  %646 = vmatpush1.msra.mxu0 %v200
  %647 = vmatprep.subr.mxu0 0.0
  %648 = vmatpush1.msra.mxu0 %v201
  %649 = vmatprep.mubr.f32.mxu0 %v35
  %650 = vmatmul.mubr.f32.gmra.mrb[0].mxu0 %v34
  %v651 = vpop.f32.mrb[0].mxu0
  %v652 = vadd.f32 %v582, %v651
  %v653 = vpop.f32.mrb[0].mxu0
  %654 = vdwg.mxu0
  %655 = vmatprep.subr.mxu0 0.0
  %656 = vmatpush1.msra.mxu0 %v202
  %657 = vmatprep.subr.mxu0 0.0
  %658 = vmatpush1.msra.mxu0 %v203
  %659 = vmatprep.subr.mxu0 0.0
  %660 = vmatpush1.msra.mxu0 %v204
  %661 = vmatprep.subr.mxu0 0.0
  %662 = vmatpush1.msra.mxu0 %v205
  %663 = vmatprep.subr.mxu0 0.0
  %664 = vmatpush1.msra.mxu0 %v206
  %665 = vmatprep.subr.mxu0 0.0
  %666 = vmatpush1.msra.mxu0 %v207
  %667 = vmatprep.subr.mxu0 0.0
  %668 = vmatpush1.msra.mxu0 %v208
  %669 = vmatprep.subr.mxu0 0.0
  %670 = vmatpush1.msra.mxu0 %v209
  %671 = vmatprep.subr.mxu0 0.0
  %672 = vmatpush1.msra.mxu0 %v210
  %673 = vmatprep.subr.mxu0 0.0
  %674 = vmatpush1.msra.mxu0 %v211
  %675 = vmatprep.subr.mxu0 0.0
  %676 = vmatpush1.msra.mxu0 %v212
  %677 = vmatprep.subr.mxu0 0.0
  %678 = vmatpush1.msra.mxu0 %v213
  %679 = vmatprep.subr.mxu0 0.0
  %680 = vmatpush1.msra.mxu0 %v214
  %681 = vmatprep.subr.mxu0 0.0
  %682 = vmatpush1.msra.mxu0 %v215
  %683 = vmatprep.subr.mxu0 0.0
  %684 = vmatpush1.msra.mxu0 %v216
  %685 = vmatprep.subr.mxu0 0.0
  %686 = vmatpush1.msra.mxu0 %v217
  %687 = vmatprep.subr.mxu0 0.0
  %688 = vmatpush1.msra.mxu0 %v218
  %689 = vmatprep.subr.mxu0 0.0
  %690 = vmatpush1.msra.mxu0 %v219
  %691 = vmatprep.subr.mxu0 0.0
  %692 = vmatpush1.msra.mxu0 %v220
  %693 = vmatprep.subr.mxu0 0.0
  %694 = vmatpush1.msra.mxu0 %v221
  %695 = vmatprep.subr.mxu0 0.0
  %696 = vmatpush1.msra.mxu0 %v222
  %697 = vmatprep.subr.mxu0 0.0
  %698 = vmatpush1.msra.mxu0 %v223
  %699 = vmatprep.subr.mxu0 0.0
  %700 = vmatpush1.msra.mxu0 %v224
  %701 = vmatprep.subr.mxu0 0.0
  %702 = vmatpush1.msra.mxu0 %v225
  %703 = vmatprep.subr.mxu0 0.0
  %704 = vmatpush1.msra.mxu0 %v226
  %705 = vmatprep.subr.mxu0 0.0
  %706 = vmatpush1.msra.mxu0 %v227
  %707 = vmatprep.subr.mxu0 0.0
  %708 = vmatpush1.msra.mxu0 %v228
  %709 = vmatprep.subr.mxu0 0.0
  %710 = vmatpush1.msra.mxu0 %v229
  %711 = vmatprep.subr.mxu0 0.0
  %712 = vmatpush1.msra.mxu0 %v230
  %713 = vmatprep.subr.mxu0 0.0
  %714 = vmatpush1.msra.mxu0 %v231
  %715 = vmatprep.subr.mxu0 0.0
  %716 = vmatpush1.msra.mxu0 %v232
  %717 = vmatprep.subr.mxu0 0.0
  %718 = vmatpush1.msra.mxu0 %v233
  %719 = vmatprep.mubr.f32.mxu0 %v37
  %720 = vmatmul.mubr.f32.gmra.mrb[0].mxu0 %v36
  %v721 = vpop.f32.mrb[0].mxu0
  %v722 = vadd.f32 %v652, %v721
  %v723 = vpop.f32.mrb[0].mxu0
  %724 = vdwg.mxu0
  %725 = vmatprep.subr.mxu0 0.0
  %726 = vmatpush1.msra.mxu0 %v234
  %727 = vmatprep.subr.mxu0 0.0
  %728 = vmatpush1.msra.mxu0 %v235
  %729 = vmatprep.subr.mxu0 0.0
  %730 = vmatpush1.msra.mxu0 %v236
  %731 = vmatprep.subr.mxu0 0.0
  %732 = vmatpush1.msra.mxu0 %v237
  %733 = vmatprep.subr.mxu0 0.0
  %734 = vmatpush1.msra.mxu0 %v238
  %735 = vmatprep.subr.mxu0 0.0
  %736 = vmatpush1.msra.mxu0 %v239
  %737 = vmatprep.subr.mxu0 0.0
  %738 = vmatpush1.msra.mxu0 %v240
  %739 = vmatprep.subr.mxu0 0.0
  %740 = vmatpush1.msra.mxu0 %v241
  %741 = vmatprep.subr.mxu0 0.0
  %742 = vmatpush1.msra.mxu0 %v242
  %743 = vmatprep.subr.mxu0 0.0
  %744 = vmatpush1.msra.mxu0 %v243
  %745 = vmatprep.subr.mxu0 0.0
  %746 = vmatpush1.msra.mxu0 %v244
  %747 = vmatprep.subr.mxu0 0.0
  %748 = vmatpush1.msra.mxu0 %v245
  %749 = vmatprep.subr.mxu0 0.0
  %750 = vmatpush1.msra.mxu0 %v246
  %751 = vmatprep.subr.mxu0 0.0
  %752 = vmatpush1.msra.mxu0 %v247
  %753 = vmatprep.subr.mxu0 0.0
  %754 = vmatpush1.msra.mxu0 %v248
  %755 = vmatprep.subr.mxu0 0.0
  %756 = vmatpush1.msra.mxu0 %v249
  %757 = vmatprep.subr.mxu0 0.0
  %758 = vmatpush1.msra.mxu0 %v250
  %759 = vmatprep.subr.mxu0 0.0
  %760 = vmatpush1.msra.mxu0 %v251
  %761 = vmatprep.subr.mxu0 0.0
  %762 = vmatpush1.msra.mxu0 %v252
  %763 = vmatprep.subr.mxu0 0.0
  %764 = vmatpush1.msra.mxu0 %v253
  %765 = vmatprep.subr.mxu0 0.0
  %766 = vmatpush1.msra.mxu0 %v254
  %767 = vmatprep.subr.mxu0 0.0
  %768 = vmatpush1.msra.mxu0 %v255
  %769 = vmatprep.subr.mxu0 0.0
  %770 = vmatpush1.msra.mxu0 %v256
  %771 = vmatprep.subr.mxu0 0.0
  %772 = vmatpush1.msra.mxu0 %v257
  %773 = vmatprep.subr.mxu0 0.0
  %774 = vmatpush1.msra.mxu0 %v258
  %775 = vmatprep.subr.mxu0 0.0
  %776 = vmatpush1.msra.mxu0 %v259
  %777 = vmatprep.subr.mxu0 0.0
  %778 = vmatpush1.msra.mxu0 %v260
  %779 = vmatprep.subr.mxu0 0.0
  %780 = vmatpush1.msra.mxu0 %v261
  %781 = vmatprep.subr.mxu0 0.0
  %782 = vmatpush1.msra.mxu0 %v262
  %783 = vmatprep.subr.mxu0 0.0
  %784 = vmatpush1.msra.mxu0 %v263
  %785 = vmatprep.subr.mxu0 0.0
  %786 = vmatpush1.msra.mxu0 %v264
  %787 = vmatprep.subr.mxu0 0.0
  %788 = vmatpush1.msra.mxu0 %v265
  %789 = vmatprep.mubr.f32.mxu0 %v39
  %790 = vmatmul.mubr.f32.gmra.mrb[0].mxu0 %v38
  %v791 = vpop.f32.mrb[0].mxu0
  %v792 = vadd.f32 %v722, %v791
  %v793 = vpop.f32.mrb[0].mxu0
  %794 = vdwg.mxu0
  %795 = vmatprep.subr.mxu0 0.0
  %796 = vmatpush1.msra.mxu0 %v266
  %797 = vmatprep.subr.mxu0 0.0
  %798 = vmatpush1.msra.mxu0 %v267
  %799 = vmatprep.subr.mxu0 0.0
  %800 = vmatpush1.msra.mxu0 %v268
  %801 = vmatprep.subr.mxu0 0.0
  %802 = vmatpush1.msra.mxu0 %v269
  %803 = vmatprep.subr.mxu0 0.0
  %804 = vmatpush1.msra.mxu0 %v270
  %805 = vmatprep.subr.mxu0 0.0
  %806 = vmatpush1.msra.mxu0 %v271
  %807 = vmatprep.subr.mxu0 0.0
  %808 = vmatpush1.msra.mxu0 %v272
  %809 = vmatprep.subr.mxu0 0.0
  %810 = vmatpush1.msra.mxu0 %v273
  %811 = vmatprep.subr.mxu0 0.0
  %812 = vmatpush1.msra.mxu0 %v274
  %813 = vmatprep.subr.mxu0 0.0
  %814 = vmatpush1.msra.mxu0 %v275
  %815 = vmatprep.subr.mxu0 0.0
  %816 = vmatpush1.msra.mxu0 %v276
  %817 = vmatprep.subr.mxu0 0.0
  %818 = vmatpush1.msra.mxu0 %v277
  %819 = vmatprep.subr.mxu0 0.0
  %820 = vmatpush1.msra.mxu0 %v278
  %821 = vmatprep.subr.mxu0 0.0
  %822 = vmatpush1.msra.mxu0 %v279
  %823 = vmatprep.subr.mxu0 0.0
  %824 = vmatpush1.msra.mxu0 %v280
  %825 = vmatprep.subr.mxu0 0.0
  %826 = vmatpush1.msra.mxu0 %v281
  %827 = vmatprep.subr.mxu0 0.0
  %828 = vmatpush1.msra.mxu0 %v282
  %829 = vmatprep.subr.mxu0 0.0
  %830 = vmatpush1.msra.mxu0 %v283
  %831 = vmatprep.subr.mxu0 0.0
  %832 = vmatpush1.msra.mxu0 %v284
  %833 = vmatprep.subr.mxu0 0.0
  %834 = vmatpush1.msra.mxu0 %v285
  %835 = vmatprep.subr.mxu0 0.0
  %836 = vmatpush1.msra.mxu0 %v286
  %837 = vmatprep.subr.mxu0 0.0
  %838 = vmatpush1.msra.mxu0 %v287
  %839 = vmatprep.subr.mxu0 0.0
  %840 = vmatpush1.msra.mxu0 %v288
  %841 = vmatprep.subr.mxu0 0.0
  %842 = vmatpush1.msra.mxu0 %v289
  %843 = vmatprep.subr.mxu0 0.0
  %844 = vmatpush1.msra.mxu0 %v290
  %845 = vmatprep.subr.mxu0 0.0
  %846 = vmatpush1.msra.mxu0 %v291
  %847 = vmatprep.subr.mxu0 0.0
  %848 = vmatpush1.msra.mxu0 %v292
  %849 = vmatprep.subr.mxu0 0.0
  %850 = vmatpush1.msra.mxu0 %v293
  %851 = vmatprep.subr.mxu0 0.0
  %852 = vmatpush1.msra.mxu0 %v294
  %853 = vmatprep.subr.mxu0 0.0
  %854 = vmatpush1.msra.mxu0 %v295
  %855 = vmatprep.subr.mxu0 0.0
  %856 = vmatpush1.msra.mxu0 %v296
  %857 = vmatprep.subr.mxu0 0.0
  %858 = vmatpush1.msra.mxu0 %v297
  %859 = vmatprep.mubr.f32.mxu0 %v41
  %860 = vmatmul.mubr.f32.gmra.mrb[0].mxu0 %v40
  %v861 = vpop.f32.mrb[0].mxu0
  %v862 = vadd.f32 %v792, %v861
  %v863 = vpop.f32.mrb[0].mxu0
  %864 = vdwg.mxu0
  %v865 = vmax.f32 %v862, 0.0
  %v866 = vld [vmem:[%s3] sm:$0xff]
  %v867 = vld [vmem:[%s3 + $0x8] sm:$0xff]
  %v868 = vld [vmem:[%s3 + $0x10] sm:$0xff]
  %v869 = vld [vmem:[%s3 + $0x18] sm:$0xff]
  %v870 = vld [vmem:[%s3 + $0x20] sm:$0xff]
  %v871 = vld [vmem:[%s3 + $0x28] sm:$0xff]
  %v872 = vld [vmem:[%s3 + $0x30] sm:$0xff]
  %v873 = vld [vmem:[%s3 + $0x38] sm:$0xff]
  %v874 = vld [vmem:[%s3 + $0x40] sm:$0xff]
  %v875 = vld [vmem:[%s3 + $0x48] sm:$0xff]
  %v876 = vld [vmem:[%s3 + $0x50] sm:$0xff]
  %v877 = vld [vmem:[%s3 + $0x58] sm:$0xff]
  %v878 = vld [vmem:[%s3 + $0x60] sm:$0xff]
  %v879 = vld [vmem:[%s3 + $0x68] sm:$0xff]
  %v880 = vld [vmem:[%s3 + $0x70] sm:$0xff]
  %v881 = vld [vmem:[%s3 + $0x78] sm:$0xff]
  %v882 = vld [vmem:[%s4] sm:$0x1]
  %v884 = vlaneseq
  %v885 = vshrl.u32 %v884, 7
  %v886 = vsub.s32 0, %v885
  %v887 = vrot.slane %v882, %v886
  %889 = vmatprep.subr.mxu0 0.0
  %890 = vmatpush1.msra.mxu0 %v866
  %891 = vmatprep.subr.mxu0 0.0
  %892 = vmatpush1.msra.mxu0 %v867
  %893 = vmatprep.subr.mxu0 0.0
  %894 = vmatpush1.msra.mxu0 %v868
  %895 = vmatprep.subr.mxu0 0.0
  %896 = vmatpush1.msra.mxu0 %v869
  %897 = vmatprep.subr.mxu0 0.0
  %898 = vmatpush1.msra.mxu0 %v870
  %899 = vmatprep.subr.mxu0 0.0
  %900 = vmatpush1.msra.mxu0 %v871
  %901 = vmatprep.subr.mxu0 0.0
  %902 = vmatpush1.msra.mxu0 %v872
  %903 = vmatprep.subr.mxu0 0.0
  %904 = vmatpush1.msra.mxu0 %v873
  %905 = vmatprep.subr.mxu0 0.0
  %906 = vmatpush1.msra.mxu0 %v874
  %907 = vmatprep.subr.mxu0 0.0
  %908 = vmatpush1.msra.mxu0 %v875
  %909 = vmatprep.subr.mxu0 0.0
  %910 = vmatpush1.msra.mxu0 %v876
  %911 = vmatprep.subr.mxu0 0.0
  %912 = vmatpush1.msra.mxu0 %v877
  %913 = vmatprep.subr.mxu0 0.0
  %914 = vmatpush1.msra.mxu0 %v878
  %915 = vmatprep.subr.mxu0 0.0
  %916 = vmatpush1.msra.mxu0 %v879
  %917 = vmatprep.subr.mxu0 0.0
  %918 = vmatpush1.msra.mxu0 %v880
  %919 = vmatprep.subr.mxu0 0.0
  %920 = vmatpush1.msra.mxu0 %v881
  %921 = vmatprep.subr.mxu0 0.0
  %922 = vmatpush1.msra.mxu0 0.0
  %923 = vmatprep.subr.mxu0 0.0
  %924 = vmatpush1.msra.mxu0 0.0
  %925 = vmatprep.subr.mxu0 0.0
  %926 = vmatpush1.msra.mxu0 0.0
  %927 = vmatprep.subr.mxu0 0.0
  %928 = vmatpush1.msra.mxu0 0.0
  %929 = vmatprep.subr.mxu0 0.0
  %930 = vmatpush1.msra.mxu0 0.0
  %931 = vmatprep.subr.mxu0 0.0
  %932 = vmatpush1.msra.mxu0 0.0
  %933 = vmatprep.subr.mxu0 0.0
  %934 = vmatpush1.msra.mxu0 0.0
  %935 = vmatprep.subr.mxu0 0.0
  %936 = vmatpush1.msra.mxu0 0.0
  %937 = vmatprep.subr.mxu0 0.0
  %938 = vmatpush1.msra.mxu0 0.0
  %939 = vmatprep.subr.mxu0 0.0
  %940 = vmatpush1.msra.mxu0 0.0
  %941 = vmatprep.subr.mxu0 0.0
  %942 = vmatpush1.msra.mxu0 0.0
  %943 = vmatprep.subr.mxu0 0.0
  %944 = vmatpush1.msra.mxu0 0.0
  %945 = vmatprep.subr.mxu0 0.0
  %946 = vmatpush1.msra.mxu0 0.0
  %947 = vmatprep.subr.mxu0 0.0
  %948 = vmatpush1.msra.mxu0 0.0
  %949 = vmatprep.subr.mxu0 0.0
  %950 = vmatpush1.msra.mxu0 0.0
  %951 = vmatprep.subr.mxu0 0.0
  %952 = vmatpush1.msra.mxu0 0.0
  %953 = vmatprep.mubr.f32.mxu0 0.0
  %954 = vmatmul.mubr.f32.gmra.mrb[0].mxu0 %v865
  %v955 = vpop.f32.mrb[0].mxu0
  %v956 = vadd.f32 %v887, %v955
  %v957 = vpop.f32.mrb[0].mxu0
  %958 = vdwg.mxu0
  %v959 = vmax.f32 %v956, 0.0
  %v960 = vld [vmem:[%s5] sm:$0xff]
  %v961 = vld [vmem:[%s5 + $0x8] sm:$0xff]
  %v962 = vld [vmem:[%s5 + $0x10] sm:$0xff]
  %v963 = vld [vmem:[%s5 + $0x18] sm:$0xff]
  %v964 = vld [vmem:[%s5 + $0x20] sm:$0xff]
  %v965 = vld [vmem:[%s5 + $0x28] sm:$0xff]
  %v966 = vld [vmem:[%s5 + $0x30] sm:$0xff]
  %v967 = vld [vmem:[%s5 + $0x38] sm:$0xff]
  %v968 = vld [vmem:[%s5 + $0x40] sm:$0xff]
  %v969 = vld [vmem:[%s5 + $0x48] sm:$0xff]
  %v970 = vld [vmem:[%s5 + $0x50] sm:$0xff]
  %v971 = vld [vmem:[%s5 + $0x58] sm:$0xff]
  %v972 = vld [vmem:[%s5 + $0x60] sm:$0xff]
  %v973 = vld [vmem:[%s5 + $0x68] sm:$0xff]
  %v974 = vld [vmem:[%s5 + $0x70] sm:$0xff]
  %v975 = vld [vmem:[%s5 + $0x78] sm:$0xff]
  %v976 = vld [vmem:[%s6] sm:$0x1]
  %v978 = vlaneseq
  %v979 = vshrl.u32 %v978, 7
  %v980 = vsub.s32 0, %v979
  %v981 = vrot.slane %v976, %v980
  %983 = vmatprep.subr.mxu0 0.0
  %984 = vmatpush1.msra.mxu0 %v960
  %985 = vmatprep.subr.mxu0 0.0
  %986 = vmatpush1.msra.mxu0 %v961
  %987 = vmatprep.subr.mxu0 0.0
  %988 = vmatpush1.msra.mxu0 %v962
  %989 = vmatprep.subr.mxu0 0.0
  %990 = vmatpush1.msra.mxu0 %v963
  %991 = vmatprep.subr.mxu0 0.0
  %992 = vmatpush1.msra.mxu0 %v964
  %993 = vmatprep.subr.mxu0 0.0
  %994 = vmatpush1.msra.mxu0 %v965
  %995 = vmatprep.subr.mxu0 0.0
  %996 = vmatpush1.msra.mxu0 %v966
  %997 = vmatprep.subr.mxu0 0.0
  %998 = vmatpush1.msra.mxu0 %v967
  %999 = vmatprep.subr.mxu0 0.0
  %1000 = vmatpush1.msra.mxu0 %v968
  %1001 = vmatprep.subr.mxu0 0.0
  %1002 = vmatpush1.msra.mxu0 %v969
  %1003 = vmatprep.subr.mxu0 0.0
  %1004 = vmatpush1.msra.mxu0 %v970
  %1005 = vmatprep.subr.mxu0 0.0
  %1006 = vmatpush1.msra.mxu0 %v971
  %1007 = vmatprep.subr.mxu0 0.0
  %1008 = vmatpush1.msra.mxu0 %v972
  %1009 = vmatprep.subr.mxu0 0.0
  %1010 = vmatpush1.msra.mxu0 %v973
  %1011 = vmatprep.subr.mxu0 0.0
  %1012 = vmatpush1.msra.mxu0 %v974
  %1013 = vmatprep.subr.mxu0 0.0
  %1014 = vmatpush1.msra.mxu0 %v975
  %1015 = vmatprep.subr.mxu0 0.0
  %1016 = vmatpush1.msra.mxu0 0.0
  %1017 = vmatprep.subr.mxu0 0.0
  %1018 = vmatpush1.msra.mxu0 0.0
  %1019 = vmatprep.subr.mxu0 0.0
  %1020 = vmatpush1.msra.mxu0 0.0
  %1021 = vmatprep.subr.mxu0 0.0
  %1022 = vmatpush1.msra.mxu0 0.0
  %1023 = vmatprep.subr.mxu0 0.0
  %1024 = vmatpush1.msra.mxu0 0.0
  %1025 = vmatprep.subr.mxu0 0.0
  %1026 = vmatpush1.msra.mxu0 0.0
  %1027 = vmatprep.subr.mxu0 0.0
  %1028 = vmatpush1.msra.mxu0 0.0
  %1029 = vmatprep.subr.mxu0 0.0
  %1030 = vmatpush1.msra.mxu0 0.0
  %1031 = vmatprep.subr.mxu0 0.0
  %1032 = vmatpush1.msra.mxu0 0.0
  %1033 = vmatprep.subr.mxu0 0.0
  %1034 = vmatpush1.msra.mxu0 0.0
  %1035 = vmatprep.subr.mxu0 0.0
  %1036 = vmatpush1.msra.mxu0 0.0
  %1037 = vmatprep.subr.mxu0 0.0
  %1038 = vmatpush1.msra.mxu0 0.0
  %1039 = vmatprep.subr.mxu0 0.0
  %1040 = vmatpush1.msra.mxu0 0.0
  %1041 = vmatprep.subr.mxu0 0.0
  %1042 = vmatpush1.msra.mxu0 0.0
  %1043 = vmatprep.subr.mxu0 0.0
  %1044 = vmatpush1.msra.mxu0 0.0
  %1045 = vmatprep.subr.mxu0 0.0
  %1046 = vmatpush1.msra.mxu0 0.0
  %1047 = vmatprep.mubr.f32.mxu0 0.0
  %1048 = vmatmul.mubr.f32.gmra.mrb[0].mxu0 %v959
  %v1049 = vpop.f32.mrb[0].mxu0
  %v1050 = vadd.f32 %v981, %v1049
  %v1051 = vpop.f32.mrb[0].mxu0
  %1052 = vdwg.mxu0
  %1053 = vst [vmem:[%s7] sm:$0xff] %v1050
  // Predicated region
  $region30: #{net_forward.5} parent=0 // pred_check
    _
  $region31: #{net_forward.5} parent=0 // pred_check_branch
    %1055 = sbr.rel (0) target = $region33
  $region32: #{net_forward.5} parent=0 // pred_region
    _
  $region33: #{net_forward.5} parent=0 // pred_fallthru
    _
  // Predicated region
  $region34: #{net_forward.5} parent=0 // pred_check
    _
  $region35: #{net_forward.5} parent=0 // pred_check_branch
    %1057 = sbr.rel (0) target = $region37
  $region36: #{net_forward.5} parent=0 // pred_region
    _
  $region37: #{net_forward.5} parent=0 // pred_fallthru
    _

</llo_original>
